<compile_context>
chip_gen: v7x
topology: tpu7x:2x2x1
jax: 0.10.0
libtpu: 0.0.40
codegen_flags: <defaults>
</compile_context>

<pallas_src>
import functools

import jax
import jax.numpy as jnp
from jax import lax
from jax.experimental import pallas as pl
from jax.experimental.pallas import tpu as pltpu  # noqa: F401  (TPU backend)


# ---------------------------------------------------------------------------
# Fused Pallas kernel
# ---------------------------------------------------------------------------
def _bn_relu(y, gamma, beta, eps=1e-5):
    """BatchNorm1d in training mode (per-feature batch mean / biased var) + ReLU."""
    mean = jnp.mean(y, axis=0, keepdims=True)
    var = jnp.mean(jnp.square(y - mean), axis=0, keepdims=True)
    y = (y - mean) * lax.rsqrt(var + eps)
    return jnp.maximum(y * gamma + beta, 0.0)


def _generator_kernel(noise_ref, labels_ref, emb_ref,
                      w0n_ref, w0e_ref, g0_ref, beta0_ref,
                      w1_ref, g1_ref, beta1_ref,
                      w2_ref, g2_ref, beta2_ref,
                      w3_ref, b3_ref, o_ref):
    noise = noise_ref[...]                               # (B, noise_dim)  f32
    labels = labels_ref[...]                             # (B, 1)          int32
    B = noise.shape[0]
    num_classes = emb_ref.shape[0]

    # Embedding lookup as a one-hot matmul (no dynamic gather needed).
    onehot = (labels == lax.broadcasted_iota(jnp.int32, (B, num_classes), 1))
    onehot = onehot.astype(jnp.float32)
    emb = jnp.dot(onehot, emb_ref[...],
                  preferred_element_type=jnp.float32)    # (B, num_classes) f32

    # Layer 0: Linear(noise_dim + num_classes -> 256) with w0 split along K.
    # Pre-BN bias omitted (exactly cancelled by the BN mean subtraction).
    h = (jnp.dot(noise.astype(jnp.bfloat16), w0n_ref[...],
                 preferred_element_type=jnp.float32)
         + jnp.dot(emb.astype(jnp.bfloat16), w0e_ref[...],
                   preferred_element_type=jnp.float32))
    h = _bn_relu(h, g0_ref[...], beta0_ref[...])

    # Layer 1: Linear(256 -> 512) + BN + ReLU
    h = jnp.dot(h.astype(jnp.bfloat16), w1_ref[...],
                preferred_element_type=jnp.float32)
    h = _bn_relu(h, g1_ref[...], beta1_ref[...])

    # Layer 2: Linear(512 -> 1024) + BN + ReLU
    h = jnp.dot(h.astype(jnp.bfloat16), w2_ref[...],
                preferred_element_type=jnp.float32)
    h = _bn_relu(h, g2_ref[...], beta2_ref[...])

    # Layer 3: Linear(1024 -> img_size*img_size) + bias + Tanh
    y = jnp.dot(h.astype(jnp.bfloat16), w3_ref[...],
                preferred_element_type=jnp.float32) + b3_ref[...]
    o_ref[...] = jnp.tanh(y)


# ---------------------------------------------------------------------------
# Wrapper around pallas_call (single invocation, whole arrays in VMEM)
# ---------------------------------------------------------------------------
def generator_pallas(params, noise, labels):
    B = noise.shape[0]
    n_out = params["w3"].shape[1]
    labels2d = labels.reshape(B, 1).astype(jnp.int32)
    # No grid, no BlockSpecs: every operand is mapped whole into VMEM
    # (~1.9 MB of bf16 weights + a few KB of activations — fits trivially on
    #  v5e / v6e / v7x at the default scoped-VMEM limit).
    return pl.pallas_call(
        _generator_kernel,
        out_shape=jax.ShapeDtypeStruct((B, n_out), jnp.float32),
    )(noise, labels2d, params["emb"],
      params["w0n"], params["w0e"], params["g0"], params["beta0"],
      params["w1"], params["g1"], params["beta1"],
      params["w2"], params["g2"], params["beta2"],
      params["w3"], params["b3"])


# ---------------------------------------------------------------------------
# Parameter construction (deterministic, synthetic)
# ---------------------------------------------------------------------------
def init_generator_params(key, noise_dim, num_classes, img_size):
    in_dim = noise_dim + num_classes
    dims = [in_dim, 256, 512, 1024, img_size * img_size]
    keys = jax.random.split(key, 2 * (len(dims) - 1) + 1)
    params = {}
    # nn.Embedding(num_classes, num_classes): N(0, 1) init. Tiny; keep f32.
    params["emb"] = jax.random.normal(keys[0], (num_classes, num_classes), jnp.float32)

    ws = []
    for i in range(len(dims) - 1):
        fan_in, fan_out = dims[i], dims[i + 1]
        bound = fan_in ** -0.5
        ws.append(jax.random.uniform(
            keys[1 + 2 * i], (fan_in, fan_out), jnp.float32, -bound, bound))
        if i < len(dims) - 2:  # BatchNorm affine params for first 3 layers
            params[f"g{i}"] = jnp.ones((1, fan_out), jnp.float32)
            params[f"beta{i}"] = jnp.zeros((1, fan_out), jnp.float32)
    # Pre-BN biases b0..b2 are exact no-ops under training-mode BN -> not created.
    bound3 = dims[-2] ** -0.5
    params["b3"] = jax.random.uniform(
        keys[2 + 2 * (len(dims) - 2)], (1, dims[-1]), jnp.float32, -bound3, bound3)

    # Split w0 along K into (noise rows, embedding rows); store matmul weights
    # as bf16 (f32 accumulation happens inside the kernel).
    params["w0n"] = ws[0][:noise_dim].astype(jnp.bfloat16)
    params["w0e"] = ws[0][noise_dim:].astype(jnp.bfloat16)
    params["w1"] = ws[1].astype(jnp.bfloat16)
    params["w2"] = ws[2].astype(jnp.bfloat16)
    params["w3"] = ws[3].astype(jnp.bfloat16)
    return params


# ---------------------------------------------------------------------------
# Forward pass
# ---------------------------------------------------------------------------
@functools.partial(jax.jit, static_argnames=("img_size",))
def generator_forward(params, noise, labels, img_size):
    x = generator_pallas(params, noise, labels)          # (B, img_size*img_size)
    B = x.shape[0]
    # img.view(B, 1, img_size, img_size)  -> NCHW (free metadata reshape)
    return x.reshape(B, 1, img_size, img_size)


# ---------------------------------------------------------------------------
if __name__ == "__main__":
    noise_dim = 32
    num_classes = 10
    img_size = 16
    batch = 8

    root = jax.random.PRNGKey(0)
    k_params, k_noise, k_labels = jax.random.split(root, 3)

    params = init_generator_params(k_params, noise_dim, num_classes, img_size)
    noise = jax.random.normal(k_noise, (batch, noise_dim), jnp.float32)
    labels = jax.random.randint(k_labels, (batch,), 0, num_classes, jnp.int32)

    img = generator_forward(params, noise, labels, img_size)
    jax.block_until_ready(img)

    assert img.shape == (batch, 1, img_size, img_size), img.shape
    assert img.dtype == jnp.float32
    # Tanh output range sanity check.
    assert float(jnp.max(jnp.abs(img))) <= 1.0 + 1e-6

    print("KERNEL_OK")
</pallas_src>

<mosaic_0001>
module attributes {stable_mosaic.version = 11 : i64} {
  func.func @_generator_kernel(%arg0: memref<8x32xf32, #tpu.memory_space<vmem>>, %arg1: memref<8x1xi32, #tpu.memory_space<vmem>>, %arg2: memref<10x10xf32, #tpu.memory_space<vmem>>, %arg3: memref<32x256xbf16, #tpu.memory_space<vmem>>, %arg4: memref<10x256xbf16, #tpu.memory_space<vmem>>, %arg5: memref<1x256xf32, #tpu.memory_space<vmem>>, %arg6: memref<1x256xf32, #tpu.memory_space<vmem>>, %arg7: memref<256x512xbf16, #tpu.memory_space<vmem>>, %arg8: memref<1x512xf32, #tpu.memory_space<vmem>>, %arg9: memref<1x512xf32, #tpu.memory_space<vmem>>, %arg10: memref<512x1024xbf16, #tpu.memory_space<vmem>>, %arg11: memref<1x1024xf32, #tpu.memory_space<vmem>>, %arg12: memref<1x1024xf32, #tpu.memory_space<vmem>>, %arg13: memref<1024x256xbf16, #tpu.memory_space<vmem>>, %arg14: memref<1x256xf32, #tpu.memory_space<vmem>>, %arg15: memref<8x256xf32, #tpu.memory_space<vmem>>) attributes {dimension_semantics = [], scalar_prefetch = 0 : i64, scratch_operands = 0 : i64, tpu.core_type = #tpu.core_type<tc>} {
    %c0 = arith.constant 0 : index
    %c0_0 = arith.constant 0 : index
    %0 = vector.load %arg0[%c0, %c0_0] : memref<8x32xf32, #tpu.memory_space<vmem>>, vector<8x32xf32>
    %c0_1 = arith.constant 0 : index
    %c0_2 = arith.constant 0 : index
    %1 = vector.load %arg1[%c0_1, %c0_2] : memref<8x1xi32, #tpu.memory_space<vmem>>, vector<8x1xi32>
    %2 = tpu.iota {dimensions = array<i32: 1>} : vector<8x10xi32>
    %3 = vector.broadcast %1 : vector<8x1xi32> to vector<8x10xi32>
    %4 = arith.cmpi eq, %3, %2 : vector<8x10xi32>
    %5 = arith.extui %4 : vector<8x10xi1> to vector<8x10xi32>
    %6 = arith.sitofp %5 : vector<8x10xi32> to vector<8x10xf32>
    %c0_3 = arith.constant 0 : index
    %c0_4 = arith.constant 0 : index
    %7 = vector.load %arg2[%c0_3, %c0_4] : memref<10x10xf32, #tpu.memory_space<vmem>>, vector<10x10xf32>
    %cst = arith.constant dense<0.000000e+00> : vector<8x10xf32>
    %8 = tpu.matmul %6, %7, %cst {dimension_numbers = #tpu.dot_dimension_numbers<[1], [0], [0], [1], [0, 0, 1, 1], [], []>} : vector<8x10xf32>, vector<10x10xf32>, vector<8x10xf32> -> vector<8x10xf32>
    %9 = arith.truncf %0 : vector<8x32xf32> to vector<8x32xbf16>
    %c0_5 = arith.constant 0 : index
    %c0_6 = arith.constant 0 : index
    %10 = vector.load %arg3[%c0_5, %c0_6] : memref<32x256xbf16, #tpu.memory_space<vmem>>, vector<32x256xbf16>
    %cst_7 = arith.constant dense<0.000000e+00> : vector<8x256xf32>
    %11 = tpu.matmul %9, %10, %cst_7 {dimension_numbers = #tpu.dot_dimension_numbers<[1], [0], [0], [1], [0, 0, 1, 1], [], []>} : vector<8x32xbf16>, vector<32x256xbf16>, vector<8x256xf32> -> vector<8x256xf32>
    %12 = arith.truncf %8 : vector<8x10xf32> to vector<8x10xbf16>
    %c0_8 = arith.constant 0 : index
    %c0_9 = arith.constant 0 : index
    %13 = vector.load %arg4[%c0_8, %c0_9] : memref<10x256xbf16, #tpu.memory_space<vmem>>, vector<10x256xbf16>
    %cst_10 = arith.constant dense<0.000000e+00> : vector<8x256xf32>
    %14 = tpu.matmul %12, %13, %cst_10 {dimension_numbers = #tpu.dot_dimension_numbers<[1], [0], [0], [1], [0, 0, 1, 1], [], []>} : vector<8x10xbf16>, vector<10x256xbf16>, vector<8x256xf32> -> vector<8x256xf32>
    %15 = arith.addf %11, %14 : vector<8x256xf32>
    %c0_11 = arith.constant 0 : index
    %c0_12 = arith.constant 0 : index
    %16 = vector.load %arg5[%c0_11, %c0_12] : memref<1x256xf32, #tpu.memory_space<vmem>>, vector<1x256xf32>
    %c0_13 = arith.constant 0 : index
    %c0_14 = arith.constant 0 : index
    %17 = vector.load %arg6[%c0_13, %c0_14] : memref<1x256xf32, #tpu.memory_space<vmem>>, vector<1x256xf32>
    %cst_15 = arith.constant dense<0.000000e+00> : vector<256xf32>
    %18 = vector.multi_reduction <add>, %15, %cst_15 [0] : vector<8x256xf32> to vector<256xf32>
    %19 = vector.shape_cast %18 : vector<256xf32> to vector<1x256xf32>
    %cst_16 = arith.constant 8.000000e+00 : f32
    %20 = vector.broadcast %cst_16 : f32 to vector<1x256xf32>
    %21 = arith.divf %19, %20 : vector<1x256xf32>
    %22 = vector.broadcast %21 : vector<1x256xf32> to vector<8x256xf32>
    %23 = arith.subf %15, %22 : vector<8x256xf32>
    %24 = arith.mulf %23, %23 : vector<8x256xf32>
    %cst_17 = arith.constant dense<0.000000e+00> : vector<256xf32>
    %25 = vector.multi_reduction <add>, %24, %cst_17 [0] : vector<8x256xf32> to vector<256xf32>
    %26 = vector.shape_cast %25 : vector<256xf32> to vector<1x256xf32>
    %cst_18 = arith.constant 8.000000e+00 : f32
    %27 = vector.broadcast %cst_18 : f32 to vector<1x256xf32>
    %28 = arith.divf %26, %27 : vector<1x256xf32>
    %29 = vector.broadcast %21 : vector<1x256xf32> to vector<8x256xf32>
    %30 = arith.subf %15, %29 : vector<8x256xf32>
    %cst_19 = arith.constant 9.99999974E-6 : f32
    %31 = vector.broadcast %cst_19 : f32 to vector<1x256xf32>
    %32 = arith.addf %28, %31 : vector<1x256xf32>
    %33 = math.rsqrt %32 : vector<1x256xf32>
    %34 = vector.broadcast %33 : vector<1x256xf32> to vector<8x256xf32>
    %35 = arith.mulf %30, %34 : vector<8x256xf32>
    %36 = vector.broadcast %16 : vector<1x256xf32> to vector<8x256xf32>
    %37 = arith.mulf %35, %36 : vector<8x256xf32>
    %38 = vector.broadcast %17 : vector<1x256xf32> to vector<8x256xf32>
    %39 = arith.addf %37, %38 : vector<8x256xf32>
    %cst_20 = arith.constant 0.000000e+00 : f32
    %40 = vector.broadcast %cst_20 : f32 to vector<8x256xf32>
    %41 = arith.maximumf %39, %40 : vector<8x256xf32>
    %42 = arith.truncf %41 : vector<8x256xf32> to vector<8x256xbf16>
    %c0_21 = arith.constant 0 : index
    %c0_22 = arith.constant 0 : index
    %43 = vector.load %arg7[%c0_21, %c0_22] : memref<256x512xbf16, #tpu.memory_space<vmem>>, vector<256x512xbf16>
    %cst_23 = arith.constant dense<0.000000e+00> : vector<8x512xf32>
    %44 = tpu.matmul %42, %43, %cst_23 {dimension_numbers = #tpu.dot_dimension_numbers<[1], [0], [0], [1], [0, 0, 1, 1], [], []>} : vector<8x256xbf16>, vector<256x512xbf16>, vector<8x512xf32> -> vector<8x512xf32>
    %c0_24 = arith.constant 0 : index
    %c0_25 = arith.constant 0 : index
    %45 = vector.load %arg8[%c0_24, %c0_25] : memref<1x512xf32, #tpu.memory_space<vmem>>, vector<1x512xf32>
    %c0_26 = arith.constant 0 : index
    %c0_27 = arith.constant 0 : index
    %46 = vector.load %arg9[%c0_26, %c0_27] : memref<1x512xf32, #tpu.memory_space<vmem>>, vector<1x512xf32>
    %cst_28 = arith.constant dense<0.000000e+00> : vector<512xf32>
    %47 = vector.multi_reduction <add>, %44, %cst_28 [0] : vector<8x512xf32> to vector<512xf32>
    %48 = vector.shape_cast %47 : vector<512xf32> to vector<1x512xf32>
    %cst_29 = arith.constant 8.000000e+00 : f32
    %49 = vector.broadcast %cst_29 : f32 to vector<1x512xf32>
    %50 = arith.divf %48, %49 : vector<1x512xf32>
    %51 = vector.broadcast %50 : vector<1x512xf32> to vector<8x512xf32>
    %52 = arith.subf %44, %51 : vector<8x512xf32>
    %53 = arith.mulf %52, %52 : vector<8x512xf32>
    %cst_30 = arith.constant dense<0.000000e+00> : vector<512xf32>
    %54 = vector.multi_reduction <add>, %53, %cst_30 [0] : vector<8x512xf32> to vector<512xf32>
    %55 = vector.shape_cast %54 : vector<512xf32> to vector<1x512xf32>
    %cst_31 = arith.constant 8.000000e+00 : f32
    %56 = vector.broadcast %cst_31 : f32 to vector<1x512xf32>
    %57 = arith.divf %55, %56 : vector<1x512xf32>
    %58 = vector.broadcast %50 : vector<1x512xf32> to vector<8x512xf32>
    %59 = arith.subf %44, %58 : vector<8x512xf32>
    %cst_32 = arith.constant 9.99999974E-6 : f32
    %60 = vector.broadcast %cst_32 : f32 to vector<1x512xf32>
    %61 = arith.addf %57, %60 : vector<1x512xf32>
    %62 = math.rsqrt %61 : vector<1x512xf32>
    %63 = vector.broadcast %62 : vector<1x512xf32> to vector<8x512xf32>
    %64 = arith.mulf %59, %63 : vector<8x512xf32>
    %65 = vector.broadcast %45 : vector<1x512xf32> to vector<8x512xf32>
    %66 = arith.mulf %64, %65 : vector<8x512xf32>
    %67 = vector.broadcast %46 : vector<1x512xf32> to vector<8x512xf32>
    %68 = arith.addf %66, %67 : vector<8x512xf32>
    %cst_33 = arith.constant 0.000000e+00 : f32
    %69 = vector.broadcast %cst_33 : f32 to vector<8x512xf32>
    %70 = arith.maximumf %68, %69 : vector<8x512xf32>
    %71 = arith.truncf %70 : vector<8x512xf32> to vector<8x512xbf16>
    %c0_34 = arith.constant 0 : index
    %c0_35 = arith.constant 0 : index
    %72 = vector.load %arg10[%c0_34, %c0_35] : memref<512x1024xbf16, #tpu.memory_space<vmem>>, vector<512x1024xbf16>
    %cst_36 = arith.constant dense<0.000000e+00> : vector<8x1024xf32>
    %73 = tpu.matmul %71, %72, %cst_36 {dimension_numbers = #tpu.dot_dimension_numbers<[1], [0], [0], [1], [0, 0, 1, 1], [], []>} : vector<8x512xbf16>, vector<512x1024xbf16>, vector<8x1024xf32> -> vector<8x1024xf32>
    %c0_37 = arith.constant 0 : index
    %c0_38 = arith.constant 0 : index
    %74 = vector.load %arg11[%c0_37, %c0_38] : memref<1x1024xf32, #tpu.memory_space<vmem>>, vector<1x1024xf32>
    %c0_39 = arith.constant 0 : index
    %c0_40 = arith.constant 0 : index
    %75 = vector.load %arg12[%c0_39, %c0_40] : memref<1x1024xf32, #tpu.memory_space<vmem>>, vector<1x1024xf32>
    %cst_41 = arith.constant dense<0.000000e+00> : vector<1024xf32>
    %76 = vector.multi_reduction <add>, %73, %cst_41 [0] : vector<8x1024xf32> to vector<1024xf32>
    %77 = vector.shape_cast %76 : vector<1024xf32> to vector<1x1024xf32>
    %cst_42 = arith.constant 8.000000e+00 : f32
    %78 = vector.broadcast %cst_42 : f32 to vector<1x1024xf32>
    %79 = arith.divf %77, %78 : vector<1x1024xf32>
    %80 = vector.broadcast %79 : vector<1x1024xf32> to vector<8x1024xf32>
    %81 = arith.subf %73, %80 : vector<8x1024xf32>
    %82 = arith.mulf %81, %81 : vector<8x1024xf32>
    %cst_43 = arith.constant dense<0.000000e+00> : vector<1024xf32>
    %83 = vector.multi_reduction <add>, %82, %cst_43 [0] : vector<8x1024xf32> to vector<1024xf32>
    %84 = vector.shape_cast %83 : vector<1024xf32> to vector<1x1024xf32>
    %cst_44 = arith.constant 8.000000e+00 : f32
    %85 = vector.broadcast %cst_44 : f32 to vector<1x1024xf32>
    %86 = arith.divf %84, %85 : vector<1x1024xf32>
    %87 = vector.broadcast %79 : vector<1x1024xf32> to vector<8x1024xf32>
    %88 = arith.subf %73, %87 : vector<8x1024xf32>
    %cst_45 = arith.constant 9.99999974E-6 : f32
    %89 = vector.broadcast %cst_45 : f32 to vector<1x1024xf32>
    %90 = arith.addf %86, %89 : vector<1x1024xf32>
    %91 = math.rsqrt %90 : vector<1x1024xf32>
    %92 = vector.broadcast %91 : vector<1x1024xf32> to vector<8x1024xf32>
    %93 = arith.mulf %88, %92 : vector<8x1024xf32>
    %94 = vector.broadcast %74 : vector<1x1024xf32> to vector<8x1024xf32>
    %95 = arith.mulf %93, %94 : vector<8x1024xf32>
    %96 = vector.broadcast %75 : vector<1x1024xf32> to vector<8x1024xf32>
    %97 = arith.addf %95, %96 : vector<8x1024xf32>
    %cst_46 = arith.constant 0.000000e+00 : f32
    %98 = vector.broadcast %cst_46 : f32 to vector<8x1024xf32>
    %99 = arith.maximumf %97, %98 : vector<8x1024xf32>
    %100 = arith.truncf %99 : vector<8x1024xf32> to vector<8x1024xbf16>
    %c0_47 = arith.constant 0 : index
    %c0_48 = arith.constant 0 : index
    %101 = vector.load %arg13[%c0_47, %c0_48] : memref<1024x256xbf16, #tpu.memory_space<vmem>>, vector<1024x256xbf16>
    %cst_49 = arith.constant dense<0.000000e+00> : vector<8x256xf32>
    %102 = tpu.matmul %100, %101, %cst_49 {dimension_numbers = #tpu.dot_dimension_numbers<[1], [0], [0], [1], [0, 0, 1, 1], [], []>} : vector<8x1024xbf16>, vector<1024x256xbf16>, vector<8x256xf32> -> vector<8x256xf32>
    %c0_50 = arith.constant 0 : index
    %c0_51 = arith.constant 0 : index
    %103 = vector.load %arg14[%c0_50, %c0_51] : memref<1x256xf32, #tpu.memory_space<vmem>>, vector<1x256xf32>
    %104 = vector.broadcast %103 : vector<1x256xf32> to vector<8x256xf32>
    %105 = arith.addf %102, %104 : vector<8x256xf32>
    %106 = math.tanh %105 : vector<8x256xf32>
    %c0_52 = arith.constant 0 : index
    %c0_53 = arith.constant 0 : index
    %107 = vector.load %arg15[%c0_52, %c0_53] : memref<8x256xf32, #tpu.memory_space<vmem>>, vector<8x256xf32>
    tpu.vector_store %arg15[%c0_52, %c0_53], %106 {strides = array<i32>} : memref<8x256xf32, #tpu.memory_space<vmem>>, vector<8x256xf32>,
    return
  }
}

</mosaic_0001>

<llo_original>
// kernel: generator_forward.1
$region0: #{generator_forward.1}
  #allocation0 [shape = 'u32[]', space=smem, size = 0x4, offset = 0x4, fixed_abs, tag = 'smem constant byte address 0x4 - core index']
  #allocation1 [shape = 'u32[144,128]{1,0:T(1,128)}', space=vmem, size = 0x12000, scoped, tag = 'internal scratch']
  %s0 = inlined_call_operand.vmem [shape: f32[8,32], index: 0, kind: input, shape index: {}]
  %s1 = inlined_call_operand.vmem [shape: s32[8,1], index: 1, kind: input, shape index: {}]
  %s2 = inlined_call_operand.hbm [shape: f32[10,10], index: 2, kind: input, shape index: {}]
  %s3 = inlined_call_operand.vmem [shape: bf16[32,256], index: 3, kind: input, shape index: {}]
  %s4 = inlined_call_operand.hbm [shape: bf16[10,256], index: 4, kind: input, shape index: {}]
  %s5 = inlined_call_operand.vmem [shape: f32[1,256], index: 5, kind: input, shape index: {}]
  %s6 = inlined_call_operand.hbm [shape: f32[1,256], index: 6, kind: input, shape index: {}]
  %s7 = inlined_call_operand.hbm [shape: bf16[256,512], index: 7, kind: input, shape index: {}]
  %s8 = inlined_call_operand.vmem [shape: f32[1,512], index: 8, kind: input, shape index: {}]
  %s9 = inlined_call_operand.hbm [shape: f32[1,512], index: 9, kind: input, shape index: {}]
  %s10 = inlined_call_operand.hbm [shape: bf16[512,1024], index: 10, kind: input, shape index: {}]
  %s11 = inlined_call_operand.hbm [shape: f32[1,1024], index: 11, kind: input, shape index: {}]
  %s12 = inlined_call_operand.hbm [shape: f32[1,1024], index: 12, kind: input, shape index: {}]
  %s13 = inlined_call_operand.hbm [shape: bf16[1024,256], index: 13, kind: input, shape index: {}]
  %s14 = inlined_call_operand.hbm [shape: f32[1,256], index: 14, kind: input, shape index: {}]
  %s15 = inlined_call_operand.vmem [shape: f32[8,256], index: 15, kind: output, shape index: {}]
  %s16 = sld [smem:[#allocation0]]
  $region110: #{generator_forward.1} parent=0
    _
  %s18 = ssub.s32 1, %s16
  %s19 = scalar_select 0, %s18, %s16
  $region1: #{generator_forward.1} parent=0
    #allocation2 [shape = 'u8[8192]{0}', space=vmem, size = 0x2000, scoped, tag = 'input window, operand 2, single buffered']
    #allocation3 [shape = 's32[1]{0}', space=sflag, size = 0x4, scoped, tag = 'scoped memory for generator_forward.1']
    #allocation4 [shape = 'u8[8192]{0}', space=vmem, size = 0x2000, scoped, tag = 'input window, operand 4, single buffered']
    #allocation5 [shape = 's32[1]{0}', space=sflag, size = 0x4, scoped, tag = 'scoped memory for generator_forward.1']
    #allocation6 [shape = 'u8[1024]{0}', space=vmem, size = 0x400, scoped, tag = 'input window, operand 6, single buffered']
    #allocation7 [shape = 'u8[262144]{0}', space=vmem, size = 0x40000, scoped, tag = 'input window, operand 7, single buffered']
    #allocation8 [shape = 's32[1]{0}', space=sflag, size = 0x4, scoped, tag = 'scoped memory for generator_forward.1']
    #allocation9 [shape = 'u8[2048]{0}', space=vmem, size = 0x800, scoped, tag = 'input window, operand 9, single buffered']
    #allocation10 [shape = 'u8[1048576]{0}', space=vmem, size = 0x100000, scoped, tag = 'input window, operand 10, single buffered']
    #allocation11 [shape = 's32[1]{0}', space=sflag, size = 0x4, scoped, tag = 'scoped memory for generator_forward.1']
    #allocation12 [shape = 'u8[4096]{0}', space=vmem, size = 0x1000, scoped, tag = 'input window, operand 11, single buffered']
    #allocation13 [shape = 'u8[4096]{0}', space=vmem, size = 0x1000, scoped, tag = 'input window, operand 12, single buffered']
    #allocation14 [shape = 's32[1]{0}', space=sflag, size = 0x4, scoped, tag = 'scoped memory for generator_forward.1']
    #allocation15 [shape = 'u8[524288]{0}', space=vmem, size = 0x80000, scoped, tag = 'input window, operand 13, single buffered']
    #allocation16 [shape = 'u8[1024]{0}', space=vmem, size = 0x400, scoped, tag = 'input window, operand 14, single buffered']
    #allocation17 [shape = 's32[1]{0}', space=sflag, size = 0x4, scoped, tag = 'scoped memory for generator_forward.1']
    %20 = vsyncpa [#allocation3], 0
    %21 = vsyncpa [#allocation5], 0
    %22 = vsyncpa [#allocation8], 0
    %23 = vsyncpa [#allocation11], 0
    %24 = vsyncpa [#allocation14], 0
    %25 = vsyncpa [#allocation17], 0
    // Predicated region
    $region2: #{generator_forward.1} parent=1 // pred_check
      _
    $region3: #{generator_forward.1} parent=1 // pred_check_branch
      %27 = sbr.rel (0) target = $region5
    $region4: #{generator_forward.1} parent=1 // pred_region
      _
    $region5: #{generator_forward.1} parent=1 // pred_fallthru
      _
    // Predicated region
    $region6: #{generator_forward.1} parent=1 // pred_check
      _
    $region7: #{generator_forward.1} parent=1 // pred_check_branch
      %29 = sbr.rel (0) target = $region9
    $region8: #{generator_forward.1} parent=1 // pred_region
      _
    $region9: #{generator_forward.1} parent=1 // pred_fallthru
      _
    // Predicated region
    $region10: #{generator_forward.1} parent=1 // pred_check
      _
    $region11: #{generator_forward.1} parent=1 // pred_check_branch
      %31 = sbr.rel (0) target = $region13
    $region12: #{generator_forward.1} parent=1 // pred_region
      %s33 = ssub.s32 256, 256
      %34 = vsyncadd [#allocation3], %s33
      %s35 = sshll.u32 [#allocation2], 4
      %s36 = int_to_ptr.vmem [resolvable:$true] %s35
      %41 = dma.hbm_to_vmem [thread:$0]  %s2, 256, %s36, [#allocation3], 128, 128, 8
    $region13: #{generator_forward.1} parent=1 // pred_fallthru
      _
    // Predicated region
    $region14: #{generator_forward.1} parent=1 // pred_check
      _
    $region15: #{generator_forward.1} parent=1 // pred_check_branch
      %43 = sbr.rel (0) target = $region17
    $region16: #{generator_forward.1} parent=1 // pred_region
      _
    $region17: #{generator_forward.1} parent=1 // pred_fallthru
      _
    // Predicated region
    $region18: #{generator_forward.1} parent=1 // pred_check
      _
    $region19: #{generator_forward.1} parent=1 // pred_check_branch
      %45 = sbr.rel (0) target = $region21
    $region20: #{generator_forward.1} parent=1 // pred_region
      %s47 = ssub.s32 256, 256
      %48 = vsyncadd [#allocation5], %s47
      %s49 = sshll.u32 [#allocation4], 4
      %s50 = int_to_ptr.vmem [resolvable:$true] %s49
      %55 = dma.hbm_to_vmem [thread:$0]  %s4, 256, %s50, [#allocation5], 128, 128, 8
    $region21: #{generator_forward.1} parent=1 // pred_fallthru
      _
    // Predicated region
    $region22: #{generator_forward.1} parent=1 // pred_check
      _
    $region23: #{generator_forward.1} parent=1 // pred_check_branch
      %57 = sbr.rel (0) target = $region25
    $region24: #{generator_forward.1} parent=1 // pred_region
      _
    $region25: #{generator_forward.1} parent=1 // pred_fallthru
      _
    // Predicated region
    $region26: #{generator_forward.1} parent=1 // pred_check
      _
    $region27: #{generator_forward.1} parent=1 // pred_check_branch
      %59 = sbr.rel (0) target = $region29
    $region28: #{generator_forward.1} parent=1 // pred_region
      %s61 = ssub.s32 32, 32
      %62 = vsyncadd [#allocation5], %s61
      %s64 = sshll.u32 [#allocation6], 4
      %s65 = int_to_ptr.vmem [resolvable:$true] %s64
      %67 = dma.hbm_to_vmem [thread:$0]  %s6, 32, %s65, [#allocation5]
    $region29: #{generator_forward.1} parent=1 // pred_fallthru
      _
    // Predicated region
    $region30: #{generator_forward.1} parent=1 // pred_check
      _
    $region31: #{generator_forward.1} parent=1 // pred_check_branch
      %69 = sbr.rel (0) target = $region33
    $region32: #{generator_forward.1} parent=1 // pred_region
      %s71 = ssub.s32 8192, 8192
      %72 = vsyncadd [#allocation8], %s71
      %s73 = sshll.u32 [#allocation7], 4
      %s74 = int_to_ptr.vmem [resolvable:$true] %s73
      %79 = dma.hbm_to_vmem [thread:$0]  %s7, 8192, %s74, [#allocation8], 256, 256, 16
    $region33: #{generator_forward.1} parent=1 // pred_fallthru
      _
    // Predicated region
    $region34: #{generator_forward.1} parent=1 // pred_check
      _
    $region35: #{generator_forward.1} parent=1 // pred_check_branch
      %81 = sbr.rel (0) target = $region37
    $region36: #{generator_forward.1} parent=1 // pred_region
      _
    $region37: #{generator_forward.1} parent=1 // pred_fallthru
      _
    // Predicated region
    $region38: #{generator_forward.1} parent=1 // pred_check
      _
    $region39: #{generator_forward.1} parent=1 // pred_check_branch
      %83 = sbr.rel (0) target = $region41
    $region40: #{generator_forward.1} parent=1 // pred_region
      %s85 = ssub.s32 64, 64
      %86 = vsyncadd [#allocation8], %s85
      %s88 = sshll.u32 [#allocation9], 4
      %s89 = int_to_ptr.vmem [resolvable:$true] %s88
      %91 = dma.hbm_to_vmem [thread:$0]  %s9, 64, %s89, [#allocation8]
    $region41: #{generator_forward.1} parent=1 // pred_fallthru
      _
    // Predicated region
    $region42: #{generator_forward.1} parent=1 // pred_check
      _
    $region43: #{generator_forward.1} parent=1 // pred_check_branch
      %93 = sbr.rel (0) target = $region45
    $region44: #{generator_forward.1} parent=1 // pred_region
      %s95 = ssub.s32 32768, 32768
      %96 = vsyncadd [#allocation11], %s95
      %s97 = sshll.u32 [#allocation10], 4
      %s98 = int_to_ptr.vmem [resolvable:$true] %s97
      %103 = dma.hbm_to_vmem [thread:$0]  %s10, 32768, %s98, [#allocation11], 512, 512, 32
    $region45: #{generator_forward.1} parent=1 // pred_fallthru
      _
    // Predicated region
    $region46: #{generator_forward.1} parent=1 // pred_check
      _
    $region47: #{generator_forward.1} parent=1 // pred_check_branch
      %105 = sbr.rel (0) target = $region49
    $region48: #{generator_forward.1} parent=1 // pred_region
      %s107 = ssub.s32 128, 128
      %108 = vsyncadd [#allocation11], %s107
      %s110 = sshll.u32 [#allocation12], 4
      %s111 = int_to_ptr.vmem [resolvable:$true] %s110
      %113 = dma.hbm_to_vmem [thread:$0]  %s11, 128, %s111, [#allocation11]
    $region49: #{generator_forward.1} parent=1 // pred_fallthru
      _
    // Predicated region
    $region50: #{generator_forward.1} parent=1 // pred_check
      _
    $region51: #{generator_forward.1} parent=1 // pred_check_branch
      %115 = sbr.rel (0) target = $region53
    $region52: #{generator_forward.1} parent=1 // pred_region
      %s117 = ssub.s32 128, 128
      %118 = vsyncadd [#allocation14], %s117
      %s120 = sshll.u32 [#allocation13], 4
      %s121 = int_to_ptr.vmem [resolvable:$true] %s120
      %123 = dma.hbm_to_vmem [thread:$0]  %s12, 128, %s121, [#allocation14]
    $region53: #{generator_forward.1} parent=1 // pred_fallthru
      _
    // Predicated region
    $region54: #{generator_forward.1} parent=1 // pred_check
      _
    $region55: #{generator_forward.1} parent=1 // pred_check_branch
      %125 = sbr.rel (0) target = $region57
    $region56: #{generator_forward.1} parent=1 // pred_region
      %s127 = ssub.s32 16384, 16384
      %128 = vsyncadd [#allocation14], %s127
      %s129 = sshll.u32 [#allocation15], 4
      %s130 = int_to_ptr.vmem [resolvable:$true] %s129
      %135 = dma.hbm_to_vmem [thread:$0]  %s13, 16384, %s130, [#allocation14], 128, 128, 8
    $region57: #{generator_forward.1} parent=1 // pred_fallthru
      _
    // Predicated region
    $region58: #{generator_forward.1} parent=1 // pred_check
      _
    $region59: #{generator_forward.1} parent=1 // pred_check_branch
      %137 = sbr.rel (0) target = $region61
    $region60: #{generator_forward.1} parent=1 // pred_region
      %s139 = ssub.s32 32, 32
      %140 = vsyncadd [#allocation17], %s139
      %s142 = sshll.u32 [#allocation16], 4
      %s143 = int_to_ptr.vmem [resolvable:$true] %s142
      %145 = dma.hbm_to_vmem [thread:$0]  %s14, 32, %s143, [#allocation17]
    $region61: #{generator_forward.1} parent=1 // pred_fallthru
      _
    // Predicated region
    $region62: #{generator_forward.1} parent=1 // pred_check
      _
    $region63: #{generator_forward.1} parent=1 // pred_check_branch
      %147 = sbr.rel (0) target = $region65
    $region64: #{generator_forward.1} parent=1 // pred_region
      %148 = dma.done [#allocation3], 256
    $region65: #{generator_forward.1} parent=1 // pred_fallthru
      _
    // Predicated region
    $region66: #{generator_forward.1} parent=1 // pred_check
      _
    $region67: #{generator_forward.1} parent=1 // pred_check_branch
      %150 = sbr.rel (0) target = $region69
    $region68: #{generator_forward.1} parent=1 // pred_region
      %151 = dma.done [#allocation5], 256
    $region69: #{generator_forward.1} parent=1 // pred_fallthru
      _
    // Predicated region
    $region70: #{generator_forward.1} parent=1 // pred_check
      _
    $region71: #{generator_forward.1} parent=1 // pred_check_branch
      %153 = sbr.rel (0) target = $region73
    $region72: #{generator_forward.1} parent=1 // pred_region
      %154 = dma.done [#allocation5], 32
    $region73: #{generator_forward.1} parent=1 // pred_fallthru
      _
    // Predicated region
    $region74: #{generator_forward.1} parent=1 // pred_check
      _
    $region75: #{generator_forward.1} parent=1 // pred_check_branch
      %156 = sbr.rel (0) target = $region77
    $region76: #{generator_forward.1} parent=1 // pred_region
      %157 = dma.done [#allocation8], 8192
    $region77: #{generator_forward.1} parent=1 // pred_fallthru
      _
    // Predicated region
    $region78: #{generator_forward.1} parent=1 // pred_check
      _
    $region79: #{generator_forward.1} parent=1 // pred_check_branch
      %159 = sbr.rel (0) target = $region81
    $region80: #{generator_forward.1} parent=1 // pred_region
      %160 = dma.done [#allocation8], 64
    $region81: #{generator_forward.1} parent=1 // pred_fallthru
      _
    // Predicated region
    $region82: #{generator_forward.1} parent=1 // pred_check
      _
    $region83: #{generator_forward.1} parent=1 // pred_check_branch
      %162 = sbr.rel (0) target = $region85
    $region84: #{generator_forward.1} parent=1 // pred_region
      %163 = dma.done [#allocation11], 32768
    $region85: #{generator_forward.1} parent=1 // pred_fallthru
      _
    // Predicated region
    $region86: #{generator_forward.1} parent=1 // pred_check
      _
    $region87: #{generator_forward.1} parent=1 // pred_check_branch
      %165 = sbr.rel (0) target = $region89
    $region88: #{generator_forward.1} parent=1 // pred_region
      %166 = dma.done [#allocation11], 128
    $region89: #{generator_forward.1} parent=1 // pred_fallthru
      _
    // Predicated region
    $region90: #{generator_forward.1} parent=1 // pred_check
      _
    $region91: #{generator_forward.1} parent=1 // pred_check_branch
      %168 = sbr.rel (0) target = $region93
    $region92: #{generator_forward.1} parent=1 // pred_region
      %169 = dma.done [#allocation14], 128
    $region93: #{generator_forward.1} parent=1 // pred_fallthru
      _
    // Predicated region
    $region94: #{generator_forward.1} parent=1 // pred_check
      _
    $region95: #{generator_forward.1} parent=1 // pred_check_branch
      %171 = sbr.rel (0) target = $region97
    $region96: #{generator_forward.1} parent=1 // pred_region
      %172 = dma.done [#allocation14], 16384
    $region97: #{generator_forward.1} parent=1 // pred_fallthru
      _
    // Predicated region
    $region98: #{generator_forward.1} parent=1 // pred_check
      _
    $region99: #{generator_forward.1} parent=1 // pred_check_branch
      %174 = sbr.rel (0) target = $region101
    $region100: #{generator_forward.1} parent=1 // pred_region
      %175 = dma.done [#allocation17], 32
    $region101: #{generator_forward.1} parent=1 // pred_fallthru
      _
    %v177 = vld [vmem:[%s0] sm:$0xff]
    %v178 = vld [vmem:[%s1] sm:$0xff]
    %v179 = vlaneseq
    %v180 = vand.u32 %v179, 127
    %181 = vset.pattern.permute.xlu0 0
    %182 = vperm.xlu0 %181, %v178
    %v183 = vpop.permute.xlu0 %182
    %vm184 = vcmp.eq.s32.totalorder %v183, %v180
    %v185 = vsel %vm184, 1, 0
    %v186 = vcvt.s32.f32 %v185
    %v187 = vld [vmem:[#allocation2] sm:$0xff]
    %v188 = vld [vmem:[#allocation2 + $0x8] sm:$0x3]
    %vm189 = vcmask 80896
    %v191 = vsel %vm189, %v186, 0
    %vm193 = vcmask 1041408
    %v195 = vsel %vm193, %v188, 0
    %197 = vmatprep.subr.mxu0 0.0
    %198 = vmatpush1.msra.mxu0 %v187
    %199 = vmatprep.subr.mxu0 0.0
    %200 = vmatpush1.msra.mxu0 %v195
    %201 = vmatprep.subr.mxu0 0.0
    %202 = vmatpush1.msra.mxu0 0.0
    %203 = vmatprep.subr.mxu0 0.0
    %204 = vmatpush1.msra.mxu0 0.0
    %205 = vmatprep.subr.mxu0 0.0
    %206 = vmatpush1.msra.mxu0 0.0
    %207 = vmatprep.subr.mxu0 0.0
    %208 = vmatpush1.msra.mxu0 0.0
    %209 = vmatprep.subr.mxu0 0.0
    %210 = vmatpush1.msra.mxu0 0.0
    %211 = vmatprep.subr.mxu0 0.0
    %212 = vmatpush1.msra.mxu0 0.0
    %213 = vmatprep.subr.mxu0 0.0
    %214 = vmatpush1.msra.mxu0 0.0
    %215 = vmatprep.subr.mxu0 0.0
    %216 = vmatpush1.msra.mxu0 0.0
    %217 = vmatprep.subr.mxu0 0.0
    %218 = vmatpush1.msra.mxu0 0.0
    %219 = vmatprep.subr.mxu0 0.0
    %220 = vmatpush1.msra.mxu0 0.0
    %221 = vmatprep.subr.mxu0 0.0
    %222 = vmatpush1.msra.mxu0 0.0
    %223 = vmatprep.subr.mxu0 0.0
    %224 = vmatpush1.msra.mxu0 0.0
    %225 = vmatprep.subr.mxu0 0.0
    %226 = vmatpush1.msra.mxu0 0.0
    %227 = vmatprep.subr.mxu0 0.0
    %228 = vmatpush1.msra.mxu0 0.0
    %229 = vmatprep.subr.mxu0 0.0
    %230 = vmatpush1.msra.mxu0 0.0
    %231 = vmatprep.subr.mxu0 0.0
    %232 = vmatpush1.msra.mxu0 0.0
    %233 = vmatprep.subr.mxu0 0.0
    %234 = vmatpush1.msra.mxu0 0.0
    %235 = vmatprep.subr.mxu0 0.0
    %236 = vmatpush1.msra.mxu0 0.0
    %237 = vmatprep.subr.mxu0 0.0
    %238 = vmatpush1.msra.mxu0 0.0
    %239 = vmatprep.subr.mxu0 0.0
    %240 = vmatpush1.msra.mxu0 0.0
    %241 = vmatprep.subr.mxu0 0.0
    %242 = vmatpush1.msra.mxu0 0.0
    %243 = vmatprep.subr.mxu0 0.0
    %244 = vmatpush1.msra.mxu0 0.0
    %245 = vmatprep.subr.mxu0 0.0
    %246 = vmatpush1.msra.mxu0 0.0
    %247 = vmatprep.subr.mxu0 0.0
    %248 = vmatpush1.msra.mxu0 0.0
    %249 = vmatprep.subr.mxu0 0.0
    %250 = vmatpush1.msra.mxu0 0.0
    %251 = vmatprep.subr.mxu0 0.0
    %252 = vmatpush1.msra.mxu0 0.0
    %253 = vmatprep.subr.mxu0 0.0
    %254 = vmatpush1.msra.mxu0 0.0
    %255 = vmatprep.subr.mxu0 0.0
    %256 = vmatpush1.msra.mxu0 0.0
    %257 = vmatprep.subr.mxu0 0.0
    %258 = vmatpush1.msra.mxu0 0.0
    %259 = vmatprep.subr.mxu0 0.0
    %260 = vmatpush1.msra.mxu0 0.0
    %261 = vmatprep.mubr.f32.mxu0 0.0
    %262 = vmatmul.mubr.f32.gmra.mrb[0].mxu0 %v191
    %v263 = vpop.f32.mrb[0].mxu0
    %v264 = vadd.f32 0.0, %v263
    %v265 = vpop.f32.mrb[0].mxu0
    %266 = vdwg.mxu0
    %v267 = vpack.c.bf16 %v177, %v177
    %v268 = vld [vmem:[%s3] sm:$0xff]
    %v269 = vld [vmem:[%s3 + $0x8] sm:$0xff]
    %v270 = vld [vmem:[%s3 + $0x10] sm:$0xff]
    %v271 = vld [vmem:[%s3 + $0x18] sm:$0xff]
    %v272 = vpack.c.bf16 %v264, %v264
    %v273 = vld [vmem:[#allocation4] sm:$0xff]
    %v274 = vld [vmem:[#allocation4 + $0x8] sm:$0x11]
    %v277 = vunpack.c.l.b16 %v273
    %v278 = vunpack.c.h.b16 %v273
    %v279 = vunpack.c.l.b16 %v274
    %v280 = vunpack.c.h.b16 %v274
    %v281 = vpack.c.b16 %v279, %v277
    %v282 = vpack.c.b16 %v280, %v278
    %v284 = vsel %vm189, %v272, 0
    %vm286 = vcmask 1044480
    %v288 = vsel %vm286, %v281, 0
    %v291 = vsel %vm286, %v282, 0
    %293 = vmatprep.subr.bf16.mxu0 %v291
    %294 = vmatpush1.bf16.msra.mxu0 %v288
    %295 = vmatprep.subr.bf16.mxu0 0
    %296 = vmatpush1.bf16.msra.mxu0 0
    %297 = vmatprep.subr.bf16.mxu0 0
    %298 = vmatpush1.bf16.msra.mxu0 0
    %299 = vmatprep.subr.bf16.mxu0 0
    %300 = vmatpush1.bf16.msra.mxu0 0
    %301 = vmatprep.subr.bf16.mxu0 0
    %302 = vmatpush1.bf16.msra.mxu0 0
    %303 = vmatprep.subr.bf16.mxu0 0
    %304 = vmatpush1.bf16.msra.mxu0 0
    %305 = vmatprep.subr.bf16.mxu0 0
    %306 = vmatpush1.bf16.msra.mxu0 0
    %307 = vmatprep.subr.bf16.mxu0 0
    %308 = vmatpush1.bf16.msra.mxu0 0
    %309 = vmatprep.subr.bf16.mxu0 0
    %310 = vmatpush1.bf16.msra.mxu0 0
    %311 = vmatprep.subr.bf16.mxu0 0
    %312 = vmatpush1.bf16.msra.mxu0 0
    %313 = vmatprep.subr.bf16.mxu0 0
    %314 = vmatpush1.bf16.msra.mxu0 0
    %315 = vmatprep.subr.bf16.mxu0 0
    %316 = vmatpush1.bf16.msra.mxu0 0
    %317 = vmatprep.subr.bf16.mxu0 0
    %318 = vmatpush1.bf16.msra.mxu0 0
    %319 = vmatprep.subr.bf16.mxu0 0
    %320 = vmatpush1.bf16.msra.mxu0 0
    %321 = vmatprep.subr.bf16.mxu0 0
    %322 = vmatpush1.bf16.msra.mxu0 0
    %323 = vmatprep.subr.bf16.mxu0 0
    %324 = vmatpush1.bf16.msra.mxu0 0
    %325 = vmatprep.mubr.bf16.mxu0 0
    %326 = vmatmul.mubr.bf16.gmra.mrb[0].mxu0 %v284
    %v327 = vpop.f32.mrb[0].mxu0
    %v328 = vadd.f32 0.0, %v327
    %v329 = vpop.f32.mrb[0].mxu0
    %v330 = vadd.f32 0.0, %v329
    %v331 = vpop.f32.mrb[0].mxu0
    %v332 = vpop.f32.mrb[0].mxu0
    %333 = vdwg.mxu0
    %v338 = vunpack.c.l.b16 %v268
    %v339 = vunpack.c.h.b16 %v268
    %v340 = vunpack.c.l.b16 %v269
    %v341 = vunpack.c.h.b16 %v269
    %v342 = vunpack.c.l.b16 %v270
    %v343 = vunpack.c.h.b16 %v270
    %v344 = vunpack.c.l.b16 %v271
    %v345 = vunpack.c.h.b16 %v271
    %v346 = vpack.c.b16 %v340, %v338
    %v347 = vpack.c.b16 %v341, %v339
    %v348 = vpack.c.b16 %v344, %v342
    %v349 = vpack.c.b16 %v345, %v343
    %vm354 = vcmask 261120
    %v356 = vsel %vm354, %v267, 0
    %358 = vmatprep.subr.bf16.mxu0 %v347
    %359 = vmatpush1.bf16.msra.mxu0 %v346
    %360 = vmatprep.subr.bf16.mxu0 %v349
    %361 = vmatpush1.bf16.msra.mxu0 %v348
    %362 = vmatprep.subr.bf16.mxu0 0
    %363 = vmatpush1.bf16.msra.mxu0 0
    %364 = vmatprep.subr.bf16.mxu0 0
    %365 = vmatpush1.bf16.msra.mxu0 0
    %366 = vmatprep.subr.bf16.mxu0 0
    %367 = vmatpush1.bf16.msra.mxu0 0
    %368 = vmatprep.subr.bf16.mxu0 0
    %369 = vmatpush1.bf16.msra.mxu0 0
    %370 = vmatprep.subr.bf16.mxu0 0
    %371 = vmatpush1.bf16.msra.mxu0 0
    %372 = vmatprep.subr.bf16.mxu0 0
    %373 = vmatpush1.bf16.msra.mxu0 0
    %374 = vmatprep.subr.bf16.mxu0 0
    %375 = vmatpush1.bf16.msra.mxu0 0
    %376 = vmatprep.subr.bf16.mxu0 0
    %377 = vmatpush1.bf16.msra.mxu0 0
    %378 = vmatprep.subr.bf16.mxu0 0
    %379 = vmatpush1.bf16.msra.mxu0 0
    %380 = vmatprep.subr.bf16.mxu0 0
    %381 = vmatpush1.bf16.msra.mxu0 0
    %382 = vmatprep.subr.bf16.mxu0 0
    %383 = vmatpush1.bf16.msra.mxu0 0
    %384 = vmatprep.subr.bf16.mxu0 0
    %385 = vmatpush1.bf16.msra.mxu0 0
    %386 = vmatprep.subr.bf16.mxu0 0
    %387 = vmatpush1.bf16.msra.mxu0 0
    %388 = vmatprep.subr.bf16.mxu0 0
    %389 = vmatpush1.bf16.msra.mxu0 0
    %390 = vmatprep.mubr.bf16.mxu0 0
    %391 = vmatmul.mubr.bf16.gmra.mrb[0].mxu0 %v356
    %v392 = vpop.f32.mrb[0].mxu0
    %v393 = vadd.f32 %v328, %v392
    %v394 = vpop.f32.mrb[0].mxu0
    %v395 = vadd.f32 %v330, %v394
    %v396 = vpop.f32.mrb[0].mxu0
    %v397 = vpop.f32.mrb[0].mxu0
    %398 = vdwg.mxu0
    %v399 = vld [vmem:[%s5] sm:$0x3]
    %v400 = vld [vmem:[#allocation6] sm:$0x3]
    %v401 = vrot.slane %v393, 4
    %v402 = vadd.f32 %v393, %v401
    %v403 = vrot.slane %v402, 2
    %v404 = vadd.f32 %v402, %v403
    %v405 = vrot.slane %v404, 1
    %v406 = vadd.f32 %v404, %v405
    %v407 = vrot.slane %v395, 4
    %v408 = vadd.f32 %v395, %v407
    %v409 = vrot.slane %v408, 2
    %v410 = vadd.f32 %v408, %v409
    %v411 = vrot.slane %v410, 1
    %v412 = vadd.f32 %v410, %v411
    %v413 = vrcp.pop 8.0
    %v414 = vmul.f32 %v406, %v413
    %v415 = vmul.f32 %v412, %v413
    %v416 = vsub.f32 %v393, %v414
    %v417 = vsub.f32 %v395, %v415
    %v418 = vmul.f32 %v416, %v416
    %v419 = vmul.f32 %v417, %v417
    %v420 = vrot.slane %v418, 4
    %v421 = vadd.f32 %v418, %v420
    %v422 = vrot.slane %v421, 2
    %v423 = vadd.f32 %v421, %v422
    %v424 = vrot.slane %v423, 1
    %v425 = vadd.f32 %v423, %v424
    %v426 = vrot.slane %v419, 4
    %v427 = vadd.f32 %v419, %v426
    %v428 = vrot.slane %v427, 2
    %v429 = vadd.f32 %v427, %v428
    %v430 = vrot.slane %v429, 1
    %v431 = vadd.f32 %v429, %v430
    %v432 = vmul.f32 %v425, %v413
    %v433 = vmul.f32 %v431, %v413
    %v434 = vadd.f32 %v432, 1e-05
    %v435 = vadd.f32 %v433, 1e-05
    %v436 = vrsqrt.pop %v434
    %v437 = vrsqrt.pop %v435
    %v438 = vmul.f32 %v416, %v436
    %v439 = vmul.f32 %v417, %v437
    %v441 = vlaneseq
    %v442 = vshrl.u32 %v441, 7
    %v443 = vsub.s32 0, %v442
    %v444 = vrot.slane %v399, %v443
    %v445 = vlaneseq
    %v446 = vshrl.u32 %v445, 7
    %v447 = vsub.s32 1, %v446
    %v448 = vrot.slane %v399, %v447
    %v451 = vmul.f32 %v438, %v444
    %v452 = vmul.f32 %v439, %v448
    %v454 = vlaneseq
    %v455 = vshrl.u32 %v454, 7
    %v456 = vsub.s32 0, %v455
    %v457 = vrot.slane %v400, %v456
    %v458 = vlaneseq
    %v459 = vshrl.u32 %v458, 7
    %v460 = vsub.s32 1, %v459
    %v461 = vrot.slane %v400, %v460
    %v464 = vadd.f32 %v451, %v457
    %v465 = vadd.f32 %v452, %v461
    %v466 = vmax.f32 %v464, 0.0
    %v467 = vmax.f32 %v465, 0.0
    %v468 = vpack.c.bf16 %v466, %v466
    %v469 = vpack.c.bf16 %v467, %v467
    %v470 = vld [vmem:[#allocation7] sm:$0xff]
    %v471 = vld [vmem:[#allocation7 + $0x8] sm:$0xff]
    %v472 = vld [vmem:[#allocation7 + $0x10] sm:$0xff]
    %v473 = vld [vmem:[#allocation7 + $0x18] sm:$0xff]
    %v474 = vld [vmem:[#allocation7 + $0x20] sm:$0xff]
    %v475 = vld [vmem:[#allocation7 + $0x28] sm:$0xff]
    %v476 = vld [vmem:[#allocation7 + $0x30] sm:$0xff]
    %v477 = vld [vmem:[#allocation7 + $0x38] sm:$0xff]
    %v478 = vld [vmem:[#allocation7 + $0x40] sm:$0xff]
    %v479 = vld [vmem:[#allocation7 + $0x48] sm:$0xff]
    %v480 = vld [vmem:[#allocation7 + $0x50] sm:$0xff]
    %v481 = vld [vmem:[#allocation7 + $0x58] sm:$0xff]
    %v482 = vld [vmem:[#allocation7 + $0x60] sm:$0xff]
    %v483 = vld [vmem:[#allocation7 + $0x68] sm:$0xff]
    %v484 = vld [vmem:[#allocation7 + $0x70] sm:$0xff]
    %v485 = vld [vmem:[#allocation7 + $0x78] sm:$0xff]
    %v486 = vld [vmem:[#allocation7 + $0x80] sm:$0xff]
    %v487 = vld [vmem:[#allocation7 + $0x88] sm:$0xff]
    %v488 = vld [vmem:[#allocation7 + $0x90] sm:$0xff]
    %v489 = vld [vmem:[#allocation7 + $0x98] sm:$0xff]
    %v490 = vld [vmem:[#allocation7 + $0xa0] sm:$0xff]
    %v491 = vld [vmem:[#allocation7 + $0xa8] sm:$0xff]
    %v492 = vld [vmem:[#allocation7 + $0xb0] sm:$0xff]
    %v493 = vld [vmem:[#allocation7 + $0xb8] sm:$0xff]
    %v494 = vld [vmem:[#allocation7 + $0xc0] sm:$0xff]
    %v495 = vld [vmem:[#allocation7 + $0xc8] sm:$0xff]
    %v496 = vld [vmem:[#allocation7 + $0xd0] sm:$0xff]
    %v497 = vld [vmem:[#allocation7 + $0xd8] sm:$0xff]
    %v498 = vld [vmem:[#allocation7 + $0xe0] sm:$0xff]
    %v499 = vld [vmem:[#allocation7 + $0xe8] sm:$0xff]
    %v500 = vld [vmem:[#allocation7 + $0xf0] sm:$0xff]
    %v501 = vld [vmem:[#allocation7 + $0xf8] sm:$0xff]
    %v502 = vld [vmem:[#allocation7 + $0x100] sm:$0xff]
    %v503 = vld [vmem:[#allocation7 + $0x108] sm:$0xff]
    %v504 = vld [vmem:[#allocation7 + $0x110] sm:$0xff]
    %v505 = vld [vmem:[#allocation7 + $0x118] sm:$0xff]
    %v506 = vld [vmem:[#allocation7 + $0x120] sm:$0xff]
    %v507 = vld [vmem:[#allocation7 + $0x128] sm:$0xff]
    %v508 = vld [vmem:[#allocation7 + $0x130] sm:$0xff]
    %v509 = vld [vmem:[#allocation7 + $0x138] sm:$0xff]
    %v510 = vld [vmem:[#allocation7 + $0x140] sm:$0xff]
    %v511 = vld [vmem:[#allocation7 + $0x148] sm:$0xff]
    %v512 = vld [vmem:[#allocation7 + $0x150] sm:$0xff]
    %v513 = vld [vmem:[#allocation7 + $0x158] sm:$0xff]
    %v514 = vld [vmem:[#allocation7 + $0x160] sm:$0xff]
    %v515 = vld [vmem:[#allocation7 + $0x168] sm:$0xff]
    %v516 = vld [vmem:[#allocation7 + $0x170] sm:$0xff]
    %v517 = vld [vmem:[#allocation7 + $0x178] sm:$0xff]
    %v518 = vld [vmem:[#allocation7 + $0x180] sm:$0xff]
    %v519 = vld [vmem:[#allocation7 + $0x188] sm:$0xff]
    %v520 = vld [vmem:[#allocation7 + $0x190] sm:$0xff]
    %v521 = vld [vmem:[#allocation7 + $0x198] sm:$0xff]
    %v522 = vld [vmem:[#allocation7 + $0x1a0] sm:$0xff]
    %v523 = vld [vmem:[#allocation7 + $0x1a8] sm:$0xff]
    %v524 = vld [vmem:[#allocation7 + $0x1b0] sm:$0xff]
    %v525 = vld [vmem:[#allocation7 + $0x1b8] sm:$0xff]
    %v526 = vld [vmem:[#allocation7 + $0x1c0] sm:$0xff]
    %v527 = vld [vmem:[#allocation7 + $0x1c8] sm:$0xff]
    %v528 = vld [vmem:[#allocation7 + $0x1d0] sm:$0xff]
    %v529 = vld [vmem:[#allocation7 + $0x1d8] sm:$0xff]
    %v530 = vld [vmem:[#allocation7 + $0x1e0] sm:$0xff]
    %v531 = vld [vmem:[#allocation7 + $0x1e8] sm:$0xff]
    %v532 = vld [vmem:[#allocation7 + $0x1f0] sm:$0xff]
    %v533 = vld [vmem:[#allocation7 + $0x1f8] sm:$0xff]
    %v598 = vunpack.c.l.b16 %v470
    %v599 = vunpack.c.h.b16 %v470
    %v600 = vunpack.c.l.b16 %v471
    %v601 = vunpack.c.h.b16 %v471
    %v602 = vunpack.c.l.b16 %v472
    %v603 = vunpack.c.h.b16 %v472
    %v604 = vunpack.c.l.b16 %v473
    %v605 = vunpack.c.h.b16 %v473
    %v606 = vunpack.c.l.b16 %v474
    %v607 = vunpack.c.h.b16 %v474
    %v608 = vunpack.c.l.b16 %v475
    %v609 = vunpack.c.h.b16 %v475
    %v610 = vunpack.c.l.b16 %v476
    %v611 = vunpack.c.h.b16 %v476
    %v612 = vunpack.c.l.b16 %v477
    %v613 = vunpack.c.h.b16 %v477
    %v614 = vunpack.c.l.b16 %v478
    %v615 = vunpack.c.h.b16 %v478
    %v616 = vunpack.c.l.b16 %v479
    %v617 = vunpack.c.h.b16 %v479
    %v618 = vunpack.c.l.b16 %v480
    %v619 = vunpack.c.h.b16 %v480
    %v620 = vunpack.c.l.b16 %v481
    %v621 = vunpack.c.h.b16 %v481
    %v622 = vunpack.c.l.b16 %v482
    %v623 = vunpack.c.h.b16 %v482
    %v624 = vunpack.c.l.b16 %v483
    %v625 = vunpack.c.h.b16 %v483
    %v626 = vunpack.c.l.b16 %v484
    %v627 = vunpack.c.h.b16 %v484
    %v628 = vunpack.c.l.b16 %v485
    %v629 = vunpack.c.h.b16 %v485
    %v630 = vunpack.c.l.b16 %v486
    %v631 = vunpack.c.h.b16 %v486
    %v632 = vunpack.c.l.b16 %v487
    %v633 = vunpack.c.h.b16 %v487
    %v634 = vunpack.c.l.b16 %v488
    %v635 = vunpack.c.h.b16 %v488
    %v636 = vunpack.c.l.b16 %v489
    %v637 = vunpack.c.h.b16 %v489
    %v638 = vunpack.c.l.b16 %v490
    %v639 = vunpack.c.h.b16 %v490
    %v640 = vunpack.c.l.b16 %v491
    %v641 = vunpack.c.h.b16 %v491
    %v642 = vunpack.c.l.b16 %v492
    %v643 = vunpack.c.h.b16 %v492
    %v644 = vunpack.c.l.b16 %v493
    %v645 = vunpack.c.h.b16 %v493
    %v646 = vunpack.c.l.b16 %v494
    %v647 = vunpack.c.h.b16 %v494
    %v648 = vunpack.c.l.b16 %v495
    %v649 = vunpack.c.h.b16 %v495
    %v650 = vunpack.c.l.b16 %v496
    %v651 = vunpack.c.h.b16 %v496
    %v652 = vunpack.c.l.b16 %v497
    %v653 = vunpack.c.h.b16 %v497
    %v654 = vunpack.c.l.b16 %v498
    %v655 = vunpack.c.h.b16 %v498
    %v656 = vunpack.c.l.b16 %v499
    %v657 = vunpack.c.h.b16 %v499
    %v658 = vunpack.c.l.b16 %v500
    %v659 = vunpack.c.h.b16 %v500
    %v660 = vunpack.c.l.b16 %v501
    %v661 = vunpack.c.h.b16 %v501
    %v662 = vunpack.c.l.b16 %v502
    %v663 = vunpack.c.h.b16 %v502
    %v664 = vunpack.c.l.b16 %v503
    %v665 = vunpack.c.h.b16 %v503
    %v666 = vunpack.c.l.b16 %v504
    %v667 = vunpack.c.h.b16 %v504
    %v668 = vunpack.c.l.b16 %v505
    %v669 = vunpack.c.h.b16 %v505
    %v670 = vunpack.c.l.b16 %v506
    %v671 = vunpack.c.h.b16 %v506
    %v672 = vunpack.c.l.b16 %v507
    %v673 = vunpack.c.h.b16 %v507
    %v674 = vunpack.c.l.b16 %v508
    %v675 = vunpack.c.h.b16 %v508
    %v676 = vunpack.c.l.b16 %v509
    %v677 = vunpack.c.h.b16 %v509
    %v678 = vunpack.c.l.b16 %v510
    %v679 = vunpack.c.h.b16 %v510
    %v680 = vunpack.c.l.b16 %v511
    %v681 = vunpack.c.h.b16 %v511
    %v682 = vunpack.c.l.b16 %v512
    %v683 = vunpack.c.h.b16 %v512
    %v684 = vunpack.c.l.b16 %v513
    %v685 = vunpack.c.h.b16 %v513
    %v686 = vunpack.c.l.b16 %v514
    %v687 = vunpack.c.h.b16 %v514
    %v688 = vunpack.c.l.b16 %v515
    %v689 = vunpack.c.h.b16 %v515
    %v690 = vunpack.c.l.b16 %v516
    %v691 = vunpack.c.h.b16 %v516
    %v692 = vunpack.c.l.b16 %v517
    %v693 = vunpack.c.h.b16 %v517
    %v694 = vunpack.c.l.b16 %v518
    %v695 = vunpack.c.h.b16 %v518
    %v696 = vunpack.c.l.b16 %v519
    %v697 = vunpack.c.h.b16 %v519
    %v698 = vunpack.c.l.b16 %v520
    %v699 = vunpack.c.h.b16 %v520
    %v700 = vunpack.c.l.b16 %v521
    %v701 = vunpack.c.h.b16 %v521
    %v702 = vunpack.c.l.b16 %v522
    %v703 = vunpack.c.h.b16 %v522
    %v704 = vunpack.c.l.b16 %v523
    %v705 = vunpack.c.h.b16 %v523
    %v706 = vunpack.c.l.b16 %v524
    %v707 = vunpack.c.h.b16 %v524
    %v708 = vunpack.c.l.b16 %v525
    %v709 = vunpack.c.h.b16 %v525
    %v710 = vunpack.c.l.b16 %v526
    %v711 = vunpack.c.h.b16 %v526
    %v712 = vunpack.c.l.b16 %v527
    %v713 = vunpack.c.h.b16 %v527
    %v714 = vunpack.c.l.b16 %v528
    %v715 = vunpack.c.h.b16 %v528
    %v716 = vunpack.c.l.b16 %v529
    %v717 = vunpack.c.h.b16 %v529
    %v718 = vunpack.c.l.b16 %v530
    %v719 = vunpack.c.h.b16 %v530
    %v720 = vunpack.c.l.b16 %v531
    %v721 = vunpack.c.h.b16 %v531
    %v722 = vunpack.c.l.b16 %v532
    %v723 = vunpack.c.h.b16 %v532
    %v724 = vunpack.c.l.b16 %v533
    %v725 = vunpack.c.h.b16 %v533
    %v726 = vpack.c.b16 %v602, %v598
    %v727 = vpack.c.b16 %v603, %v599
    %v728 = vpack.c.b16 %v604, %v600
    %v729 = vpack.c.b16 %v605, %v601
    %v730 = vpack.c.b16 %v610, %v606
    %v731 = vpack.c.b16 %v611, %v607
    %v732 = vpack.c.b16 %v612, %v608
    %v733 = vpack.c.b16 %v613, %v609
    %v734 = vpack.c.b16 %v618, %v614
    %v735 = vpack.c.b16 %v619, %v615
    %v736 = vpack.c.b16 %v620, %v616
    %v737 = vpack.c.b16 %v621, %v617
    %v738 = vpack.c.b16 %v626, %v622
    %v739 = vpack.c.b16 %v627, %v623
    %v740 = vpack.c.b16 %v628, %v624
    %v741 = vpack.c.b16 %v629, %v625
    %v742 = vpack.c.b16 %v634, %v630
    %v743 = vpack.c.b16 %v635, %v631
    %v744 = vpack.c.b16 %v636, %v632
    %v745 = vpack.c.b16 %v637, %v633
    %v746 = vpack.c.b16 %v642, %v638
    %v747 = vpack.c.b16 %v643, %v639
    %v748 = vpack.c.b16 %v644, %v640
    %v749 = vpack.c.b16 %v645, %v641
    %v750 = vpack.c.b16 %v650, %v646
    %v751 = vpack.c.b16 %v651, %v647
    %v752 = vpack.c.b16 %v652, %v648
    %v753 = vpack.c.b16 %v653, %v649
    %v754 = vpack.c.b16 %v658, %v654
    %v755 = vpack.c.b16 %v659, %v655
    %v756 = vpack.c.b16 %v660, %v656
    %v757 = vpack.c.b16 %v661, %v657
    %v758 = vpack.c.b16 %v666, %v662
    %v759 = vpack.c.b16 %v667, %v663
    %v760 = vpack.c.b16 %v668, %v664
    %v761 = vpack.c.b16 %v669, %v665
    %v762 = vpack.c.b16 %v674, %v670
    %v763 = vpack.c.b16 %v675, %v671
    %v764 = vpack.c.b16 %v676, %v672
    %v765 = vpack.c.b16 %v677, %v673
    %v766 = vpack.c.b16 %v682, %v678
    %v767 = vpack.c.b16 %v683, %v679
    %v768 = vpack.c.b16 %v684, %v680
    %v769 = vpack.c.b16 %v685, %v681
    %v770 = vpack.c.b16 %v690, %v686
    %v771 = vpack.c.b16 %v691, %v687
    %v772 = vpack.c.b16 %v692, %v688
    %v773 = vpack.c.b16 %v693, %v689
    %v774 = vpack.c.b16 %v698, %v694
    %v775 = vpack.c.b16 %v699, %v695
    %v776 = vpack.c.b16 %v700, %v696
    %v777 = vpack.c.b16 %v701, %v697
    %v778 = vpack.c.b16 %v706, %v702
    %v779 = vpack.c.b16 %v707, %v703
    %v780 = vpack.c.b16 %v708, %v704
    %v781 = vpack.c.b16 %v709, %v705
    %v782 = vpack.c.b16 %v714, %v710
    %v783 = vpack.c.b16 %v715, %v711
    %v784 = vpack.c.b16 %v716, %v712
    %v785 = vpack.c.b16 %v717, %v713
    %v786 = vpack.c.b16 %v722, %v718
    %v787 = vpack.c.b16 %v723, %v719
    %v788 = vpack.c.b16 %v724, %v720
    %v789 = vpack.c.b16 %v725, %v721
    %854 = vmatprep.subr.bf16.mxu0 %v727
    %855 = vmatpush1.bf16.msra.mxu0 %v726
    %856 = vmatprep.subr.bf16.mxu0 %v731
    %857 = vmatpush1.bf16.msra.mxu0 %v730
    %858 = vmatprep.subr.bf16.mxu0 %v735
    %859 = vmatpush1.bf16.msra.mxu0 %v734
    %860 = vmatprep.subr.bf16.mxu0 %v739
    %861 = vmatpush1.bf16.msra.mxu0 %v738
    %862 = vmatprep.subr.bf16.mxu0 %v743
    %863 = vmatpush1.bf16.msra.mxu0 %v742
    %864 = vmatprep.subr.bf16.mxu0 %v747
    %865 = vmatpush1.bf16.msra.mxu0 %v746
    %866 = vmatprep.subr.bf16.mxu0 %v751
    %867 = vmatpush1.bf16.msra.mxu0 %v750
    %868 = vmatprep.subr.bf16.mxu0 %v755
    %869 = vmatpush1.bf16.msra.mxu0 %v754
    %870 = vmatprep.subr.bf16.mxu0 %v759
    %871 = vmatpush1.bf16.msra.mxu0 %v758
    %872 = vmatprep.subr.bf16.mxu0 %v763
    %873 = vmatpush1.bf16.msra.mxu0 %v762
    %874 = vmatprep.subr.bf16.mxu0 %v767
    %875 = vmatpush1.bf16.msra.mxu0 %v766
    %876 = vmatprep.subr.bf16.mxu0 %v771
    %877 = vmatpush1.bf16.msra.mxu0 %v770
    %878 = vmatprep.subr.bf16.mxu0 %v775
    %879 = vmatpush1.bf16.msra.mxu0 %v774
    %880 = vmatprep.subr.bf16.mxu0 %v779
    %881 = vmatpush1.bf16.msra.mxu0 %v778
    %882 = vmatprep.subr.bf16.mxu0 %v783
    %883 = vmatpush1.bf16.msra.mxu0 %v782
    %884 = vmatprep.subr.bf16.mxu0 %v787
    %885 = vmatpush1.bf16.msra.mxu0 %v786
    %886 = vmatprep.mubr.bf16.mxu0 %v469
    %887 = vmatmul.mubr.bf16.gmra.mrb[0].mxu0 %v468
    %v888 = vpop.f32.mrb[0].mxu0
    %v889 = vadd.f32 0.0, %v888
    %v890 = vpop.f32.mrb[0].mxu0
    %v891 = vadd.f32 0.0, %v890
    %v892 = vpop.f32.mrb[0].mxu0
    %v893 = vpop.f32.mrb[0].mxu0
    %894 = vdwg.mxu0
    %895 = vmatprep.subr.bf16.mxu0 %v729
    %896 = vmatpush1.bf16.msra.mxu0 %v728
    %897 = vmatprep.subr.bf16.mxu0 %v733
    %898 = vmatpush1.bf16.msra.mxu0 %v732
    %899 = vmatprep.subr.bf16.mxu0 %v737
    %900 = vmatpush1.bf16.msra.mxu0 %v736
    %901 = vmatprep.subr.bf16.mxu0 %v741
    %902 = vmatpush1.bf16.msra.mxu0 %v740
    %903 = vmatprep.subr.bf16.mxu0 %v745
    %904 = vmatpush1.bf16.msra.mxu0 %v744
    %905 = vmatprep.subr.bf16.mxu0 %v749
    %906 = vmatpush1.bf16.msra.mxu0 %v748
    %907 = vmatprep.subr.bf16.mxu0 %v753
    %908 = vmatpush1.bf16.msra.mxu0 %v752
    %909 = vmatprep.subr.bf16.mxu0 %v757
    %910 = vmatpush1.bf16.msra.mxu0 %v756
    %911 = vmatprep.subr.bf16.mxu0 %v761
    %912 = vmatpush1.bf16.msra.mxu0 %v760
    %913 = vmatprep.subr.bf16.mxu0 %v765
    %914 = vmatpush1.bf16.msra.mxu0 %v764
    %915 = vmatprep.subr.bf16.mxu0 %v769
    %916 = vmatpush1.bf16.msra.mxu0 %v768
    %917 = vmatprep.subr.bf16.mxu0 %v773
    %918 = vmatpush1.bf16.msra.mxu0 %v772
    %919 = vmatprep.subr.bf16.mxu0 %v777
    %920 = vmatpush1.bf16.msra.mxu0 %v776
    %921 = vmatprep.subr.bf16.mxu0 %v781
    %922 = vmatpush1.bf16.msra.mxu0 %v780
    %923 = vmatprep.subr.bf16.mxu0 %v785
    %924 = vmatpush1.bf16.msra.mxu0 %v784
    %925 = vmatprep.subr.bf16.mxu0 %v789
    %926 = vmatpush1.bf16.msra.mxu0 %v788
    %927 = vmatprep.mubr.bf16.mxu0 %v469
    %928 = vmatmul.mubr.bf16.gmra.mrb[0].mxu0 %v468
    %v929 = vpop.f32.mrb[0].mxu0
    %v930 = vadd.f32 0.0, %v929
    %v931 = vpop.f32.mrb[0].mxu0
    %v932 = vadd.f32 0.0, %v931
    %v933 = vpop.f32.mrb[0].mxu0
    %v934 = vpop.f32.mrb[0].mxu0
    %935 = vdwg.mxu0
    %v936 = vld [vmem:[%s8] sm:$0xf]
    %v937 = vld [vmem:[#allocation9] sm:$0xf]
    %v938 = vrot.slane %v889, 4
    %v939 = vadd.f32 %v889, %v938
    %v940 = vrot.slane %v939, 2
    %v941 = vadd.f32 %v939, %v940
    %v942 = vrot.slane %v941, 1
    %v943 = vadd.f32 %v941, %v942
    %v944 = vrot.slane %v891, 4
    %v945 = vadd.f32 %v891, %v944
    %v946 = vrot.slane %v945, 2
    %v947 = vadd.f32 %v945, %v946
    %v948 = vrot.slane %v947, 1
    %v949 = vadd.f32 %v947, %v948
    %v950 = vrot.slane %v930, 4
    %v951 = vadd.f32 %v930, %v950
    %v952 = vrot.slane %v951, 2
    %v953 = vadd.f32 %v951, %v952
    %v954 = vrot.slane %v953, 1
    %v955 = vadd.f32 %v953, %v954
    %v956 = vrot.slane %v932, 4
    %v957 = vadd.f32 %v932, %v956
    %v958 = vrot.slane %v957, 2
    %v959 = vadd.f32 %v957, %v958
    %v960 = vrot.slane %v959, 1
    %v961 = vadd.f32 %v959, %v960
    %v962 = vmul.f32 %v943, %v413
    %v963 = vmul.f32 %v949, %v413
    %v964 = vmul.f32 %v955, %v413
    %v965 = vmul.f32 %v961, %v413
    %v966 = vsub.f32 %v889, %v962
    %v967 = vsub.f32 %v891, %v963
    %v968 = vsub.f32 %v930, %v964
    %v969 = vsub.f32 %v932, %v965
    %v970 = vmul.f32 %v966, %v966
    %v971 = vmul.f32 %v967, %v967
    %v972 = vmul.f32 %v968, %v968
    %v973 = vmul.f32 %v969, %v969
    %v974 = vrot.slane %v970, 4
    %v975 = vadd.f32 %v970, %v974
    %v976 = vrot.slane %v975, 2
    %v977 = vadd.f32 %v975, %v976
    %v978 = vrot.slane %v977, 1
    %v979 = vadd.f32 %v977, %v978
    %v980 = vrot.slane %v971, 4
    %v981 = vadd.f32 %v971, %v980
    %v982 = vrot.slane %v981, 2
    %v983 = vadd.f32 %v981, %v982
    %v984 = vrot.slane %v983, 1
    %v985 = vadd.f32 %v983, %v984
    %v986 = vrot.slane %v972, 4
    %v987 = vadd.f32 %v972, %v986
    %v988 = vrot.slane %v987, 2
    %v989 = vadd.f32 %v987, %v988
    %v990 = vrot.slane %v989, 1
    %v991 = vadd.f32 %v989, %v990
    %v992 = vrot.slane %v973, 4
    %v993 = vadd.f32 %v973, %v992
    %v994 = vrot.slane %v993, 2
    %v995 = vadd.f32 %v993, %v994
    %v996 = vrot.slane %v995, 1
    %v997 = vadd.f32 %v995, %v996
    %v998 = vmul.f32 %v979, %v413
    %v999 = vmul.f32 %v985, %v413
    %v1000 = vmul.f32 %v991, %v413
    %v1001 = vmul.f32 %v997, %v413
    %v1002 = vadd.f32 %v998, 1e-05
    %v1003 = vadd.f32 %v999, 1e-05
    %v1004 = vadd.f32 %v1000, 1e-05
    %v1005 = vadd.f32 %v1001, 1e-05
    %v1006 = vrsqrt.pop %v1002
    %v1007 = vrsqrt.pop %v1003
    %v1008 = vrsqrt.pop %v1004
    %v1009 = vrsqrt.pop %v1005
    %v1010 = vmul.f32 %v966, %v1006
    %v1011 = vmul.f32 %v967, %v1007
    %v1012 = vmul.f32 %v968, %v1008
    %v1013 = vmul.f32 %v969, %v1009
    %v1015 = vlaneseq
    %v1016 = vshrl.u32 %v1015, 7
    %v1017 = vsub.s32 0, %v1016
    %v1018 = vrot.slane %v936, %v1017
    %v1019 = vlaneseq
    %v1020 = vshrl.u32 %v1019, 7
    %v1021 = vsub.s32 1, %v1020
    %v1022 = vrot.slane %v936, %v1021
    %v1023 = vlaneseq
    %v1024 = vshrl.u32 %v1023, 7
    %v1025 = vsub.s32 2, %v1024
    %v1026 = vrot.slane %v936, %v1025
    %v1027 = vlaneseq
    %v1028 = vshrl.u32 %v1027, 7
    %v1029 = vsub.s32 3, %v1028
    %v1030 = vrot.slane %v936, %v1029
    %v1035 = vmul.f32 %v1010, %v1018
    %v1036 = vmul.f32 %v1011, %v1022
    %v1037 = vmul.f32 %v1012, %v1026
    %v1038 = vmul.f32 %v1013, %v1030
    %v1040 = vlaneseq
    %v1041 = vshrl.u32 %v1040, 7
    %v1042 = vsub.s32 0, %v1041
    %v1043 = vrot.slane %v937, %v1042
    %v1044 = vlaneseq
    %v1045 = vshrl.u32 %v1044, 7
    %v1046 = vsub.s32 1, %v1045
    %v1047 = vrot.slane %v937, %v1046
    %v1048 = vlaneseq
    %v1049 = vshrl.u32 %v1048, 7
    %v1050 = vsub.s32 2, %v1049
    %v1051 = vrot.slane %v937, %v1050
    %v1052 = vlaneseq
    %v1053 = vshrl.u32 %v1052, 7
    %v1054 = vsub.s32 3, %v1053
    %v1055 = vrot.slane %v937, %v1054
    %v1060 = vadd.f32 %v1035, %v1043
    %v1061 = vadd.f32 %v1036, %v1047
    %v1062 = vadd.f32 %v1037, %v1051
    %v1063 = vadd.f32 %v1038, %v1055
    %v1064 = vmax.f32 %v1060, 0.0
    %v1065 = vmax.f32 %v1061, 0.0
    %v1066 = vmax.f32 %v1062, 0.0
    %v1067 = vmax.f32 %v1063, 0.0
    %v1068 = vpack.c.bf16 %v1064, %v1064
    %v1069 = vpack.c.bf16 %v1065, %v1065
    %v1070 = vpack.c.bf16 %v1066, %v1066
    %v1071 = vpack.c.bf16 %v1067, %v1067
    %v1072 = vld [vmem:[#allocation10] sm:$0xff]
    %v1073 = vld [vmem:[#allocation10 + $0x8] sm:$0xff]
    %v1074 = vld [vmem:[#allocation10 + $0x10] sm:$0xff]
    %v1075 = vld [vmem:[#allocation10 + $0x18] sm:$0xff]
    %v1076 = vld [vmem:[#allocation10 + $0x20] sm:$0xff]
    %v1077 = vld [vmem:[#allocation10 + $0x28] sm:$0xff]
    %v1078 = vld [vmem:[#allocation10 + $0x30] sm:$0xff]
    %v1079 = vld [vmem:[#allocation10 + $0x38] sm:$0xff]
    %v1080 = vld [vmem:[#allocation10 + $0x40] sm:$0xff]
    %v1081 = vld [vmem:[#allocation10 + $0x48] sm:$0xff]
    %v1082 = vld [vmem:[#allocation10 + $0x50] sm:$0xff]
    %v1083 = vld [vmem:[#allocation10 + $0x58] sm:$0xff]
    %v1084 = vld [vmem:[#allocation10 + $0x60] sm:$0xff]
    %v1085 = vld [vmem:[#allocation10 + $0x68] sm:$0xff]
    %v1086 = vld [vmem:[#allocation10 + $0x70] sm:$0xff]
    %v1087 = vld [vmem:[#allocation10 + $0x78] sm:$0xff]
    %v1088 = vld [vmem:[#allocation10 + $0x80] sm:$0xff]
    %v1089 = vld [vmem:[#allocation10 + $0x88] sm:$0xff]
    %v1090 = vld [vmem:[#allocation10 + $0x90] sm:$0xff]
    %v1091 = vld [vmem:[#allocation10 + $0x98] sm:$0xff]
    %v1092 = vld [vmem:[#allocation10 + $0xa0] sm:$0xff]
    %v1093 = vld [vmem:[#allocation10 + $0xa8] sm:$0xff]
    %v1094 = vld [vmem:[#allocation10 + $0xb0] sm:$0xff]
    %v1095 = vld [vmem:[#allocation10 + $0xb8] sm:$0xff]
    %v1096 = vld [vmem:[#allocation10 + $0xc0] sm:$0xff]
    %v1097 = vld [vmem:[#allocation10 + $0xc8] sm:$0xff]
    %v1098 = vld [vmem:[#allocation10 + $0xd0] sm:$0xff]
    %v1099 = vld [vmem:[#allocation10 + $0xd8] sm:$0xff]
    %v1100 = vld [vmem:[#allocation10 + $0xe0] sm:$0xff]
    %v1101 = vld [vmem:[#allocation10 + $0xe8] sm:$0xff]
    %v1102 = vld [vmem:[#allocation10 + $0xf0] sm:$0xff]
    %v1103 = vld [vmem:[#allocation10 + $0xf8] sm:$0xff]
    %v1104 = vld [vmem:[#allocation10 + $0x100] sm:$0xff]
    %v1105 = vld [vmem:[#allocation10 + $0x108] sm:$0xff]
    %v1106 = vld [vmem:[#allocation10 + $0x110] sm:$0xff]
    %v1107 = vld [vmem:[#allocation10 + $0x118] sm:$0xff]
    %v1108 = vld [vmem:[#allocation10 + $0x120] sm:$0xff]
    %v1109 = vld [vmem:[#allocation10 + $0x128] sm:$0xff]
    %v1110 = vld [vmem:[#allocation10 + $0x130] sm:$0xff]
    %v1111 = vld [vmem:[#allocation10 + $0x138] sm:$0xff]
    %v1112 = vld [vmem:[#allocation10 + $0x140] sm:$0xff]
    %v1113 = vld [vmem:[#allocation10 + $0x148] sm:$0xff]
    %v1114 = vld [vmem:[#allocation10 + $0x150] sm:$0xff]
    %v1115 = vld [vmem:[#allocation10 + $0x158] sm:$0xff]
    %v1116 = vld [vmem:[#allocation10 + $0x160] sm:$0xff]
    %v1117 = vld [vmem:[#allocation10 + $0x168] sm:$0xff]
    %v1118 = vld [vmem:[#allocation10 + $0x170] sm:$0xff]
    %v1119 = vld [vmem:[#allocation10 + $0x178] sm:$0xff]
    %v1120 = vld [vmem:[#allocation10 + $0x180] sm:$0xff]
    %v1121 = vld [vmem:[#allocation10 + $0x188] sm:$0xff]
    %v1122 = vld [vmem:[#allocation10 + $0x190] sm:$0xff]
    %v1123 = vld [vmem:[#allocation10 + $0x198] sm:$0xff]
    %v1124 = vld [vmem:[#allocation10 + $0x1a0] sm:$0xff]
    %v1125 = vld [vmem:[#allocation10 + $0x1a8] sm:$0xff]
    %v1126 = vld [vmem:[#allocation10 + $0x1b0] sm:$0xff]
    %v1127 = vld [vmem:[#allocation10 + $0x1b8] sm:$0xff]
    %v1128 = vld [vmem:[#allocation10 + $0x1c0] sm:$0xff]
    %v1129 = vld [vmem:[#allocation10 + $0x1c8] sm:$0xff]
    %v1130 = vld [vmem:[#allocation10 + $0x1d0] sm:$0xff]
    %v1131 = vld [vmem:[#allocation10 + $0x1d8] sm:$0xff]
    %v1132 = vld [vmem:[#allocation10 + $0x1e0] sm:$0xff]
    %v1133 = vld [vmem:[#allocation10 + $0x1e8] sm:$0xff]
    %v1134 = vld [vmem:[#allocation10 + $0x1f0] sm:$0xff]
    %v1135 = vld [vmem:[#allocation10 + $0x1f8] sm:$0xff]
    %v1136 = vld [vmem:[#allocation10 + $0x200] sm:$0xff]
    %v1137 = vld [vmem:[#allocation10 + $0x208] sm:$0xff]
    %v1138 = vld [vmem:[#allocation10 + $0x210] sm:$0xff]
    %v1139 = vld [vmem:[#allocation10 + $0x218] sm:$0xff]
    %v1140 = vld [vmem:[#allocation10 + $0x220] sm:$0xff]
    %v1141 = vld [vmem:[#allocation10 + $0x228] sm:$0xff]
    %v1142 = vld [vmem:[#allocation10 + $0x230] sm:$0xff]
    %v1143 = vld [vmem:[#allocation10 + $0x238] sm:$0xff]
    %v1144 = vld [vmem:[#allocation10 + $0x240] sm:$0xff]
    %v1145 = vld [vmem:[#allocation10 + $0x248] sm:$0xff]
    %v1146 = vld [vmem:[#allocation10 + $0x250] sm:$0xff]
    %v1147 = vld [vmem:[#allocation10 + $0x258] sm:$0xff]
    %v1148 = vld [vmem:[#allocation10 + $0x260] sm:$0xff]
    %v1149 = vld [vmem:[#allocation10 + $0x268] sm:$0xff]
    %v1150 = vld [vmem:[#allocation10 + $0x270] sm:$0xff]
    %v1151 = vld [vmem:[#allocation10 + $0x278] sm:$0xff]
    %v1152 = vld [vmem:[#allocation10 + $0x280] sm:$0xff]
    %v1153 = vld [vmem:[#allocation10 + $0x288] sm:$0xff]
    %v1154 = vld [vmem:[#allocation10 + $0x290] sm:$0xff]
    %v1155 = vld [vmem:[#allocation10 + $0x298] sm:$0xff]
    %v1156 = vld [vmem:[#allocation10 + $0x2a0] sm:$0xff]
    %v1157 = vld [vmem:[#allocation10 + $0x2a8] sm:$0xff]
    %v1158 = vld [vmem:[#allocation10 + $0x2b0] sm:$0xff]
    %v1159 = vld [vmem:[#allocation10 + $0x2b8] sm:$0xff]
    %v1160 = vld [vmem:[#allocation10 + $0x2c0] sm:$0xff]
    %v1161 = vld [vmem:[#allocation10 + $0x2c8] sm:$0xff]
    %v1162 = vld [vmem:[#allocation10 + $0x2d0] sm:$0xff]
    %v1163 = vld [vmem:[#allocation10 + $0x2d8] sm:$0xff]
    %v1164 = vld [vmem:[#allocation10 + $0x2e0] sm:$0xff]
    %v1165 = vld [vmem:[#allocation10 + $0x2e8] sm:$0xff]
    %v1166 = vld [vmem:[#allocation10 + $0x2f0] sm:$0xff]
    %v1167 = vld [vmem:[#allocation10 + $0x2f8] sm:$0xff]
    %v1168 = vld [vmem:[#allocation10 + $0x300] sm:$0xff]
    %v1169 = vld [vmem:[#allocation10 + $0x308] sm:$0xff]
    %v1170 = vld [vmem:[#allocation10 + $0x310] sm:$0xff]
    %v1171 = vld [vmem:[#allocation10 + $0x318] sm:$0xff]
    %v1172 = vld [vmem:[#allocation10 + $0x320] sm:$0xff]
    %v1173 = vld [vmem:[#allocation10 + $0x328] sm:$0xff]
    %v1174 = vld [vmem:[#allocation10 + $0x330] sm:$0xff]
    %v1175 = vld [vmem:[#allocation10 + $0x338] sm:$0xff]
    %v1176 = vld [vmem:[#allocation10 + $0x340] sm:$0xff]
    %v1177 = vld [vmem:[#allocation10 + $0x348] sm:$0xff]
    %v1178 = vld [vmem:[#allocation10 + $0x350] sm:$0xff]
    %v1179 = vld [vmem:[#allocation10 + $0x358] sm:$0xff]
    %v1180 = vld [vmem:[#allocation10 + $0x360] sm:$0xff]
    %v1181 = vld [vmem:[#allocation10 + $0x368] sm:$0xff]
    %v1182 = vld [vmem:[#allocation10 + $0x370] sm:$0xff]
    %v1183 = vld [vmem:[#allocation10 + $0x378] sm:$0xff]
    %v1184 = vld [vmem:[#allocation10 + $0x380] sm:$0xff]
    %v1185 = vld [vmem:[#allocation10 + $0x388] sm:$0xff]
    %v1186 = vld [vmem:[#allocation10 + $0x390] sm:$0xff]
    %v1187 = vld [vmem:[#allocation10 + $0x398] sm:$0xff]
    %v1188 = vld [vmem:[#allocation10 + $0x3a0] sm:$0xff]
    %v1189 = vld [vmem:[#allocation10 + $0x3a8] sm:$0xff]
    %v1190 = vld [vmem:[#allocation10 + $0x3b0] sm:$0xff]
    %v1191 = vld [vmem:[#allocation10 + $0x3b8] sm:$0xff]
    %v1192 = vld [vmem:[#allocation10 + $0x3c0] sm:$0xff]
    %v1193 = vld [vmem:[#allocation10 + $0x3c8] sm:$0xff]
    %v1194 = vld [vmem:[#allocation10 + $0x3d0] sm:$0xff]
    %v1195 = vld [vmem:[#allocation10 + $0x3d8] sm:$0xff]
    %v1196 = vld [vmem:[#allocation10 + $0x3e0] sm:$0xff]
    %v1197 = vld [vmem:[#allocation10 + $0x3e8] sm:$0xff]
    %v1198 = vld [vmem:[#allocation10 + $0x3f0] sm:$0xff]
    %v1199 = vld [vmem:[#allocation10 + $0x3f8] sm:$0xff]
    %v1200 = vld [vmem:[#allocation10 + $0x400] sm:$0xff]
    %v1201 = vld [vmem:[#allocation10 + $0x408] sm:$0xff]
    %v1202 = vld [vmem:[#allocation10 + $0x410] sm:$0xff]
    %v1203 = vld [vmem:[#allocation10 + $0x418] sm:$0xff]
    %v1204 = vld [vmem:[#allocation10 + $0x420] sm:$0xff]
    %v1205 = vld [vmem:[#allocation10 + $0x428] sm:$0xff]
    %v1206 = vld [vmem:[#allocation10 + $0x430] sm:$0xff]
    %v1207 = vld [vmem:[#allocation10 + $0x438] sm:$0xff]
    %v1208 = vld [vmem:[#allocation10 + $0x440] sm:$0xff]
    %v1209 = vld [vmem:[#allocation10 + $0x448] sm:$0xff]
    %v1210 = vld [vmem:[#allocation10 + $0x450] sm:$0xff]
    %v1211 = vld [vmem:[#allocation10 + $0x458] sm:$0xff]
    %v1212 = vld [vmem:[#allocation10 + $0x460] sm:$0xff]
    %v1213 = vld [vmem:[#allocation10 + $0x468] sm:$0xff]
    %v1214 = vld [vmem:[#allocation10 + $0x470] sm:$0xff]
    %v1215 = vld [vmem:[#allocation10 + $0x478] sm:$0xff]
    %v1216 = vld [vmem:[#allocation10 + $0x480] sm:$0xff]
    %v1217 = vld [vmem:[#allocation10 + $0x488] sm:$0xff]
    %v1218 = vld [vmem:[#allocation10 + $0x490] sm:$0xff]
    %v1219 = vld [vmem:[#allocation10 + $0x498] sm:$0xff]
    %v1220 = vld [vmem:[#allocation10 + $0x4a0] sm:$0xff]
    %v1221 = vld [vmem:[#allocation10 + $0x4a8] sm:$0xff]
    %v1222 = vld [vmem:[#allocation10 + $0x4b0] sm:$0xff]
    %v1223 = vld [vmem:[#allocation10 + $0x4b8] sm:$0xff]
    %v1224 = vld [vmem:[#allocation10 + $0x4c0] sm:$0xff]
    %v1225 = vld [vmem:[#allocation10 + $0x4c8] sm:$0xff]
    %v1226 = vld [vmem:[#allocation10 + $0x4d0] sm:$0xff]
    %v1227 = vld [vmem:[#allocation10 + $0x4d8] sm:$0xff]
    %v1228 = vld [vmem:[#allocation10 + $0x4e0] sm:$0xff]
    %v1229 = vld [vmem:[#allocation10 + $0x4e8] sm:$0xff]
    %v1230 = vld [vmem:[#allocation10 + $0x4f0] sm:$0xff]
    %v1231 = vld [vmem:[#allocation10 + $0x4f8] sm:$0xff]
    %v1232 = vld [vmem:[#allocation10 + $0x500] sm:$0xff]
    %v1233 = vld [vmem:[#allocation10 + $0x508] sm:$0xff]
    %v1234 = vld [vmem:[#allocation10 + $0x510] sm:$0xff]
    %v1235 = vld [vmem:[#allocation10 + $0x518] sm:$0xff]
    %v1236 = vld [vmem:[#allocation10 + $0x520] sm:$0xff]
    %v1237 = vld [vmem:[#allocation10 + $0x528] sm:$0xff]
    %v1238 = vld [vmem:[#allocation10 + $0x530] sm:$0xff]
    %v1239 = vld [vmem:[#allocation10 + $0x538] sm:$0xff]
    %v1240 = vld [vmem:[#allocation10 + $0x540] sm:$0xff]
    %v1241 = vld [vmem:[#allocation10 + $0x548] sm:$0xff]
    %v1242 = vld [vmem:[#allocation10 + $0x550] sm:$0xff]
    %v1243 = vld [vmem:[#allocation10 + $0x558] sm:$0xff]
    %v1244 = vld [vmem:[#allocation10 + $0x560] sm:$0xff]
    %v1245 = vld [vmem:[#allocation10 + $0x568] sm:$0xff]
    %v1246 = vld [vmem:[#allocation10 + $0x570] sm:$0xff]
    %v1247 = vld [vmem:[#allocation10 + $0x578] sm:$0xff]
    %v1248 = vld [vmem:[#allocation10 + $0x580] sm:$0xff]
    %v1249 = vld [vmem:[#allocation10 + $0x588] sm:$0xff]
    %v1250 = vld [vmem:[#allocation10 + $0x590] sm:$0xff]
    %v1251 = vld [vmem:[#allocation10 + $0x598] sm:$0xff]
    %v1252 = vld [vmem:[#allocation10 + $0x5a0] sm:$0xff]
    %v1253 = vld [vmem:[#allocation10 + $0x5a8] sm:$0xff]
    %v1254 = vld [vmem:[#allocation10 + $0x5b0] sm:$0xff]
    %v1255 = vld [vmem:[#allocation10 + $0x5b8] sm:$0xff]
    %v1256 = vld [vmem:[#allocation10 + $0x5c0] sm:$0xff]
    %v1257 = vld [vmem:[#allocation10 + $0x5c8] sm:$0xff]
    %v1258 = vld [vmem:[#allocation10 + $0x5d0] sm:$0xff]
    %v1259 = vld [vmem:[#allocation10 + $0x5d8] sm:$0xff]
    %v1260 = vld [vmem:[#allocation10 + $0x5e0] sm:$0xff]
    %v1261 = vld [vmem:[#allocation10 + $0x5e8] sm:$0xff]
    %v1262 = vld [vmem:[#allocation10 + $0x5f0] sm:$0xff]
    %v1263 = vld [vmem:[#allocation10 + $0x5f8] sm:$0xff]
    %v1264 = vld [vmem:[#allocation10 + $0x600] sm:$0xff]
    %v1265 = vld [vmem:[#allocation10 + $0x608] sm:$0xff]
    %v1266 = vld [vmem:[#allocation10 + $0x610] sm:$0xff]
    %v1267 = vld [vmem:[#allocation10 + $0x618] sm:$0xff]
    %v1268 = vld [vmem:[#allocation10 + $0x620] sm:$0xff]
    %v1269 = vld [vmem:[#allocation10 + $0x628] sm:$0xff]
    %v1270 = vld [vmem:[#allocation10 + $0x630] sm:$0xff]
    %v1271 = vld [vmem:[#allocation10 + $0x638] sm:$0xff]
    %v1272 = vld [vmem:[#allocation10 + $0x640] sm:$0xff]
    %v1273 = vld [vmem:[#allocation10 + $0x648] sm:$0xff]
    %v1274 = vld [vmem:[#allocation10 + $0x650] sm:$0xff]
    %v1275 = vld [vmem:[#allocation10 + $0x658] sm:$0xff]
    %v1276 = vld [vmem:[#allocation10 + $0x660] sm:$0xff]
    %v1277 = vld [vmem:[#allocation10 + $0x668] sm:$0xff]
    %v1278 = vld [vmem:[#allocation10 + $0x670] sm:$0xff]
    %v1279 = vld [vmem:[#allocation10 + $0x678] sm:$0xff]
    %v1280 = vld [vmem:[#allocation10 + $0x680] sm:$0xff]
    %v1281 = vld [vmem:[#allocation10 + $0x688] sm:$0xff]
    %v1282 = vld [vmem:[#allocation10 + $0x690] sm:$0xff]
    %v1283 = vld [vmem:[#allocation10 + $0x698] sm:$0xff]
    %v1284 = vld [vmem:[#allocation10 + $0x6a0] sm:$0xff]
    %v1285 = vld [vmem:[#allocation10 + $0x6a8] sm:$0xff]
    %v1286 = vld [vmem:[#allocation10 + $0x6b0] sm:$0xff]
    %v1287 = vld [vmem:[#allocation10 + $0x6b8] sm:$0xff]
    %v1288 = vld [vmem:[#allocation10 + $0x6c0] sm:$0xff]
    %v1289 = vld [vmem:[#allocation10 + $0x6c8] sm:$0xff]
    %v1290 = vld [vmem:[#allocation10 + $0x6d0] sm:$0xff]
    %v1291 = vld [vmem:[#allocation10 + $0x6d8] sm:$0xff]
    %v1292 = vld [vmem:[#allocation10 + $0x6e0] sm:$0xff]
    %v1293 = vld [vmem:[#allocation10 + $0x6e8] sm:$0xff]
    %v1294 = vld [vmem:[#allocation10 + $0x6f0] sm:$0xff]
    %v1295 = vld [vmem:[#allocation10 + $0x6f8] sm:$0xff]
    %v1296 = vld [vmem:[#allocation10 + $0x700] sm:$0xff]
    %v1297 = vld [vmem:[#allocation10 + $0x708] sm:$0xff]
    %v1298 = vld [vmem:[#allocation10 + $0x710] sm:$0xff]
    %v1299 = vld [vmem:[#allocation10 + $0x718] sm:$0xff]
    %v1300 = vld [vmem:[#allocation10 + $0x720] sm:$0xff]
    %v1301 = vld [vmem:[#allocation10 + $0x728] sm:$0xff]
    %v1302 = vld [vmem:[#allocation10 + $0x730] sm:$0xff]
    %v1303 = vld [vmem:[#allocation10 + $0x738] sm:$0xff]
    %v1304 = vld [vmem:[#allocation10 + $0x740] sm:$0xff]
    %v1305 = vld [vmem:[#allocation10 + $0x748] sm:$0xff]
    %v1306 = vld [vmem:[#allocation10 + $0x750] sm:$0xff]
    %v1307 = vld [vmem:[#allocation10 + $0x758] sm:$0xff]
    %v1308 = vld [vmem:[#allocation10 + $0x760] sm:$0xff]
    %v1309 = vld [vmem:[#allocation10 + $0x768] sm:$0xff]
    %v1310 = vld [vmem:[#allocation10 + $0x770] sm:$0xff]
    %v1311 = vld [vmem:[#allocation10 + $0x778] sm:$0xff]
    %v1312 = vld [vmem:[#allocation10 + $0x780] sm:$0xff]
    %v1313 = vld [vmem:[#allocation10 + $0x788] sm:$0xff]
    %v1314 = vld [vmem:[#allocation10 + $0x790] sm:$0xff]
    %v1315 = vld [vmem:[#allocation10 + $0x798] sm:$0xff]
    %v1316 = vld [vmem:[#allocation10 + $0x7a0] sm:$0xff]
    %v1317 = vld [vmem:[#allocation10 + $0x7a8] sm:$0xff]
    %v1318 = vld [vmem:[#allocation10 + $0x7b0] sm:$0xff]
    %v1319 = vld [vmem:[#allocation10 + $0x7b8] sm:$0xff]
    %v1320 = vld [vmem:[#allocation10 + $0x7c0] sm:$0xff]
    %v1321 = vld [vmem:[#allocation10 + $0x7c8] sm:$0xff]
    %v1322 = vld [vmem:[#allocation10 + $0x7d0] sm:$0xff]
    %v1323 = vld [vmem:[#allocation10 + $0x7d8] sm:$0xff]
    %v1324 = vld [vmem:[#allocation10 + $0x7e0] sm:$0xff]
    %v1325 = vld [vmem:[#allocation10 + $0x7e8] sm:$0xff]
    %v1326 = vld [vmem:[#allocation10 + $0x7f0] sm:$0xff]
    %v1327 = vld [vmem:[#allocation10 + $0x7f8] sm:$0xff]
    %v1584 = vunpack.c.l.b16 %v1072
    %v1585 = vunpack.c.h.b16 %v1072
    %v1586 = vunpack.c.l.b16 %v1073
    %v1587 = vunpack.c.h.b16 %v1073
    %v1588 = vunpack.c.l.b16 %v1074
    %v1589 = vunpack.c.h.b16 %v1074
    %v1590 = vunpack.c.l.b16 %v1075
    %v1591 = vunpack.c.h.b16 %v1075
    %v1592 = vunpack.c.l.b16 %v1076
    %v1593 = vunpack.c.h.b16 %v1076
    %v1594 = vunpack.c.l.b16 %v1077
    %v1595 = vunpack.c.h.b16 %v1077
    %v1596 = vunpack.c.l.b16 %v1078
    %v1597 = vunpack.c.h.b16 %v1078
    %v1598 = vunpack.c.l.b16 %v1079
    %v1599 = vunpack.c.h.b16 %v1079
    %v1600 = vunpack.c.l.b16 %v1080
    %v1601 = vunpack.c.h.b16 %v1080
    %v1602 = vunpack.c.l.b16 %v1081
    %v1603 = vunpack.c.h.b16 %v1081
    %v1604 = vunpack.c.l.b16 %v1082
    %v1605 = vunpack.c.h.b16 %v1082
    %v1606 = vunpack.c.l.b16 %v1083
    %v1607 = vunpack.c.h.b16 %v1083
    %v1608 = vunpack.c.l.b16 %v1084
    %v1609 = vunpack.c.h.b16 %v1084
    %v1610 = vunpack.c.l.b16 %v1085
    %v1611 = vunpack.c.h.b16 %v1085
    %v1612 = vunpack.c.l.b16 %v1086
    %v1613 = vunpack.c.h.b16 %v1086
    %v1614 = vunpack.c.l.b16 %v1087
    %v1615 = vunpack.c.h.b16 %v1087
    %v1616 = vunpack.c.l.b16 %v1088
    %v1617 = vunpack.c.h.b16 %v1088
    %v1618 = vunpack.c.l.b16 %v1089
    %v1619 = vunpack.c.h.b16 %v1089
    %v1620 = vunpack.c.l.b16 %v1090
    %v1621 = vunpack.c.h.b16 %v1090
    %v1622 = vunpack.c.l.b16 %v1091
    %v1623 = vunpack.c.h.b16 %v1091
    %v1624 = vunpack.c.l.b16 %v1092
    %v1625 = vunpack.c.h.b16 %v1092
    %v1626 = vunpack.c.l.b16 %v1093
    %v1627 = vunpack.c.h.b16 %v1093
    %v1628 = vunpack.c.l.b16 %v1094
    %v1629 = vunpack.c.h.b16 %v1094
    %v1630 = vunpack.c.l.b16 %v1095
    %v1631 = vunpack.c.h.b16 %v1095
    %v1632 = vunpack.c.l.b16 %v1096
    %v1633 = vunpack.c.h.b16 %v1096
    %v1634 = vunpack.c.l.b16 %v1097
    %v1635 = vunpack.c.h.b16 %v1097
    %v1636 = vunpack.c.l.b16 %v1098
    %v1637 = vunpack.c.h.b16 %v1098
    %v1638 = vunpack.c.l.b16 %v1099
    %v1639 = vunpack.c.h.b16 %v1099
    %v1640 = vunpack.c.l.b16 %v1100
    %v1641 = vunpack.c.h.b16 %v1100
    %v1642 = vunpack.c.l.b16 %v1101
    %v1643 = vunpack.c.h.b16 %v1101
    %v1644 = vunpack.c.l.b16 %v1102
    %v1645 = vunpack.c.h.b16 %v1102
    %v1646 = vunpack.c.l.b16 %v1103
    %v1647 = vunpack.c.h.b16 %v1103
    %v1648 = vunpack.c.l.b16 %v1104
    %v1649 = vunpack.c.h.b16 %v1104
    %v1650 = vunpack.c.l.b16 %v1105
    %v1651 = vunpack.c.h.b16 %v1105
    %v1652 = vunpack.c.l.b16 %v1106
    %v1653 = vunpack.c.h.b16 %v1106
    %v1654 = vunpack.c.l.b16 %v1107
    %v1655 = vunpack.c.h.b16 %v1107
    %v1656 = vunpack.c.l.b16 %v1108
    %v1657 = vunpack.c.h.b16 %v1108
    %v1658 = vunpack.c.l.b16 %v1109
    %v1659 = vunpack.c.h.b16 %v1109
    %v1660 = vunpack.c.l.b16 %v1110
    %v1661 = vunpack.c.h.b16 %v1110
    %v1662 = vunpack.c.l.b16 %v1111
    %v1663 = vunpack.c.h.b16 %v1111
    %v1664 = vunpack.c.l.b16 %v1112
    %v1665 = vunpack.c.h.b16 %v1112
    %v1666 = vunpack.c.l.b16 %v1113
    %v1667 = vunpack.c.h.b16 %v1113
    %v1668 = vunpack.c.l.b16 %v1114
    %v1669 = vunpack.c.h.b16 %v1114
    %v1670 = vunpack.c.l.b16 %v1115
    %v1671 = vunpack.c.h.b16 %v1115
    %v1672 = vunpack.c.l.b16 %v1116
    %v1673 = vunpack.c.h.b16 %v1116
    %v1674 = vunpack.c.l.b16 %v1117
    %v1675 = vunpack.c.h.b16 %v1117
    %v1676 = vunpack.c.l.b16 %v1118
    %v1677 = vunpack.c.h.b16 %v1118
    %v1678 = vunpack.c.l.b16 %v1119
    %v1679 = vunpack.c.h.b16 %v1119
    %v1680 = vunpack.c.l.b16 %v1120
    %v1681 = vunpack.c.h.b16 %v1120
    %v1682 = vunpack.c.l.b16 %v1121
    %v1683 = vunpack.c.h.b16 %v1121
    %v1684 = vunpack.c.l.b16 %v1122
    %v1685 = vunpack.c.h.b16 %v1122
    %v1686 = vunpack.c.l.b16 %v1123
    %v1687 = vunpack.c.h.b16 %v1123
    %v1688 = vunpack.c.l.b16 %v1124
    %v1689 = vunpack.c.h.b16 %v1124
    %v1690 = vunpack.c.l.b16 %v1125
    %v1691 = vunpack.c.h.b16 %v1125
    %v1692 = vunpack.c.l.b16 %v1126
    %v1693 = vunpack.c.h.b16 %v1126
    %v1694 = vunpack.c.l.b16 %v1127
    %v1695 = vunpack.c.h.b16 %v1127
    %v1696 = vunpack.c.l.b16 %v1128
    %v1697 = vunpack.c.h.b16 %v1128
    %v1698 = vunpack.c.l.b16 %v1129
    %v1699 = vunpack.c.h.b16 %v1129
    %v1700 = vunpack.c.l.b16 %v1130
    %v1701 = vunpack.c.h.b16 %v1130
    %v1702 = vunpack.c.l.b16 %v1131
    %v1703 = vunpack.c.h.b16 %v1131
    %v1704 = vunpack.c.l.b16 %v1132
    %v1705 = vunpack.c.h.b16 %v1132
    %v1706 = vunpack.c.l.b16 %v1133
    %v1707 = vunpack.c.h.b16 %v1133
    %v1708 = vunpack.c.l.b16 %v1134
    %v1709 = vunpack.c.h.b16 %v1134
    %v1710 = vunpack.c.l.b16 %v1135
    %v1711 = vunpack.c.h.b16 %v1135
    %v1712 = vunpack.c.l.b16 %v1136
    %v1713 = vunpack.c.h.b16 %v1136
    %v1714 = vunpack.c.l.b16 %v1137
    %v1715 = vunpack.c.h.b16 %v1137
    %v1716 = vunpack.c.l.b16 %v1138
    %v1717 = vunpack.c.h.b16 %v1138
    %v1718 = vunpack.c.l.b16 %v1139
    %v1719 = vunpack.c.h.b16 %v1139
    %v1720 = vunpack.c.l.b16 %v1140
    %v1721 = vunpack.c.h.b16 %v1140
    %v1722 = vunpack.c.l.b16 %v1141
    %v1723 = vunpack.c.h.b16 %v1141
    %v1724 = vunpack.c.l.b16 %v1142
    %v1725 = vunpack.c.h.b16 %v1142
    %v1726 = vunpack.c.l.b16 %v1143
    %v1727 = vunpack.c.h.b16 %v1143
    %v1728 = vunpack.c.l.b16 %v1144
    %v1729 = vunpack.c.h.b16 %v1144
    %v1730 = vunpack.c.l.b16 %v1145
    %v1731 = vunpack.c.h.b16 %v1145
    %v1732 = vunpack.c.l.b16 %v1146
    %v1733 = vunpack.c.h.b16 %v1146
    %v1734 = vunpack.c.l.b16 %v1147
    %v1735 = vunpack.c.h.b16 %v1147
    %v1736 = vunpack.c.l.b16 %v1148
    %v1737 = vunpack.c.h.b16 %v1148
    %v1738 = vunpack.c.l.b16 %v1149
    %v1739 = vunpack.c.h.b16 %v1149
    %v1740 = vunpack.c.l.b16 %v1150
    %v1741 = vunpack.c.h.b16 %v1150
    %v1742 = vunpack.c.l.b16 %v1151
    %v1743 = vunpack.c.h.b16 %v1151
    %v1744 = vunpack.c.l.b16 %v1152
    %v1745 = vunpack.c.h.b16 %v1152
    %v1746 = vunpack.c.l.b16 %v1153
    %v1747 = vunpack.c.h.b16 %v1153
    %v1748 = vunpack.c.l.b16 %v1154
    %v1749 = vunpack.c.h.b16 %v1154
    %v1750 = vunpack.c.l.b16 %v1155
    %v1751 = vunpack.c.h.b16 %v1155
    %v1752 = vunpack.c.l.b16 %v1156
    %v1753 = vunpack.c.h.b16 %v1156
    %v1754 = vunpack.c.l.b16 %v1157
    %v1755 = vunpack.c.h.b16 %v1157
    %v1756 = vunpack.c.l.b16 %v1158
    %v1757 = vunpack.c.h.b16 %v1158
    %v1758 = vunpack.c.l.b16 %v1159
    %v1759 = vunpack.c.h.b16 %v1159
    %v1760 = vunpack.c.l.b16 %v1160
    %v1761 = vunpack.c.h.b16 %v1160
    %v1762 = vunpack.c.l.b16 %v1161
    %v1763 = vunpack.c.h.b16 %v1161
    %v1764 = vunpack.c.l.b16 %v1162
    %v1765 = vunpack.c.h.b16 %v1162
    %v1766 = vunpack.c.l.b16 %v1163
    %v1767 = vunpack.c.h.b16 %v1163
    %v1768 = vunpack.c.l.b16 %v1164
    %v1769 = vunpack.c.h.b16 %v1164
    %v1770 = vunpack.c.l.b16 %v1165
    %v1771 = vunpack.c.h.b16 %v1165
    %v1772 = vunpack.c.l.b16 %v1166
    %v1773 = vunpack.c.h.b16 %v1166
    %v1774 = vunpack.c.l.b16 %v1167
    %v1775 = vunpack.c.h.b16 %v1167
    %v1776 = vunpack.c.l.b16 %v1168
    %v1777 = vunpack.c.h.b16 %v1168
    %v1778 = vunpack.c.l.b16 %v1169
    %v1779 = vunpack.c.h.b16 %v1169
    %v1780 = vunpack.c.l.b16 %v1170
    %v1781 = vunpack.c.h.b16 %v1170
    %v1782 = vunpack.c.l.b16 %v1171
    %v1783 = vunpack.c.h.b16 %v1171
    %v1784 = vunpack.c.l.b16 %v1172
    %v1785 = vunpack.c.h.b16 %v1172
    %v1786 = vunpack.c.l.b16 %v1173
    %v1787 = vunpack.c.h.b16 %v1173
    %v1788 = vunpack.c.l.b16 %v1174
    %v1789 = vunpack.c.h.b16 %v1174
    %v1790 = vunpack.c.l.b16 %v1175
    %v1791 = vunpack.c.h.b16 %v1175
    %v1792 = vunpack.c.l.b16 %v1176
    %v1793 = vunpack.c.h.b16 %v1176
    %v1794 = vunpack.c.l.b16 %v1177
    %v1795 = vunpack.c.h.b16 %v1177
    %v1796 = vunpack.c.l.b16 %v1178
    %v1797 = vunpack.c.h.b16 %v1178
    %v1798 = vunpack.c.l.b16 %v1179
    %v1799 = vunpack.c.h.b16 %v1179
    %v1800 = vunpack.c.l.b16 %v1180
    %v1801 = vunpack.c.h.b16 %v1180
    %v1802 = vunpack.c.l.b16 %v1181
    %v1803 = vunpack.c.h.b16 %v1181
    %v1804 = vunpack.c.l.b16 %v1182
    %v1805 = vunpack.c.h.b16 %v1182
    %v1806 = vunpack.c.l.b16 %v1183
    %v1807 = vunpack.c.h.b16 %v1183
    %v1808 = vunpack.c.l.b16 %v1184
    %v1809 = vunpack.c.h.b16 %v1184
    %v1810 = vunpack.c.l.b16 %v1185
    %v1811 = vunpack.c.h.b16 %v1185
    %v1812 = vunpack.c.l.b16 %v1186
    %v1813 = vunpack.c.h.b16 %v1186
    %v1814 = vunpack.c.l.b16 %v1187
    %v1815 = vunpack.c.h.b16 %v1187
    %v1816 = vunpack.c.l.b16 %v1188
    %v1817 = vunpack.c.h.b16 %v1188
    %v1818 = vunpack.c.l.b16 %v1189
    %v1819 = vunpack.c.h.b16 %v1189
    %v1820 = vunpack.c.l.b16 %v1190
    %v1821 = vunpack.c.h.b16 %v1190
    %v1822 = vunpack.c.l.b16 %v1191
    %v1823 = vunpack.c.h.b16 %v1191
    %v1824 = vunpack.c.l.b16 %v1192
    %v1825 = vunpack.c.h.b16 %v1192
    %v1826 = vunpack.c.l.b16 %v1193
    %v1827 = vunpack.c.h.b16 %v1193
    %v1828 = vunpack.c.l.b16 %v1194
    %v1829 = vunpack.c.h.b16 %v1194
    %v1830 = vunpack.c.l.b16 %v1195
    %v1831 = vunpack.c.h.b16 %v1195
    %v1832 = vunpack.c.l.b16 %v1196
    %v1833 = vunpack.c.h.b16 %v1196
    %v1834 = vunpack.c.l.b16 %v1197
    %v1835 = vunpack.c.h.b16 %v1197
    %v1836 = vunpack.c.l.b16 %v1198
    %v1837 = vunpack.c.h.b16 %v1198
    %v1838 = vunpack.c.l.b16 %v1199
    %v1839 = vunpack.c.h.b16 %v1199
    %v1840 = vunpack.c.l.b16 %v1200
    %v1841 = vunpack.c.h.b16 %v1200
    %v1842 = vunpack.c.l.b16 %v1201
    %v1843 = vunpack.c.h.b16 %v1201
    %v1844 = vunpack.c.l.b16 %v1202
    %v1845 = vunpack.c.h.b16 %v1202
    %v1846 = vunpack.c.l.b16 %v1203
    %v1847 = vunpack.c.h.b16 %v1203
    %v1848 = vunpack.c.l.b16 %v1204
    %v1849 = vunpack.c.h.b16 %v1204
    %v1850 = vunpack.c.l.b16 %v1205
    %v1851 = vunpack.c.h.b16 %v1205
    %v1852 = vunpack.c.l.b16 %v1206
    %v1853 = vunpack.c.h.b16 %v1206
    %v1854 = vunpack.c.l.b16 %v1207
    %v1855 = vunpack.c.h.b16 %v1207
    %v1856 = vunpack.c.l.b16 %v1208
    %v1857 = vunpack.c.h.b16 %v1208
    %v1858 = vunpack.c.l.b16 %v1209
    %v1859 = vunpack.c.h.b16 %v1209
    %v1860 = vunpack.c.l.b16 %v1210
    %v1861 = vunpack.c.h.b16 %v1210
    %v1862 = vunpack.c.l.b16 %v1211
    %v1863 = vunpack.c.h.b16 %v1211
    %v1864 = vunpack.c.l.b16 %v1212
    %v1865 = vunpack.c.h.b16 %v1212
    %v1866 = vunpack.c.l.b16 %v1213
    %v1867 = vunpack.c.h.b16 %v1213
    %v1868 = vunpack.c.l.b16 %v1214
    %v1869 = vunpack.c.h.b16 %v1214
    %v1870 = vunpack.c.l.b16 %v1215
    %v1871 = vunpack.c.h.b16 %v1215
    %v1872 = vunpack.c.l.b16 %v1216
    %v1873 = vunpack.c.h.b16 %v1216
    %v1874 = vunpack.c.l.b16 %v1217
    %v1875 = vunpack.c.h.b16 %v1217
    %v1876 = vunpack.c.l.b16 %v1218
    %v1877 = vunpack.c.h.b16 %v1218
    %v1878 = vunpack.c.l.b16 %v1219
    %v1879 = vunpack.c.h.b16 %v1219
    %v1880 = vunpack.c.l.b16 %v1220
    %v1881 = vunpack.c.h.b16 %v1220
    %v1882 = vunpack.c.l.b16 %v1221
    %v1883 = vunpack.c.h.b16 %v1221
    %v1884 = vunpack.c.l.b16 %v1222
    %v1885 = vunpack.c.h.b16 %v1222
    %v1886 = vunpack.c.l.b16 %v1223
    %v1887 = vunpack.c.h.b16 %v1223
    %v1888 = vunpack.c.l.b16 %v1224
    %v1889 = vunpack.c.h.b16 %v1224
    %v1890 = vunpack.c.l.b16 %v1225
    %v1891 = vunpack.c.h.b16 %v1225
    %v1892 = vunpack.c.l.b16 %v1226
    %v1893 = vunpack.c.h.b16 %v1226
    %v1894 = vunpack.c.l.b16 %v1227
    %v1895 = vunpack.c.h.b16 %v1227
    %v1896 = vunpack.c.l.b16 %v1228
    %v1897 = vunpack.c.h.b16 %v1228
    %v1898 = vunpack.c.l.b16 %v1229
    %v1899 = vunpack.c.h.b16 %v1229
    %v1900 = vunpack.c.l.b16 %v1230
    %v1901 = vunpack.c.h.b16 %v1230
    %v1902 = vunpack.c.l.b16 %v1231
    %v1903 = vunpack.c.h.b16 %v1231
    %v1904 = vunpack.c.l.b16 %v1232
    %v1905 = vunpack.c.h.b16 %v1232
    %v1906 = vunpack.c.l.b16 %v1233
    %v1907 = vunpack.c.h.b16 %v1233
    %v1908 = vunpack.c.l.b16 %v1234
    %v1909 = vunpack.c.h.b16 %v1234
    %v1910 = vunpack.c.l.b16 %v1235
    %v1911 = vunpack.c.h.b16 %v1235
    %v1912 = vunpack.c.l.b16 %v1236
    %v1913 = vunpack.c.h.b16 %v1236
    %v1914 = vunpack.c.l.b16 %v1237
    %v1915 = vunpack.c.h.b16 %v1237
    %v1916 = vunpack.c.l.b16 %v1238
    %v1917 = vunpack.c.h.b16 %v1238
    %v1918 = vunpack.c.l.b16 %v1239
    %v1919 = vunpack.c.h.b16 %v1239
    %v1920 = vunpack.c.l.b16 %v1240
    %v1921 = vunpack.c.h.b16 %v1240
    %v1922 = vunpack.c.l.b16 %v1241
    %v1923 = vunpack.c.h.b16 %v1241
    %v1924 = vunpack.c.l.b16 %v1242
    %v1925 = vunpack.c.h.b16 %v1242
    %v1926 = vunpack.c.l.b16 %v1243
    %v1927 = vunpack.c.h.b16 %v1243
    %v1928 = vunpack.c.l.b16 %v1244
    %v1929 = vunpack.c.h.b16 %v1244
    %v1930 = vunpack.c.l.b16 %v1245
    %v1931 = vunpack.c.h.b16 %v1245
    %v1932 = vunpack.c.l.b16 %v1246
    %v1933 = vunpack.c.h.b16 %v1246
    %v1934 = vunpack.c.l.b16 %v1247
    %v1935 = vunpack.c.h.b16 %v1247
    %v1936 = vunpack.c.l.b16 %v1248
    %v1937 = vunpack.c.h.b16 %v1248
    %v1938 = vunpack.c.l.b16 %v1249
    %v1939 = vunpack.c.h.b16 %v1249
    %v1940 = vunpack.c.l.b16 %v1250
    %v1941 = vunpack.c.h.b16 %v1250
    %v1942 = vunpack.c.l.b16 %v1251
    %v1943 = vunpack.c.h.b16 %v1251
    %v1944 = vunpack.c.l.b16 %v1252
    %v1945 = vunpack.c.h.b16 %v1252
    %v1946 = vunpack.c.l.b16 %v1253
    %v1947 = vunpack.c.h.b16 %v1253
    %v1948 = vunpack.c.l.b16 %v1254
    %v1949 = vunpack.c.h.b16 %v1254
    %v1950 = vunpack.c.l.b16 %v1255
    %v1951 = vunpack.c.h.b16 %v1255
    %v1952 = vunpack.c.l.b16 %v1256
    %v1953 = vunpack.c.h.b16 %v1256
    %v1954 = vunpack.c.l.b16 %v1257
    %v1955 = vunpack.c.h.b16 %v1257
    %v1956 = vunpack.c.l.b16 %v1258
    %v1957 = vunpack.c.h.b16 %v1258
    %v1958 = vunpack.c.l.b16 %v1259
    %v1959 = vunpack.c.h.b16 %v1259
    %v1960 = vunpack.c.l.b16 %v1260
    %v1961 = vunpack.c.h.b16 %v1260
    %v1962 = vunpack.c.l.b16 %v1261
    %v1963 = vunpack.c.h.b16 %v1261
    %v1964 = vunpack.c.l.b16 %v1262
    %v1965 = vunpack.c.h.b16 %v1262
    %v1966 = vunpack.c.l.b16 %v1263
    %v1967 = vunpack.c.h.b16 %v1263
    %v1968 = vunpack.c.l.b16 %v1264
    %v1969 = vunpack.c.h.b16 %v1264
    %v1970 = vunpack.c.l.b16 %v1265
    %v1971 = vunpack.c.h.b16 %v1265
    %v1972 = vunpack.c.l.b16 %v1266
    %v1973 = vunpack.c.h.b16 %v1266
    %v1974 = vunpack.c.l.b16 %v1267
    %v1975 = vunpack.c.h.b16 %v1267
    %v1976 = vunpack.c.l.b16 %v1268
    %v1977 = vunpack.c.h.b16 %v1268
    %v1978 = vunpack.c.l.b16 %v1269
    %v1979 = vunpack.c.h.b16 %v1269
    %v1980 = vunpack.c.l.b16 %v1270
    %v1981 = vunpack.c.h.b16 %v1270
    %v1982 = vunpack.c.l.b16 %v1271
    %v1983 = vunpack.c.h.b16 %v1271
    %v1984 = vunpack.c.l.b16 %v1272
    %v1985 = vunpack.c.h.b16 %v1272
    %v1986 = vunpack.c.l.b16 %v1273
    %v1987 = vunpack.c.h.b16 %v1273
    %v1988 = vunpack.c.l.b16 %v1274
    %v1989 = vunpack.c.h.b16 %v1274
    %v1990 = vunpack.c.l.b16 %v1275
    %v1991 = vunpack.c.h.b16 %v1275
    %v1992 = vunpack.c.l.b16 %v1276
    %v1993 = vunpack.c.h.b16 %v1276
    %v1994 = vunpack.c.l.b16 %v1277
    %v1995 = vunpack.c.h.b16 %v1277
    %v1996 = vunpack.c.l.b16 %v1278
    %v1997 = vunpack.c.h.b16 %v1278
    %v1998 = vunpack.c.l.b16 %v1279
    %v1999 = vunpack.c.h.b16 %v1279
    %v2000 = vunpack.c.l.b16 %v1280
    %v2001 = vunpack.c.h.b16 %v1280
    %v2002 = vunpack.c.l.b16 %v1281
    %v2003 = vunpack.c.h.b16 %v1281
    %v2004 = vunpack.c.l.b16 %v1282
    %v2005 = vunpack.c.h.b16 %v1282
    %v2006 = vunpack.c.l.b16 %v1283
    %v2007 = vunpack.c.h.b16 %v1283
    %v2008 = vunpack.c.l.b16 %v1284
    %v2009 = vunpack.c.h.b16 %v1284
    %v2010 = vunpack.c.l.b16 %v1285
    %v2011 = vunpack.c.h.b16 %v1285
    %v2012 = vunpack.c.l.b16 %v1286
    %v2013 = vunpack.c.h.b16 %v1286
    %v2014 = vunpack.c.l.b16 %v1287
    %v2015 = vunpack.c.h.b16 %v1287
    %v2016 = vunpack.c.l.b16 %v1288
    %v2017 = vunpack.c.h.b16 %v1288
    %v2018 = vunpack.c.l.b16 %v1289
    %v2019 = vunpack.c.h.b16 %v1289
    %v2020 = vunpack.c.l.b16 %v1290
    %v2021 = vunpack.c.h.b16 %v1290
    %v2022 = vunpack.c.l.b16 %v1291
    %v2023 = vunpack.c.h.b16 %v1291
    %v2024 = vunpack.c.l.b16 %v1292
    %v2025 = vunpack.c.h.b16 %v1292
    %v2026 = vunpack.c.l.b16 %v1293
    %v2027 = vunpack.c.h.b16 %v1293
    %v2028 = vunpack.c.l.b16 %v1294
    %v2029 = vunpack.c.h.b16 %v1294
    %v2030 = vunpack.c.l.b16 %v1295
    %v2031 = vunpack.c.h.b16 %v1295
    %v2032 = vunpack.c.l.b16 %v1296
    %v2033 = vunpack.c.h.b16 %v1296
    %v2034 = vunpack.c.l.b16 %v1297
    %v2035 = vunpack.c.h.b16 %v1297
    %v2036 = vunpack.c.l.b16 %v1298
    %v2037 = vunpack.c.h.b16 %v1298
    %v2038 = vunpack.c.l.b16 %v1299
    %v2039 = vunpack.c.h.b16 %v1299
    %v2040 = vunpack.c.l.b16 %v1300
    %v2041 = vunpack.c.h.b16 %v1300
    %v2042 = vunpack.c.l.b16 %v1301
    %v2043 = vunpack.c.h.b16 %v1301
    %v2044 = vunpack.c.l.b16 %v1302
    %v2045 = vunpack.c.h.b16 %v1302
    %v2046 = vunpack.c.l.b16 %v1303
    %v2047 = vunpack.c.h.b16 %v1303
    %v2048 = vunpack.c.l.b16 %v1304
    %v2049 = vunpack.c.h.b16 %v1304
    %v2050 = vunpack.c.l.b16 %v1305
    %v2051 = vunpack.c.h.b16 %v1305
    %v2052 = vunpack.c.l.b16 %v1306
    %v2053 = vunpack.c.h.b16 %v1306
    %v2054 = vunpack.c.l.b16 %v1307
    %v2055 = vunpack.c.h.b16 %v1307
    %v2056 = vunpack.c.l.b16 %v1308
    %v2057 = vunpack.c.h.b16 %v1308
    %v2058 = vunpack.c.l.b16 %v1309
    %v2059 = vunpack.c.h.b16 %v1309
    %v2060 = vunpack.c.l.b16 %v1310
    %v2061 = vunpack.c.h.b16 %v1310
    %v2062 = vunpack.c.l.b16 %v1311
    %v2063 = vunpack.c.h.b16 %v1311
    %v2064 = vunpack.c.l.b16 %v1312
    %v2065 = vunpack.c.h.b16 %v1312
    %v2066 = vunpack.c.l.b16 %v1313
    %v2067 = vunpack.c.h.b16 %v1313
    %v2068 = vunpack.c.l.b16 %v1314
    %v2069 = vunpack.c.h.b16 %v1314
    %v2070 = vunpack.c.l.b16 %v1315
    %v2071 = vunpack.c.h.b16 %v1315
    %v2072 = vunpack.c.l.b16 %v1316
    %v2073 = vunpack.c.h.b16 %v1316
    %v2074 = vunpack.c.l.b16 %v1317
    %v2075 = vunpack.c.h.b16 %v1317
    %v2076 = vunpack.c.l.b16 %v1318
    %v2077 = vunpack.c.h.b16 %v1318
    %v2078 = vunpack.c.l.b16 %v1319
    %v2079 = vunpack.c.h.b16 %v1319
    %v2080 = vunpack.c.l.b16 %v1320
    %v2081 = vunpack.c.h.b16 %v1320
    %v2082 = vunpack.c.l.b16 %v1321
    %v2083 = vunpack.c.h.b16 %v1321
    %v2084 = vunpack.c.l.b16 %v1322
    %v2085 = vunpack.c.h.b16 %v1322
    %v2086 = vunpack.c.l.b16 %v1323
    %v2087 = vunpack.c.h.b16 %v1323
    %v2088 = vunpack.c.l.b16 %v1324
    %v2089 = vunpack.c.h.b16 %v1324
    %v2090 = vunpack.c.l.b16 %v1325
    %v2091 = vunpack.c.h.b16 %v1325
    %v2092 = vunpack.c.l.b16 %v1326
    %v2093 = vunpack.c.h.b16 %v1326
    %v2094 = vunpack.c.l.b16 %v1327
    %v2095 = vunpack.c.h.b16 %v1327
    %v2096 = vpack.c.b16 %v1592, %v1584
    %v2097 = vpack.c.b16 %v1593, %v1585
    %v2098 = vpack.c.b16 %v1594, %v1586
    %v2099 = vpack.c.b16 %v1595, %v1587
    %v2100 = vpack.c.b16 %v1596, %v1588
    %v2101 = vpack.c.b16 %v1597, %v1589
    %v2102 = vpack.c.b16 %v1598, %v1590
    %v2103 = vpack.c.b16 %v1599, %v1591
    %v2104 = vpack.c.b16 %v1608, %v1600
    %v2105 = vpack.c.b16 %v1609, %v1601
    %v2106 = vpack.c.b16 %v1610, %v1602
    %v2107 = vpack.c.b16 %v1611, %v1603
    %v2108 = vpack.c.b16 %v1612, %v1604
    %v2109 = vpack.c.b16 %v1613, %v1605
    %v2110 = vpack.c.b16 %v1614, %v1606
    %v2111 = vpack.c.b16 %v1615, %v1607
    %v2112 = vpack.c.b16 %v1624, %v1616
    %v2113 = vpack.c.b16 %v1625, %v1617
    %v2114 = vpack.c.b16 %v1626, %v1618
    %v2115 = vpack.c.b16 %v1627, %v1619
    %v2116 = vpack.c.b16 %v1628, %v1620
    %v2117 = vpack.c.b16 %v1629, %v1621
    %v2118 = vpack.c.b16 %v1630, %v1622
    %v2119 = vpack.c.b16 %v1631, %v1623
    %v2120 = vpack.c.b16 %v1640, %v1632
    %v2121 = vpack.c.b16 %v1641, %v1633
    %v2122 = vpack.c.b16 %v1642, %v1634
    %v2123 = vpack.c.b16 %v1643, %v1635
    %v2124 = vpack.c.b16 %v1644, %v1636
    %v2125 = vpack.c.b16 %v1645, %v1637
    %v2126 = vpack.c.b16 %v1646, %v1638
    %v2127 = vpack.c.b16 %v1647, %v1639
    %v2128 = vpack.c.b16 %v1656, %v1648
    %v2129 = vpack.c.b16 %v1657, %v1649
    %v2130 = vpack.c.b16 %v1658, %v1650
    %v2131 = vpack.c.b16 %v1659, %v1651
    %v2132 = vpack.c.b16 %v1660, %v1652
    %v2133 = vpack.c.b16 %v1661, %v1653
    %v2134 = vpack.c.b16 %v1662, %v1654
    %v2135 = vpack.c.b16 %v1663, %v1655
    %v2136 = vpack.c.b16 %v1672, %v1664
    %v2137 = vpack.c.b16 %v1673, %v1665
    %v2138 = vpack.c.b16 %v1674, %v1666
    %v2139 = vpack.c.b16 %v1675, %v1667
    %v2140 = vpack.c.b16 %v1676, %v1668
    %v2141 = vpack.c.b16 %v1677, %v1669
    %v2142 = vpack.c.b16 %v1678, %v1670
    %v2143 = vpack.c.b16 %v1679, %v1671
    %v2144 = vpack.c.b16 %v1688, %v1680
    %v2145 = vpack.c.b16 %v1689, %v1681
    %v2146 = vpack.c.b16 %v1690, %v1682
    %v2147 = vpack.c.b16 %v1691, %v1683
    %v2148 = vpack.c.b16 %v1692, %v1684
    %v2149 = vpack.c.b16 %v1693, %v1685
    %v2150 = vpack.c.b16 %v1694, %v1686
    %v2151 = vpack.c.b16 %v1695, %v1687
    %v2152 = vpack.c.b16 %v1704, %v1696
    %v2153 = vpack.c.b16 %v1705, %v1697
    %v2154 = vpack.c.b16 %v1706, %v1698
    %v2155 = vpack.c.b16 %v1707, %v1699
    %v2156 = vpack.c.b16 %v1708, %v1700
    %v2157 = vpack.c.b16 %v1709, %v1701
    %v2158 = vpack.c.b16 %v1710, %v1702
    %v2159 = vpack.c.b16 %v1711, %v1703
    %v2160 = vpack.c.b16 %v1720, %v1712
    %v2161 = vpack.c.b16 %v1721, %v1713
    %v2162 = vpack.c.b16 %v1722, %v1714
    %v2163 = vpack.c.b16 %v1723, %v1715
    %v2164 = vpack.c.b16 %v1724, %v1716
    %v2165 = vpack.c.b16 %v1725, %v1717
    %v2166 = vpack.c.b16 %v1726, %v1718
    %v2167 = vpack.c.b16 %v1727, %v1719
    %v2168 = vpack.c.b16 %v1736, %v1728
    %v2169 = vpack.c.b16 %v1737, %v1729
    %v2170 = vpack.c.b16 %v1738, %v1730
    %v2171 = vpack.c.b16 %v1739, %v1731
    %v2172 = vpack.c.b16 %v1740, %v1732
    %v2173 = vpack.c.b16 %v1741, %v1733
    %v2174 = vpack.c.b16 %v1742, %v1734
    %v2175 = vpack.c.b16 %v1743, %v1735
    %v2176 = vpack.c.b16 %v1752, %v1744
    %v2177 = vpack.c.b16 %v1753, %v1745
    %v2178 = vpack.c.b16 %v1754, %v1746
    %v2179 = vpack.c.b16 %v1755, %v1747
    %v2180 = vpack.c.b16 %v1756, %v1748
    %v2181 = vpack.c.b16 %v1757, %v1749
    %v2182 = vpack.c.b16 %v1758, %v1750
    %v2183 = vpack.c.b16 %v1759, %v1751
    %v2184 = vpack.c.b16 %v1768, %v1760
    %v2185 = vpack.c.b16 %v1769, %v1761
    %v2186 = vpack.c.b16 %v1770, %v1762
    %v2187 = vpack.c.b16 %v1771, %v1763
    %v2188 = vpack.c.b16 %v1772, %v1764
    %v2189 = vpack.c.b16 %v1773, %v1765
    %v2190 = vpack.c.b16 %v1774, %v1766
    %v2191 = vpack.c.b16 %v1775, %v1767
    %v2192 = vpack.c.b16 %v1784, %v1776
    %v2193 = vpack.c.b16 %v1785, %v1777
    %v2194 = vpack.c.b16 %v1786, %v1778
    %v2195 = vpack.c.b16 %v1787, %v1779
    %v2196 = vpack.c.b16 %v1788, %v1780
    %v2197 = vpack.c.b16 %v1789, %v1781
    %v2198 = vpack.c.b16 %v1790, %v1782
    %v2199 = vpack.c.b16 %v1791, %v1783
    %v2200 = vpack.c.b16 %v1800, %v1792
    %v2201 = vpack.c.b16 %v1801, %v1793
    %v2202 = vpack.c.b16 %v1802, %v1794
    %v2203 = vpack.c.b16 %v1803, %v1795
    %v2204 = vpack.c.b16 %v1804, %v1796
    %v2205 = vpack.c.b16 %v1805, %v1797
    %v2206 = vpack.c.b16 %v1806, %v1798
    %v2207 = vpack.c.b16 %v1807, %v1799
    %v2208 = vpack.c.b16 %v1816, %v1808
    %v2209 = vpack.c.b16 %v1817, %v1809
    %v2210 = vpack.c.b16 %v1818, %v1810
    %v2211 = vpack.c.b16 %v1819, %v1811
    %v2212 = vpack.c.b16 %v1820, %v1812
    %v2213 = vpack.c.b16 %v1821, %v1813
    %v2214 = vpack.c.b16 %v1822, %v1814
    %v2215 = vpack.c.b16 %v1823, %v1815
    %v2216 = vpack.c.b16 %v1832, %v1824
    %v2217 = vpack.c.b16 %v1833, %v1825
    %v2218 = vpack.c.b16 %v1834, %v1826
    %v2219 = vpack.c.b16 %v1835, %v1827
    %v2220 = vpack.c.b16 %v1836, %v1828
    %v2221 = vpack.c.b16 %v1837, %v1829
    %v2222 = vpack.c.b16 %v1838, %v1830
    %v2223 = vpack.c.b16 %v1839, %v1831
    %v2224 = vpack.c.b16 %v1848, %v1840
    %v2225 = vpack.c.b16 %v1849, %v1841
    %v2226 = vpack.c.b16 %v1850, %v1842
    %v2227 = vpack.c.b16 %v1851, %v1843
    %v2228 = vpack.c.b16 %v1852, %v1844
    %v2229 = vpack.c.b16 %v1853, %v1845
    %v2230 = vpack.c.b16 %v1854, %v1846
    %v2231 = vpack.c.b16 %v1855, %v1847
    %v2232 = vpack.c.b16 %v1864, %v1856
    %v2233 = vpack.c.b16 %v1865, %v1857
    %v2234 = vpack.c.b16 %v1866, %v1858
    %v2235 = vpack.c.b16 %v1867, %v1859
    %v2236 = vpack.c.b16 %v1868, %v1860
    %v2237 = vpack.c.b16 %v1869, %v1861
    %v2238 = vpack.c.b16 %v1870, %v1862
    %v2239 = vpack.c.b16 %v1871, %v1863
    %v2240 = vpack.c.b16 %v1880, %v1872
    %v2241 = vpack.c.b16 %v1881, %v1873
    %v2242 = vpack.c.b16 %v1882, %v1874
    %v2243 = vpack.c.b16 %v1883, %v1875
    %v2244 = vpack.c.b16 %v1884, %v1876
    %v2245 = vpack.c.b16 %v1885, %v1877
    %v2246 = vpack.c.b16 %v1886, %v1878
    %v2247 = vpack.c.b16 %v1887, %v1879
    %v2248 = vpack.c.b16 %v1896, %v1888
    %v2249 = vpack.c.b16 %v1897, %v1889
    %v2250 = vpack.c.b16 %v1898, %v1890
    %v2251 = vpack.c.b16 %v1899, %v1891
    %v2252 = vpack.c.b16 %v1900, %v1892
    %v2253 = vpack.c.b16 %v1901, %v1893
    %v2254 = vpack.c.b16 %v1902, %v1894
    %v2255 = vpack.c.b16 %v1903, %v1895
    %v2256 = vpack.c.b16 %v1912, %v1904
    %v2257 = vpack.c.b16 %v1913, %v1905
    %v2258 = vpack.c.b16 %v1914, %v1906
    %v2259 = vpack.c.b16 %v1915, %v1907
    %v2260 = vpack.c.b16 %v1916, %v1908
    %v2261 = vpack.c.b16 %v1917, %v1909
    %v2262 = vpack.c.b16 %v1918, %v1910
    %v2263 = vpack.c.b16 %v1919, %v1911
    %v2264 = vpack.c.b16 %v1928, %v1920
    %v2265 = vpack.c.b16 %v1929, %v1921
    %v2266 = vpack.c.b16 %v1930, %v1922
    %v2267 = vpack.c.b16 %v1931, %v1923
    %v2268 = vpack.c.b16 %v1932, %v1924
    %v2269 = vpack.c.b16 %v1933, %v1925
    %v2270 = vpack.c.b16 %v1934, %v1926
    %v2271 = vpack.c.b16 %v1935, %v1927
    %v2272 = vpack.c.b16 %v1944, %v1936
    %v2273 = vpack.c.b16 %v1945, %v1937
    %v2274 = vpack.c.b16 %v1946, %v1938
    %v2275 = vpack.c.b16 %v1947, %v1939
    %v2276 = vpack.c.b16 %v1948, %v1940
    %v2277 = vpack.c.b16 %v1949, %v1941
    %v2278 = vpack.c.b16 %v1950, %v1942
    %v2279 = vpack.c.b16 %v1951, %v1943
    %v2280 = vpack.c.b16 %v1960, %v1952
    %v2281 = vpack.c.b16 %v1961, %v1953
    %v2282 = vpack.c.b16 %v1962, %v1954
    %v2283 = vpack.c.b16 %v1963, %v1955
    %v2284 = vpack.c.b16 %v1964, %v1956
    %v2285 = vpack.c.b16 %v1965, %v1957
    %v2286 = vpack.c.b16 %v1966, %v1958
    %v2287 = vpack.c.b16 %v1967, %v1959
    %v2288 = vpack.c.b16 %v1976, %v1968
    %v2289 = vpack.c.b16 %v1977, %v1969
    %v2290 = vpack.c.b16 %v1978, %v1970
    %v2291 = vpack.c.b16 %v1979, %v1971
    %v2292 = vpack.c.b16 %v1980, %v1972
    %v2293 = vpack.c.b16 %v1981, %v1973
    %v2294 = vpack.c.b16 %v1982, %v1974
    %v2295 = vpack.c.b16 %v1983, %v1975
    %v2296 = vpack.c.b16 %v1992, %v1984
    %v2297 = vpack.c.b16 %v1993, %v1985
    %v2298 = vpack.c.b16 %v1994, %v1986
    %v2299 = vpack.c.b16 %v1995, %v1987
    %v2300 = vpack.c.b16 %v1996, %v1988
    %v2301 = vpack.c.b16 %v1997, %v1989
    %v2302 = vpack.c.b16 %v1998, %v1990
    %v2303 = vpack.c.b16 %v1999, %v1991
    %v2304 = vpack.c.b16 %v2008, %v2000
    %v2305 = vpack.c.b16 %v2009, %v2001
    %v2306 = vpack.c.b16 %v2010, %v2002
    %v2307 = vpack.c.b16 %v2011, %v2003
    %v2308 = vpack.c.b16 %v2012, %v2004
    %v2309 = vpack.c.b16 %v2013, %v2005
    %v2310 = vpack.c.b16 %v2014, %v2006
    %v2311 = vpack.c.b16 %v2015, %v2007
    %v2312 = vpack.c.b16 %v2024, %v2016
    %v2313 = vpack.c.b16 %v2025, %v2017
    %v2314 = vpack.c.b16 %v2026, %v2018
    %v2315 = vpack.c.b16 %v2027, %v2019
    %v2316 = vpack.c.b16 %v2028, %v2020
    %v2317 = vpack.c.b16 %v2029, %v2021
    %v2318 = vpack.c.b16 %v2030, %v2022
    %v2319 = vpack.c.b16 %v2031, %v2023
    %v2320 = vpack.c.b16 %v2040, %v2032
    %v2321 = vpack.c.b16 %v2041, %v2033
    %v2322 = vpack.c.b16 %v2042, %v2034
    %v2323 = vpack.c.b16 %v2043, %v2035
    %v2324 = vpack.c.b16 %v2044, %v2036
    %v2325 = vpack.c.b16 %v2045, %v2037
    %v2326 = vpack.c.b16 %v2046, %v2038
    %v2327 = vpack.c.b16 %v2047, %v2039
    %v2328 = vpack.c.b16 %v2056, %v2048
    %v2329 = vpack.c.b16 %v2057, %v2049
    %v2330 = vpack.c.b16 %v2058, %v2050
    %v2331 = vpack.c.b16 %v2059, %v2051
    %v2332 = vpack.c.b16 %v2060, %v2052
    %v2333 = vpack.c.b16 %v2061, %v2053
    %v2334 = vpack.c.b16 %v2062, %v2054
    %v2335 = vpack.c.b16 %v2063, %v2055
    %v2336 = vpack.c.b16 %v2072, %v2064
    %v2337 = vpack.c.b16 %v2073, %v2065
    %v2338 = vpack.c.b16 %v2074, %v2066
    %v2339 = vpack.c.b16 %v2075, %v2067
    %v2340 = vpack.c.b16 %v2076, %v2068
    %v2341 = vpack.c.b16 %v2077, %v2069
    %v2342 = vpack.c.b16 %v2078, %v2070
    %v2343 = vpack.c.b16 %v2079, %v2071
    %v2344 = vpack.c.b16 %v2088, %v2080
    %v2345 = vpack.c.b16 %v2089, %v2081
    %v2346 = vpack.c.b16 %v2090, %v2082
    %v2347 = vpack.c.b16 %v2091, %v2083
    %v2348 = vpack.c.b16 %v2092, %v2084
    %v2349 = vpack.c.b16 %v2093, %v2085
    %v2350 = vpack.c.b16 %v2094, %v2086
    %v2351 = vpack.c.b16 %v2095, %v2087
    %2608 = vmatprep.subr.bf16.mxu0 %v2097
    %2609 = vmatpush1.bf16.msra.mxu0 %v2096
    %2610 = vmatprep.subr.bf16.mxu0 %v2105
    %2611 = vmatpush1.bf16.msra.mxu0 %v2104
    %2612 = vmatprep.subr.bf16.mxu0 %v2113
    %2613 = vmatpush1.bf16.msra.mxu0 %v2112
    %2614 = vmatprep.subr.bf16.mxu0 %v2121
    %2615 = vmatpush1.bf16.msra.mxu0 %v2120
    %2616 = vmatprep.subr.bf16.mxu0 %v2129
    %2617 = vmatpush1.bf16.msra.mxu0 %v2128
    %2618 = vmatprep.subr.bf16.mxu0 %v2137
    %2619 = vmatpush1.bf16.msra.mxu0 %v2136
    %2620 = vmatprep.subr.bf16.mxu0 %v2145
    %2621 = vmatpush1.bf16.msra.mxu0 %v2144
    %2622 = vmatprep.subr.bf16.mxu0 %v2153
    %2623 = vmatpush1.bf16.msra.mxu0 %v2152
    %2624 = vmatprep.subr.bf16.mxu0 %v2161
    %2625 = vmatpush1.bf16.msra.mxu0 %v2160
    %2626 = vmatprep.subr.bf16.mxu0 %v2169
    %2627 = vmatpush1.bf16.msra.mxu0 %v2168
    %2628 = vmatprep.subr.bf16.mxu0 %v2177
    %2629 = vmatpush1.bf16.msra.mxu0 %v2176
    %2630 = vmatprep.subr.bf16.mxu0 %v2185
    %2631 = vmatpush1.bf16.msra.mxu0 %v2184
    %2632 = vmatprep.subr.bf16.mxu0 %v2193
    %2633 = vmatpush1.bf16.msra.mxu0 %v2192
    %2634 = vmatprep.subr.bf16.mxu0 %v2201
    %2635 = vmatpush1.bf16.msra.mxu0 %v2200
    %2636 = vmatprep.subr.bf16.mxu0 %v2209
    %2637 = vmatpush1.bf16.msra.mxu0 %v2208
    %2638 = vmatprep.subr.bf16.mxu0 %v2217
    %2639 = vmatpush1.bf16.msra.mxu0 %v2216
    %2640 = vmatprep.mubr.bf16.mxu0 %v1069
    %2641 = vmatmul.mubr.bf16.gmra.mrb[0].mxu0 %v1068
    %v2642 = vpop.f32.mrb[0].mxu0
    %v2643 = vadd.f32 0.0, %v2642
    %v2644 = vpop.f32.mrb[0].mxu0
    %v2645 = vadd.f32 0.0, %v2644
    %v2646 = vpop.f32.mrb[0].mxu0
    %v2647 = vpop.f32.mrb[0].mxu0
    %2648 = vdwg.mxu0
    %2649 = vmatprep.subr.bf16.mxu0 %v2225
    %2650 = vmatpush1.bf16.msra.mxu0 %v2224
    %2651 = vmatprep.subr.bf16.mxu0 %v2233
    %2652 = vmatpush1.bf16.msra.mxu0 %v2232
    %2653 = vmatprep.subr.bf16.mxu0 %v2241
    %2654 = vmatpush1.bf16.msra.mxu0 %v2240
    %2655 = vmatprep.subr.bf16.mxu0 %v2249
    %2656 = vmatpush1.bf16.msra.mxu0 %v2248
    %2657 = vmatprep.subr.bf16.mxu0 %v2257
    %2658 = vmatpush1.bf16.msra.mxu0 %v2256
    %2659 = vmatprep.subr.bf16.mxu0 %v2265
    %2660 = vmatpush1.bf16.msra.mxu0 %v2264
    %2661 = vmatprep.subr.bf16.mxu0 %v2273
    %2662 = vmatpush1.bf16.msra.mxu0 %v2272
    %2663 = vmatprep.subr.bf16.mxu0 %v2281
    %2664 = vmatpush1.bf16.msra.mxu0 %v2280
    %2665 = vmatprep.subr.bf16.mxu0 %v2289
    %2666 = vmatpush1.bf16.msra.mxu0 %v2288
    %2667 = vmatprep.subr.bf16.mxu0 %v2297
    %2668 = vmatpush1.bf16.msra.mxu0 %v2296
    %2669 = vmatprep.subr.bf16.mxu0 %v2305
    %2670 = vmatpush1.bf16.msra.mxu0 %v2304
    %2671 = vmatprep.subr.bf16.mxu0 %v2313
    %2672 = vmatpush1.bf16.msra.mxu0 %v2312
    %2673 = vmatprep.subr.bf16.mxu0 %v2321
    %2674 = vmatpush1.bf16.msra.mxu0 %v2320
    %2675 = vmatprep.subr.bf16.mxu0 %v2329
    %2676 = vmatpush1.bf16.msra.mxu0 %v2328
    %2677 = vmatprep.subr.bf16.mxu0 %v2337
    %2678 = vmatpush1.bf16.msra.mxu0 %v2336
    %2679 = vmatprep.subr.bf16.mxu0 %v2345
    %2680 = vmatpush1.bf16.msra.mxu0 %v2344
    %2681 = vmatprep.mubr.bf16.mxu0 %v1071
    %2682 = vmatmul.mubr.bf16.gmra.mrb[0].mxu0 %v1070
    %v2683 = vpop.f32.mrb[0].mxu0
    %v2684 = vadd.f32 %v2643, %v2683
    %v2685 = vpop.f32.mrb[0].mxu0
    %v2686 = vadd.f32 %v2645, %v2685
    %v2687 = vpop.f32.mrb[0].mxu0
    %v2688 = vpop.f32.mrb[0].mxu0
    %2689 = vdwg.mxu0
    %2690 = vmatprep.subr.bf16.mxu0 %v2099
    %2691 = vmatpush1.bf16.msra.mxu0 %v2098
    %2692 = vmatprep.subr.bf16.mxu0 %v2107
    %2693 = vmatpush1.bf16.msra.mxu0 %v2106
    %2694 = vmatprep.subr.bf16.mxu0 %v2115
    %2695 = vmatpush1.bf16.msra.mxu0 %v2114
    %2696 = vmatprep.subr.bf16.mxu0 %v2123
    %2697 = vmatpush1.bf16.msra.mxu0 %v2122
    %2698 = vmatprep.subr.bf16.mxu0 %v2131
    %2699 = vmatpush1.bf16.msra.mxu0 %v2130
    %2700 = vmatprep.subr.bf16.mxu0 %v2139
    %2701 = vmatpush1.bf16.msra.mxu0 %v2138
    %2702 = vmatprep.subr.bf16.mxu0 %v2147
    %2703 = vmatpush1.bf16.msra.mxu0 %v2146
    %2704 = vmatprep.subr.bf16.mxu0 %v2155
    %2705 = vmatpush1.bf16.msra.mxu0 %v2154
    %2706 = vmatprep.subr.bf16.mxu0 %v2163
    %2707 = vmatpush1.bf16.msra.mxu0 %v2162
    %2708 = vmatprep.subr.bf16.mxu0 %v2171
    %2709 = vmatpush1.bf16.msra.mxu0 %v2170
    %2710 = vmatprep.subr.bf16.mxu0 %v2179
    %2711 = vmatpush1.bf16.msra.mxu0 %v2178
    %2712 = vmatprep.subr.bf16.mxu0 %v2187
    %2713 = vmatpush1.bf16.msra.mxu0 %v2186
    %2714 = vmatprep.subr.bf16.mxu0 %v2195
    %2715 = vmatpush1.bf16.msra.mxu0 %v2194
    %2716 = vmatprep.subr.bf16.mxu0 %v2203
    %2717 = vmatpush1.bf16.msra.mxu0 %v2202
    %2718 = vmatprep.subr.bf16.mxu0 %v2211
    %2719 = vmatpush1.bf16.msra.mxu0 %v2210
    %2720 = vmatprep.subr.bf16.mxu0 %v2219
    %2721 = vmatpush1.bf16.msra.mxu0 %v2218
    %2722 = vmatprep.mubr.bf16.mxu0 %v1069
    %2723 = vmatmul.mubr.bf16.gmra.mrb[0].mxu0 %v1068
    %v2724 = vpop.f32.mrb[0].mxu0
    %v2725 = vadd.f32 0.0, %v2724
    %v2726 = vpop.f32.mrb[0].mxu0
    %v2727 = vadd.f32 0.0, %v2726
    %v2728 = vpop.f32.mrb[0].mxu0
    %v2729 = vpop.f32.mrb[0].mxu0
    %2730 = vdwg.mxu0
    %2731 = vmatprep.subr.bf16.mxu0 %v2227
    %2732 = vmatpush1.bf16.msra.mxu0 %v2226
    %2733 = vmatprep.subr.bf16.mxu0 %v2235
    %2734 = vmatpush1.bf16.msra.mxu0 %v2234
    %2735 = vmatprep.subr.bf16.mxu0 %v2243
    %2736 = vmatpush1.bf16.msra.mxu0 %v2242
    %2737 = vmatprep.subr.bf16.mxu0 %v2251
    %2738 = vmatpush1.bf16.msra.mxu0 %v2250
    %2739 = vmatprep.subr.bf16.mxu0 %v2259
    %2740 = vmatpush1.bf16.msra.mxu0 %v2258
    %2741 = vmatprep.subr.bf16.mxu0 %v2267
    %2742 = vmatpush1.bf16.msra.mxu0 %v2266
    %2743 = vmatprep.subr.bf16.mxu0 %v2275
    %2744 = vmatpush1.bf16.msra.mxu0 %v2274
    %2745 = vmatprep.subr.bf16.mxu0 %v2283
    %2746 = vmatpush1.bf16.msra.mxu0 %v2282
    %2747 = vmatprep.subr.bf16.mxu0 %v2291
    %2748 = vmatpush1.bf16.msra.mxu0 %v2290
    %2749 = vmatprep.subr.bf16.mxu0 %v2299
    %2750 = vmatpush1.bf16.msra.mxu0 %v2298
    %2751 = vmatprep.subr.bf16.mxu0 %v2307
    %2752 = vmatpush1.bf16.msra.mxu0 %v2306
    %2753 = vmatprep.subr.bf16.mxu0 %v2315
    %2754 = vmatpush1.bf16.msra.mxu0 %v2314
    %2755 = vmatprep.subr.bf16.mxu0 %v2323
    %2756 = vmatpush1.bf16.msra.mxu0 %v2322
    %2757 = vmatprep.subr.bf16.mxu0 %v2331
    %2758 = vmatpush1.bf16.msra.mxu0 %v2330
    %2759 = vmatprep.subr.bf16.mxu0 %v2339
    %2760 = vmatpush1.bf16.msra.mxu0 %v2338
    %2761 = vmatprep.subr.bf16.mxu0 %v2347
    %2762 = vmatpush1.bf16.msra.mxu0 %v2346
    %2763 = vmatprep.mubr.bf16.mxu0 %v1071
    %2764 = vmatmul.mubr.bf16.gmra.mrb[0].mxu0 %v1070
    %v2765 = vpop.f32.mrb[0].mxu0
    %v2766 = vadd.f32 %v2725, %v2765
    %v2767 = vpop.f32.mrb[0].mxu0
    %v2768 = vadd.f32 %v2727, %v2767
    %v2769 = vpop.f32.mrb[0].mxu0
    %v2770 = vpop.f32.mrb[0].mxu0
    %2771 = vdwg.mxu0
    %2772 = vmatprep.subr.bf16.mxu0 %v2101
    %2773 = vmatpush1.bf16.msra.mxu0 %v2100
    %2774 = vmatprep.subr.bf16.mxu0 %v2109
    %2775 = vmatpush1.bf16.msra.mxu0 %v2108
    %2776 = vmatprep.subr.bf16.mxu0 %v2117
    %2777 = vmatpush1.bf16.msra.mxu0 %v2116
    %2778 = vmatprep.subr.bf16.mxu0 %v2125
    %2779 = vmatpush1.bf16.msra.mxu0 %v2124
    %2780 = vmatprep.subr.bf16.mxu0 %v2133
    %2781 = vmatpush1.bf16.msra.mxu0 %v2132
    %2782 = vmatprep.subr.bf16.mxu0 %v2141
    %2783 = vmatpush1.bf16.msra.mxu0 %v2140
    %2784 = vmatprep.subr.bf16.mxu0 %v2149
    %2785 = vmatpush1.bf16.msra.mxu0 %v2148
    %2786 = vmatprep.subr.bf16.mxu0 %v2157
    %2787 = vmatpush1.bf16.msra.mxu0 %v2156
    %2788 = vmatprep.subr.bf16.mxu0 %v2165
    %2789 = vmatpush1.bf16.msra.mxu0 %v2164
    %2790 = vmatprep.subr.bf16.mxu0 %v2173
    %2791 = vmatpush1.bf16.msra.mxu0 %v2172
    %2792 = vmatprep.subr.bf16.mxu0 %v2181
    %2793 = vmatpush1.bf16.msra.mxu0 %v2180
    %2794 = vmatprep.subr.bf16.mxu0 %v2189
    %2795 = vmatpush1.bf16.msra.mxu0 %v2188
    %2796 = vmatprep.subr.bf16.mxu0 %v2197
    %2797 = vmatpush1.bf16.msra.mxu0 %v2196
    %2798 = vmatprep.subr.bf16.mxu0 %v2205
    %2799 = vmatpush1.bf16.msra.mxu0 %v2204
    %2800 = vmatprep.subr.bf16.mxu0 %v2213
    %2801 = vmatpush1.bf16.msra.mxu0 %v2212
    %2802 = vmatprep.subr.bf16.mxu0 %v2221
    %2803 = vmatpush1.bf16.msra.mxu0 %v2220
    %2804 = vmatprep.mubr.bf16.mxu0 %v1069
    %2805 = vmatmul.mubr.bf16.gmra.mrb[0].mxu0 %v1068
    %v2806 = vpop.f32.mrb[0].mxu0
    %v2807 = vadd.f32 0.0, %v2806
    %v2808 = vpop.f32.mrb[0].mxu0
    %v2809 = vadd.f32 0.0, %v2808
    %v2810 = vpop.f32.mrb[0].mxu0
    %v2811 = vpop.f32.mrb[0].mxu0
    %2812 = vdwg.mxu0
    %2813 = vmatprep.subr.bf16.mxu0 %v2229
    %2814 = vmatpush1.bf16.msra.mxu0 %v2228
    %2815 = vmatprep.subr.bf16.mxu0 %v2237
    %2816 = vmatpush1.bf16.msra.mxu0 %v2236
    %2817 = vmatprep.subr.bf16.mxu0 %v2245
    %2818 = vmatpush1.bf16.msra.mxu0 %v2244
    %2819 = vmatprep.subr.bf16.mxu0 %v2253
    %2820 = vmatpush1.bf16.msra.mxu0 %v2252
    %2821 = vmatprep.subr.bf16.mxu0 %v2261
    %2822 = vmatpush1.bf16.msra.mxu0 %v2260
    %2823 = vmatprep.subr.bf16.mxu0 %v2269
    %2824 = vmatpush1.bf16.msra.mxu0 %v2268
    %2825 = vmatprep.subr.bf16.mxu0 %v2277
    %2826 = vmatpush1.bf16.msra.mxu0 %v2276
    %2827 = vmatprep.subr.bf16.mxu0 %v2285
    %2828 = vmatpush1.bf16.msra.mxu0 %v2284
    %2829 = vmatprep.subr.bf16.mxu0 %v2293
    %2830 = vmatpush1.bf16.msra.mxu0 %v2292
    %2831 = vmatprep.subr.bf16.mxu0 %v2301
    %2832 = vmatpush1.bf16.msra.mxu0 %v2300
    %2833 = vmatprep.subr.bf16.mxu0 %v2309
    %2834 = vmatpush1.bf16.msra.mxu0 %v2308
    %2835 = vmatprep.subr.bf16.mxu0 %v2317
    %2836 = vmatpush1.bf16.msra.mxu0 %v2316
    %2837 = vmatprep.subr.bf16.mxu0 %v2325
    %2838 = vmatpush1.bf16.msra.mxu0 %v2324
    %2839 = vmatprep.subr.bf16.mxu0 %v2333
    %2840 = vmatpush1.bf16.msra.mxu0 %v2332
    %2841 = vmatprep.subr.bf16.mxu0 %v2341
    %2842 = vmatpush1.bf16.msra.mxu0 %v2340
    %2843 = vmatprep.subr.bf16.mxu0 %v2349
    %2844 = vmatpush1.bf16.msra.mxu0 %v2348
    %2845 = vmatprep.mubr.bf16.mxu0 %v1071
    %2846 = vmatmul.mubr.bf16.gmra.mrb[0].mxu0 %v1070
    %v2847 = vpop.f32.mrb[0].mxu0
    %v2848 = vadd.f32 %v2807, %v2847
    %v2849 = vpop.f32.mrb[0].mxu0
    %v2850 = vadd.f32 %v2809, %v2849
    %v2851 = vpop.f32.mrb[0].mxu0
    %v2852 = vpop.f32.mrb[0].mxu0
    %2853 = vdwg.mxu0
    %2854 = vmatprep.subr.bf16.mxu0 %v2103
    %2855 = vmatpush1.bf16.msra.mxu0 %v2102
    %2856 = vmatprep.subr.bf16.mxu0 %v2111
    %2857 = vmatpush1.bf16.msra.mxu0 %v2110
    %2858 = vmatprep.subr.bf16.mxu0 %v2119
    %2859 = vmatpush1.bf16.msra.mxu0 %v2118
    %2860 = vmatprep.subr.bf16.mxu0 %v2127
    %2861 = vmatpush1.bf16.msra.mxu0 %v2126
    %2862 = vmatprep.subr.bf16.mxu0 %v2135
    %2863 = vmatpush1.bf16.msra.mxu0 %v2134
    %2864 = vmatprep.subr.bf16.mxu0 %v2143
    %2865 = vmatpush1.bf16.msra.mxu0 %v2142
    %2866 = vmatprep.subr.bf16.mxu0 %v2151
    %2867 = vmatpush1.bf16.msra.mxu0 %v2150
    %2868 = vmatprep.subr.bf16.mxu0 %v2159
    %2869 = vmatpush1.bf16.msra.mxu0 %v2158
    %2870 = vmatprep.subr.bf16.mxu0 %v2167
    %2871 = vmatpush1.bf16.msra.mxu0 %v2166
    %2872 = vmatprep.subr.bf16.mxu0 %v2175
    %2873 = vmatpush1.bf16.msra.mxu0 %v2174
    %2874 = vmatprep.subr.bf16.mxu0 %v2183
    %2875 = vmatpush1.bf16.msra.mxu0 %v2182
    %2876 = vmatprep.subr.bf16.mxu0 %v2191
    %2877 = vmatpush1.bf16.msra.mxu0 %v2190
    %2878 = vmatprep.subr.bf16.mxu0 %v2199
    %2879 = vmatpush1.bf16.msra.mxu0 %v2198
    %2880 = vmatprep.subr.bf16.mxu0 %v2207
    %2881 = vmatpush1.bf16.msra.mxu0 %v2206
    %2882 = vmatprep.subr.bf16.mxu0 %v2215
    %2883 = vmatpush1.bf16.msra.mxu0 %v2214
    %2884 = vmatprep.subr.bf16.mxu0 %v2223
    %2885 = vmatpush1.bf16.msra.mxu0 %v2222
    %2886 = vmatprep.mubr.bf16.mxu0 %v1069
    %2887 = vmatmul.mubr.bf16.gmra.mrb[0].mxu0 %v1068
    %v2888 = vpop.f32.mrb[0].mxu0
    %v2889 = vadd.f32 0.0, %v2888
    %v2890 = vpop.f32.mrb[0].mxu0
    %v2891 = vadd.f32 0.0, %v2890
    %v2892 = vpop.f32.mrb[0].mxu0
    %v2893 = vpop.f32.mrb[0].mxu0
    %2894 = vdwg.mxu0
    %2895 = vmatprep.subr.bf16.mxu0 %v2231
    %2896 = vmatpush1.bf16.msra.mxu0 %v2230
    %2897 = vmatprep.subr.bf16.mxu0 %v2239
    %2898 = vmatpush1.bf16.msra.mxu0 %v2238
    %2899 = vmatprep.subr.bf16.mxu0 %v2247
    %2900 = vmatpush1.bf16.msra.mxu0 %v2246
    %2901 = vmatprep.subr.bf16.mxu0 %v2255
    %2902 = vmatpush1.bf16.msra.mxu0 %v2254
    %2903 = vmatprep.subr.bf16.mxu0 %v2263
    %2904 = vmatpush1.bf16.msra.mxu0 %v2262
    %2905 = vmatprep.subr.bf16.mxu0 %v2271
    %2906 = vmatpush1.bf16.msra.mxu0 %v2270
    %2907 = vmatprep.subr.bf16.mxu0 %v2279
    %2908 = vmatpush1.bf16.msra.mxu0 %v2278
    %2909 = vmatprep.subr.bf16.mxu0 %v2287
    %2910 = vmatpush1.bf16.msra.mxu0 %v2286
    %2911 = vmatprep.subr.bf16.mxu0 %v2295
    %2912 = vmatpush1.bf16.msra.mxu0 %v2294
    %2913 = vmatprep.subr.bf16.mxu0 %v2303
    %2914 = vmatpush1.bf16.msra.mxu0 %v2302
    %2915 = vmatprep.subr.bf16.mxu0 %v2311
    %2916 = vmatpush1.bf16.msra.mxu0 %v2310
    %2917 = vmatprep.subr.bf16.mxu0 %v2319
    %2918 = vmatpush1.bf16.msra.mxu0 %v2318
    %2919 = vmatprep.subr.bf16.mxu0 %v2327
    %2920 = vmatpush1.bf16.msra.mxu0 %v2326
    %2921 = vmatprep.subr.bf16.mxu0 %v2335
    %2922 = vmatpush1.bf16.msra.mxu0 %v2334
    %2923 = vmatprep.subr.bf16.mxu0 %v2343
    %2924 = vmatpush1.bf16.msra.mxu0 %v2342
    %2925 = vmatprep.subr.bf16.mxu0 %v2351
    %2926 = vmatpush1.bf16.msra.mxu0 %v2350
    %2927 = vmatprep.mubr.bf16.mxu0 %v1071
    %2928 = vmatmul.mubr.bf16.gmra.mrb[0].mxu0 %v1070
    %v2929 = vpop.f32.mrb[0].mxu0
    %v2930 = vadd.f32 %v2889, %v2929
    %v2931 = vpop.f32.mrb[0].mxu0
    %v2932 = vadd.f32 %v2891, %v2931
    %v2933 = vpop.f32.mrb[0].mxu0
    %v2934 = vpop.f32.mrb[0].mxu0
    %2935 = vdwg.mxu0
    %v2936 = vld [vmem:[#allocation12] sm:$0xff]
    %v2937 = vld [vmem:[#allocation13] sm:$0xff]
    %v2938 = vrot.slane %v2684, 4
    %v2939 = vadd.f32 %v2684, %v2938
    %v2940 = vrot.slane %v2939, 2
    %v2941 = vadd.f32 %v2939, %v2940
    %v2942 = vrot.slane %v2941, 1
    %v2943 = vadd.f32 %v2941, %v2942
    %v2944 = vrot.slane %v2686, 4
    %v2945 = vadd.f32 %v2686, %v2944
    %v2946 = vrot.slane %v2945, 2
    %v2947 = vadd.f32 %v2945, %v2946
    %v2948 = vrot.slane %v2947, 1
    %v2949 = vadd.f32 %v2947, %v2948
    %v2950 = vrot.slane %v2766, 4
    %v2951 = vadd.f32 %v2766, %v2950
    %v2952 = vrot.slane %v2951, 2
    %v2953 = vadd.f32 %v2951, %v2952
    %v2954 = vrot.slane %v2953, 1
    %v2955 = vadd.f32 %v2953, %v2954
    %v2956 = vrot.slane %v2768, 4
    %v2957 = vadd.f32 %v2768, %v2956
    %v2958 = vrot.slane %v2957, 2
    %v2959 = vadd.f32 %v2957, %v2958
    %v2960 = vrot.slane %v2959, 1
    %v2961 = vadd.f32 %v2959, %v2960
    %v2962 = vrot.slane %v2848, 4
    %v2963 = vadd.f32 %v2848, %v2962
    %v2964 = vrot.slane %v2963, 2
    %v2965 = vadd.f32 %v2963, %v2964
    %v2966 = vrot.slane %v2965, 1
    %v2967 = vadd.f32 %v2965, %v2966
    %v2968 = vrot.slane %v2850, 4
    %v2969 = vadd.f32 %v2850, %v2968
    %v2970 = vrot.slane %v2969, 2
    %v2971 = vadd.f32 %v2969, %v2970
    %v2972 = vrot.slane %v2971, 1
    %v2973 = vadd.f32 %v2971, %v2972
    %v2974 = vrot.slane %v2930, 4
    %v2975 = vadd.f32 %v2930, %v2974
    %v2976 = vrot.slane %v2975, 2
    %v2977 = vadd.f32 %v2975, %v2976
    %v2978 = vrot.slane %v2977, 1
    %v2979 = vadd.f32 %v2977, %v2978
    %v2980 = vrot.slane %v2932, 4
    %v2981 = vadd.f32 %v2932, %v2980
    %v2982 = vrot.slane %v2981, 2
    %v2983 = vadd.f32 %v2981, %v2982
    %v2984 = vrot.slane %v2983, 1
    %v2985 = vadd.f32 %v2983, %v2984
    %v2986 = vmul.f32 %v2943, %v413
    %v2987 = vmul.f32 %v2949, %v413
    %v2988 = vmul.f32 %v2955, %v413
    %v2989 = vmul.f32 %v2961, %v413
    %v2990 = vmul.f32 %v2967, %v413
    %v2991 = vmul.f32 %v2973, %v413
    %v2992 = vmul.f32 %v2979, %v413
    %v2993 = vmul.f32 %v2985, %v413
    %v2994 = vsub.f32 %v2684, %v2986
    %v2995 = vsub.f32 %v2686, %v2987
    %v2996 = vsub.f32 %v2766, %v2988
    %v2997 = vsub.f32 %v2768, %v2989
    %v2998 = vsub.f32 %v2848, %v2990
    %v2999 = vsub.f32 %v2850, %v2991
    %v3000 = vsub.f32 %v2930, %v2992
    %v3001 = vsub.f32 %v2932, %v2993
    %v3002 = vmul.f32 %v2994, %v2994
    %v3003 = vmul.f32 %v2995, %v2995
    %v3004 = vmul.f32 %v2996, %v2996
    %v3005 = vmul.f32 %v2997, %v2997
    %v3006 = vmul.f32 %v2998, %v2998
    %v3007 = vmul.f32 %v2999, %v2999
    %v3008 = vmul.f32 %v3000, %v3000
    %v3009 = vmul.f32 %v3001, %v3001
    %v3010 = vrot.slane %v3002, 4
    %v3011 = vadd.f32 %v3002, %v3010
    %v3012 = vrot.slane %v3011, 2
    %v3013 = vadd.f32 %v3011, %v3012
    %v3014 = vrot.slane %v3013, 1
    %v3015 = vadd.f32 %v3013, %v3014
    %v3016 = vrot.slane %v3003, 4
    %v3017 = vadd.f32 %v3003, %v3016
    %v3018 = vrot.slane %v3017, 2
    %v3019 = vadd.f32 %v3017, %v3018
    %v3020 = vrot.slane %v3019, 1
    %v3021 = vadd.f32 %v3019, %v3020
    %v3022 = vrot.slane %v3004, 4
    %v3023 = vadd.f32 %v3004, %v3022
    %v3024 = vrot.slane %v3023, 2
    %v3025 = vadd.f32 %v3023, %v3024
    %v3026 = vrot.slane %v3025, 1
    %v3027 = vadd.f32 %v3025, %v3026
    %v3028 = vrot.slane %v3005, 4
    %v3029 = vadd.f32 %v3005, %v3028
    %v3030 = vrot.slane %v3029, 2
    %v3031 = vadd.f32 %v3029, %v3030
    %v3032 = vrot.slane %v3031, 1
    %v3033 = vadd.f32 %v3031, %v3032
    %v3034 = vrot.slane %v3006, 4
    %v3035 = vadd.f32 %v3006, %v3034
    %v3036 = vrot.slane %v3035, 2
    %v3037 = vadd.f32 %v3035, %v3036
    %v3038 = vrot.slane %v3037, 1
    %v3039 = vadd.f32 %v3037, %v3038
    %v3040 = vrot.slane %v3007, 4
    %v3041 = vadd.f32 %v3007, %v3040
    %v3042 = vrot.slane %v3041, 2
    %v3043 = vadd.f32 %v3041, %v3042
    %v3044 = vrot.slane %v3043, 1
    %v3045 = vadd.f32 %v3043, %v3044
    %v3046 = vrot.slane %v3008, 4
    %v3047 = vadd.f32 %v3008, %v3046
    %v3048 = vrot.slane %v3047, 2
    %v3049 = vadd.f32 %v3047, %v3048
    %v3050 = vrot.slane %v3049, 1
    %v3051 = vadd.f32 %v3049, %v3050
    %v3052 = vrot.slane %v3009, 4
    %v3053 = vadd.f32 %v3009, %v3052
    %v3054 = vrot.slane %v3053, 2
    %v3055 = vadd.f32 %v3053, %v3054
    %v3056 = vrot.slane %v3055, 1
    %v3057 = vadd.f32 %v3055, %v3056
    %v3058 = vmul.f32 %v3015, %v413
    %v3059 = vmul.f32 %v3021, %v413
    %v3060 = vmul.f32 %v3027, %v413
    %v3061 = vmul.f32 %v3033, %v413
    %v3062 = vmul.f32 %v3039, %v413
    %v3063 = vmul.f32 %v3045, %v413
    %v3064 = vmul.f32 %v3051, %v413
    %v3065 = vmul.f32 %v3057, %v413
    %v3066 = vadd.f32 %v3058, 1e-05
    %v3067 = vadd.f32 %v3059, 1e-05
    %v3068 = vadd.f32 %v3060, 1e-05
    %v3069 = vadd.f32 %v3061, 1e-05
    %v3070 = vadd.f32 %v3062, 1e-05
    %v3071 = vadd.f32 %v3063, 1e-05
    %v3072 = vadd.f32 %v3064, 1e-05
    %v3073 = vadd.f32 %v3065, 1e-05
    %v3074 = vrsqrt.pop %v3066
    %v3075 = vrsqrt.pop %v3067
    %v3076 = vrsqrt.pop %v3068
    %v3077 = vrsqrt.pop %v3069
    %v3078 = vrsqrt.pop %v3070
    %v3079 = vrsqrt.pop %v3071
    %v3080 = vrsqrt.pop %v3072
    %v3081 = vrsqrt.pop %v3073
    %v3082 = vmul.f32 %v2994, %v3074
    %v3083 = vmul.f32 %v2995, %v3075
    %v3084 = vmul.f32 %v2996, %v3076
    %v3085 = vmul.f32 %v2997, %v3077
    %v3086 = vmul.f32 %v2998, %v3078
    %v3087 = vmul.f32 %v2999, %v3079
    %v3088 = vmul.f32 %v3000, %v3080
    %v3089 = vmul.f32 %v3001, %v3081
    %v3091 = vlaneseq
    %v3092 = vshrl.u32 %v3091, 7
    %v3093 = vsub.s32 0, %v3092
    %v3094 = vrot.slane %v2936, %v3093
    %v3095 = vlaneseq
    %v3096 = vshrl.u32 %v3095, 7
    %v3097 = vsub.s32 1, %v3096
    %v3098 = vrot.slane %v2936, %v3097
    %v3099 = vlaneseq
    %v3100 = vshrl.u32 %v3099, 7
    %v3101 = vsub.s32 2, %v3100
    %v3102 = vrot.slane %v2936, %v3101
    %v3103 = vlaneseq
    %v3104 = vshrl.u32 %v3103, 7
    %v3105 = vsub.s32 3, %v3104
    %v3106 = vrot.slane %v2936, %v3105
    %v3107 = vlaneseq
    %v3108 = vshrl.u32 %v3107, 7
    %v3109 = vsub.s32 4, %v3108
    %v3110 = vrot.slane %v2936, %v3109
    %v3111 = vlaneseq
    %v3112 = vshrl.u32 %v3111, 7
    %v3113 = vsub.s32 5, %v3112
    %v3114 = vrot.slane %v2936, %v3113
    %v3115 = vlaneseq
    %v3116 = vshrl.u32 %v3115, 7
    %v3117 = vsub.s32 6, %v3116
    %v3118 = vrot.slane %v2936, %v3117
    %v3119 = vlaneseq
    %v3120 = vshrl.u32 %v3119, 7
    %v3121 = vsub.s32 7, %v3120
    %v3122 = vrot.slane %v2936, %v3121
    %v3131 = vmul.f32 %v3082, %v3094
    %v3132 = vmul.f32 %v3083, %v3098
    %v3133 = vmul.f32 %v3084, %v3102
    %v3134 = vmul.f32 %v3085, %v3106
    %v3135 = vmul.f32 %v3086, %v3110
    %v3136 = vmul.f32 %v3087, %v3114
    %v3137 = vmul.f32 %v3088, %v3118
    %v3138 = vmul.f32 %v3089, %v3122
    %v3140 = vlaneseq
    %v3141 = vshrl.u32 %v3140, 7
    %v3142 = vsub.s32 0, %v3141
    %v3143 = vrot.slane %v2937, %v3142
    %v3144 = vlaneseq
    %v3145 = vshrl.u32 %v3144, 7
    %v3146 = vsub.s32 1, %v3145
    %v3147 = vrot.slane %v2937, %v3146
    %v3148 = vlaneseq
    %v3149 = vshrl.u32 %v3148, 7
    %v3150 = vsub.s32 2, %v3149
    %v3151 = vrot.slane %v2937, %v3150
    %v3152 = vlaneseq
    %v3153 = vshrl.u32 %v3152, 7
    %v3154 = vsub.s32 3, %v3153
    %v3155 = vrot.slane %v2937, %v3154
    %v3156 = vlaneseq
    %v3157 = vshrl.u32 %v3156, 7
    %v3158 = vsub.s32 4, %v3157
    %v3159 = vrot.slane %v2937, %v3158
    %v3160 = vlaneseq
    %v3161 = vshrl.u32 %v3160, 7
    %v3162 = vsub.s32 5, %v3161
    %v3163 = vrot.slane %v2937, %v3162
    %v3164 = vlaneseq
    %v3165 = vshrl.u32 %v3164, 7
    %v3166 = vsub.s32 6, %v3165
    %v3167 = vrot.slane %v2937, %v3166
    %v3168 = vlaneseq
    %v3169 = vshrl.u32 %v3168, 7
    %v3170 = vsub.s32 7, %v3169
    %v3171 = vrot.slane %v2937, %v3170
    %v3180 = vadd.f32 %v3131, %v3143
    %v3181 = vadd.f32 %v3132, %v3147
    %v3182 = vadd.f32 %v3133, %v3151
    %v3183 = vadd.f32 %v3134, %v3155
    %v3184 = vadd.f32 %v3135, %v3159
    %v3185 = vadd.f32 %v3136, %v3163
    %v3186 = vadd.f32 %v3137, %v3167
    %v3187 = vadd.f32 %v3138, %v3171
    %v3188 = vmax.f32 %v3180, 0.0
    %v3189 = vmax.f32 %v3181, 0.0
    %v3190 = vmax.f32 %v3182, 0.0
    %v3191 = vmax.f32 %v3183, 0.0
    %v3192 = vmax.f32 %v3184, 0.0
    %v3193 = vmax.f32 %v3185, 0.0
    %v3194 = vmax.f32 %v3186, 0.0
    %v3195 = vmax.f32 %v3187, 0.0
    %v3196 = vpack.c.bf16 %v3188, %v3188
    %v3197 = vpack.c.bf16 %v3189, %v3189
    %v3198 = vpack.c.bf16 %v3190, %v3190
    %v3199 = vpack.c.bf16 %v3191, %v3191
    %v3200 = vpack.c.bf16 %v3192, %v3192
    %v3201 = vpack.c.bf16 %v3193, %v3193
    %v3202 = vpack.c.bf16 %v3194, %v3194
    %v3203 = vpack.c.bf16 %v3195, %v3195
    %v3204 = vld [vmem:[#allocation15] sm:$0xff]
    %v3205 = vld [vmem:[#allocation15 + $0x8] sm:$0xff]
    %v3206 = vld [vmem:[#allocation15 + $0x10] sm:$0xff]
    %v3207 = vld [vmem:[#allocation15 + $0x18] sm:$0xff]
    %v3208 = vld [vmem:[#allocation15 + $0x20] sm:$0xff]
    %v3209 = vld [vmem:[#allocation15 + $0x28] sm:$0xff]
    %v3210 = vld [vmem:[#allocation15 + $0x30] sm:$0xff]
    %v3211 = vld [vmem:[#allocation15 + $0x38] sm:$0xff]
    %v3212 = vld [vmem:[#allocation15 + $0x40] sm:$0xff]
    %v3213 = vld [vmem:[#allocation15 + $0x48] sm:$0xff]
    %v3214 = vld [vmem:[#allocation15 + $0x50] sm:$0xff]
    %v3215 = vld [vmem:[#allocation15 + $0x58] sm:$0xff]
    %v3216 = vld [vmem:[#allocation15 + $0x60] sm:$0xff]
    %v3217 = vld [vmem:[#allocation15 + $0x68] sm:$0xff]
    %v3218 = vld [vmem:[#allocation15 + $0x70] sm:$0xff]
    %v3219 = vld [vmem:[#allocation15 + $0x78] sm:$0xff]
    %v3220 = vld [vmem:[#allocation15 + $0x80] sm:$0xff]
    %v3221 = vld [vmem:[#allocation15 + $0x88] sm:$0xff]
    %v3222 = vld [vmem:[#allocation15 + $0x90] sm:$0xff]
    %v3223 = vld [vmem:[#allocation15 + $0x98] sm:$0xff]
    %v3224 = vld [vmem:[#allocation15 + $0xa0] sm:$0xff]
    %v3225 = vld [vmem:[#allocation15 + $0xa8] sm:$0xff]
    %v3226 = vld [vmem:[#allocation15 + $0xb0] sm:$0xff]
    %v3227 = vld [vmem:[#allocation15 + $0xb8] sm:$0xff]
    %v3228 = vld [vmem:[#allocation15 + $0xc0] sm:$0xff]
    %v3229 = vld [vmem:[#allocation15 + $0xc8] sm:$0xff]
    %v3230 = vld [vmem:[#allocation15 + $0xd0] sm:$0xff]
    %v3231 = vld [vmem:[#allocation15 + $0xd8] sm:$0xff]
    %v3232 = vld [vmem:[#allocation15 + $0xe0] sm:$0xff]
    %v3233 = vld [vmem:[#allocation15 + $0xe8] sm:$0xff]
    %v3234 = vld [vmem:[#allocation15 + $0xf0] sm:$0xff]
    %v3235 = vld [vmem:[#allocation15 + $0xf8] sm:$0xff]
    %v3236 = vld [vmem:[#allocation15 + $0x100] sm:$0xff]
    %v3237 = vld [vmem:[#allocation15 + $0x108] sm:$0xff]
    %v3238 = vld [vmem:[#allocation15 + $0x110] sm:$0xff]
    %v3239 = vld [vmem:[#allocation15 + $0x118] sm:$0xff]
    %v3240 = vld [vmem:[#allocation15 + $0x120] sm:$0xff]
    %v3241 = vld [vmem:[#allocation15 + $0x128] sm:$0xff]
    %v3242 = vld [vmem:[#allocation15 + $0x130] sm:$0xff]
    %v3243 = vld [vmem:[#allocation15 + $0x138] sm:$0xff]
    %v3244 = vld [vmem:[#allocation15 + $0x140] sm:$0xff]
    %v3245 = vld [vmem:[#allocation15 + $0x148] sm:$0xff]
    %v3246 = vld [vmem:[#allocation15 + $0x150] sm:$0xff]
    %v3247 = vld [vmem:[#allocation15 + $0x158] sm:$0xff]
    %v3248 = vld [vmem:[#allocation15 + $0x160] sm:$0xff]
    %v3249 = vld [vmem:[#allocation15 + $0x168] sm:$0xff]
    %v3250 = vld [vmem:[#allocation15 + $0x170] sm:$0xff]
    %v3251 = vld [vmem:[#allocation15 + $0x178] sm:$0xff]
    %v3252 = vld [vmem:[#allocation15 + $0x180] sm:$0xff]
    %v3253 = vld [vmem:[#allocation15 + $0x188] sm:$0xff]
    %v3254 = vld [vmem:[#allocation15 + $0x190] sm:$0xff]
    %v3255 = vld [vmem:[#allocation15 + $0x198] sm:$0xff]
    %v3256 = vld [vmem:[#allocation15 + $0x1a0] sm:$0xff]
    %v3257 = vld [vmem:[#allocation15 + $0x1a8] sm:$0xff]
    %v3258 = vld [vmem:[#allocation15 + $0x1b0] sm:$0xff]
    %v3259 = vld [vmem:[#allocation15 + $0x1b8] sm:$0xff]
    %v3260 = vld [vmem:[#allocation15 + $0x1c0] sm:$0xff]
    %v3261 = vld [vmem:[#allocation15 + $0x1c8] sm:$0xff]
    %v3262 = vld [vmem:[#allocation15 + $0x1d0] sm:$0xff]
    %v3263 = vld [vmem:[#allocation15 + $0x1d8] sm:$0xff]
    %v3264 = vld [vmem:[#allocation15 + $0x1e0] sm:$0xff]
    %v3265 = vld [vmem:[#allocation15 + $0x1e8] sm:$0xff]
    %v3266 = vld [vmem:[#allocation15 + $0x1f0] sm:$0xff]
    %v3267 = vld [vmem:[#allocation15 + $0x1f8] sm:$0xff]
    %v3268 = vld [vmem:[#allocation15 + $0x200] sm:$0xff]
    %v3269 = vld [vmem:[#allocation15 + $0x208] sm:$0xff]
    %v3270 = vld [vmem:[#allocation15 + $0x210] sm:$0xff]
    %v3271 = vld [vmem:[#allocation15 + $0x218] sm:$0xff]
    %v3272 = vld [vmem:[#allocation15 + $0x220] sm:$0xff]
    %v3273 = vld [vmem:[#allocation15 + $0x228] sm:$0xff]
    %v3274 = vld [vmem:[#allocation15 + $0x230] sm:$0xff]
    %v3275 = vld [vmem:[#allocation15 + $0x238] sm:$0xff]
    %v3276 = vld [vmem:[#allocation15 + $0x240] sm:$0xff]
    %v3277 = vld [vmem:[#allocation15 + $0x248] sm:$0xff]
    %v3278 = vld [vmem:[#allocation15 + $0x250] sm:$0xff]
    %v3279 = vld [vmem:[#allocation15 + $0x258] sm:$0xff]
    %v3280 = vld [vmem:[#allocation15 + $0x260] sm:$0xff]
    %v3281 = vld [vmem:[#allocation15 + $0x268] sm:$0xff]
    %v3282 = vld [vmem:[#allocation15 + $0x270] sm:$0xff]
    %v3283 = vld [vmem:[#allocation15 + $0x278] sm:$0xff]
    %v3284 = vld [vmem:[#allocation15 + $0x280] sm:$0xff]
    %v3285 = vld [vmem:[#allocation15 + $0x288] sm:$0xff]
    %v3286 = vld [vmem:[#allocation15 + $0x290] sm:$0xff]
    %v3287 = vld [vmem:[#allocation15 + $0x298] sm:$0xff]
    %v3288 = vld [vmem:[#allocation15 + $0x2a0] sm:$0xff]
    %v3289 = vld [vmem:[#allocation15 + $0x2a8] sm:$0xff]
    %v3290 = vld [vmem:[#allocation15 + $0x2b0] sm:$0xff]
    %v3291 = vld [vmem:[#allocation15 + $0x2b8] sm:$0xff]
    %v3292 = vld [vmem:[#allocation15 + $0x2c0] sm:$0xff]
    %v3293 = vld [vmem:[#allocation15 + $0x2c8] sm:$0xff]
    %v3294 = vld [vmem:[#allocation15 + $0x2d0] sm:$0xff]
    %v3295 = vld [vmem:[#allocation15 + $0x2d8] sm:$0xff]
    %v3296 = vld [vmem:[#allocation15 + $0x2e0] sm:$0xff]
    %v3297 = vld [vmem:[#allocation15 + $0x2e8] sm:$0xff]
    %v3298 = vld [vmem:[#allocation15 + $0x2f0] sm:$0xff]
    %v3299 = vld [vmem:[#allocation15 + $0x2f8] sm:$0xff]
    %v3300 = vld [vmem:[#allocation15 + $0x300] sm:$0xff]
    %v3301 = vld [vmem:[#allocation15 + $0x308] sm:$0xff]
    %v3302 = vld [vmem:[#allocation15 + $0x310] sm:$0xff]
    %v3303 = vld [vmem:[#allocation15 + $0x318] sm:$0xff]
    %v3304 = vld [vmem:[#allocation15 + $0x320] sm:$0xff]
    %v3305 = vld [vmem:[#allocation15 + $0x328] sm:$0xff]
    %v3306 = vld [vmem:[#allocation15 + $0x330] sm:$0xff]
    %v3307 = vld [vmem:[#allocation15 + $0x338] sm:$0xff]
    %v3308 = vld [vmem:[#allocation15 + $0x340] sm:$0xff]
    %v3309 = vld [vmem:[#allocation15 + $0x348] sm:$0xff]
    %v3310 = vld [vmem:[#allocation15 + $0x350] sm:$0xff]
    %v3311 = vld [vmem:[#allocation15 + $0x358] sm:$0xff]
    %v3312 = vld [vmem:[#allocation15 + $0x360] sm:$0xff]
    %v3313 = vld [vmem:[#allocation15 + $0x368] sm:$0xff]
    %v3314 = vld [vmem:[#allocation15 + $0x370] sm:$0xff]
    %v3315 = vld [vmem:[#allocation15 + $0x378] sm:$0xff]
    %v3316 = vld [vmem:[#allocation15 + $0x380] sm:$0xff]
    %v3317 = vld [vmem:[#allocation15 + $0x388] sm:$0xff]
    %v3318 = vld [vmem:[#allocation15 + $0x390] sm:$0xff]
    %v3319 = vld [vmem:[#allocation15 + $0x398] sm:$0xff]
    %v3320 = vld [vmem:[#allocation15 + $0x3a0] sm:$0xff]
    %v3321 = vld [vmem:[#allocation15 + $0x3a8] sm:$0xff]
    %v3322 = vld [vmem:[#allocation15 + $0x3b0] sm:$0xff]
    %v3323 = vld [vmem:[#allocation15 + $0x3b8] sm:$0xff]
    %v3324 = vld [vmem:[#allocation15 + $0x3c0] sm:$0xff]
    %v3325 = vld [vmem:[#allocation15 + $0x3c8] sm:$0xff]
    %v3326 = vld [vmem:[#allocation15 + $0x3d0] sm:$0xff]
    %v3327 = vld [vmem:[#allocation15 + $0x3d8] sm:$0xff]
    %v3328 = vld [vmem:[#allocation15 + $0x3e0] sm:$0xff]
    %v3329 = vld [vmem:[#allocation15 + $0x3e8] sm:$0xff]
    %v3330 = vld [vmem:[#allocation15 + $0x3f0] sm:$0xff]
    %v3331 = vld [vmem:[#allocation15 + $0x3f8] sm:$0xff]
    %v3332 = vld [vmem:[#allocation16] sm:$0x3]
    %v3334 = vlaneseq
    %v3335 = vshrl.u32 %v3334, 7
    %v3336 = vsub.s32 0, %v3335
    %v3337 = vrot.slane %v3332, %v3336
    %v3338 = vlaneseq
    %v3339 = vshrl.u32 %v3338, 7
    %v3340 = vsub.s32 1, %v3339
    %v3341 = vrot.slane %v3332, %v3340
    %v3472 = vunpack.c.l.b16 %v3204
    %v3473 = vunpack.c.h.b16 %v3204
    %v3474 = vunpack.c.l.b16 %v3205
    %v3475 = vunpack.c.h.b16 %v3205
    %v3476 = vunpack.c.l.b16 %v3206
    %v3477 = vunpack.c.h.b16 %v3206
    %v3478 = vunpack.c.l.b16 %v3207
    %v3479 = vunpack.c.h.b16 %v3207
    %v3480 = vunpack.c.l.b16 %v3208
    %v3481 = vunpack.c.h.b16 %v3208
    %v3482 = vunpack.c.l.b16 %v3209
    %v3483 = vunpack.c.h.b16 %v3209
    %v3484 = vunpack.c.l.b16 %v3210
    %v3485 = vunpack.c.h.b16 %v3210
    %v3486 = vunpack.c.l.b16 %v3211
    %v3487 = vunpack.c.h.b16 %v3211
    %v3488 = vunpack.c.l.b16 %v3212
    %v3489 = vunpack.c.h.b16 %v3212
    %v3490 = vunpack.c.l.b16 %v3213
    %v3491 = vunpack.c.h.b16 %v3213
    %v3492 = vunpack.c.l.b16 %v3214
    %v3493 = vunpack.c.h.b16 %v3214
    %v3494 = vunpack.c.l.b16 %v3215
    %v3495 = vunpack.c.h.b16 %v3215
    %v3496 = vunpack.c.l.b16 %v3216
    %v3497 = vunpack.c.h.b16 %v3216
    %v3498 = vunpack.c.l.b16 %v3217
    %v3499 = vunpack.c.h.b16 %v3217
    %v3500 = vunpack.c.l.b16 %v3218
    %v3501 = vunpack.c.h.b16 %v3218
    %v3502 = vunpack.c.l.b16 %v3219
    %v3503 = vunpack.c.h.b16 %v3219
    %v3504 = vunpack.c.l.b16 %v3220
    %v3505 = vunpack.c.h.b16 %v3220
    %v3506 = vunpack.c.l.b16 %v3221
    %v3507 = vunpack.c.h.b16 %v3221
    %v3508 = vunpack.c.l.b16 %v3222
    %v3509 = vunpack.c.h.b16 %v3222
    %v3510 = vunpack.c.l.b16 %v3223
    %v3511 = vunpack.c.h.b16 %v3223
    %v3512 = vunpack.c.l.b16 %v3224
    %v3513 = vunpack.c.h.b16 %v3224
    %v3514 = vunpack.c.l.b16 %v3225
    %v3515 = vunpack.c.h.b16 %v3225
    %v3516 = vunpack.c.l.b16 %v3226
    %v3517 = vunpack.c.h.b16 %v3226
    %v3518 = vunpack.c.l.b16 %v3227
    %v3519 = vunpack.c.h.b16 %v3227
    %v3520 = vunpack.c.l.b16 %v3228
    %v3521 = vunpack.c.h.b16 %v3228
    %v3522 = vunpack.c.l.b16 %v3229
    %v3523 = vunpack.c.h.b16 %v3229
    %v3524 = vunpack.c.l.b16 %v3230
    %v3525 = vunpack.c.h.b16 %v3230
    %v3526 = vunpack.c.l.b16 %v3231
    %v3527 = vunpack.c.h.b16 %v3231
    %v3528 = vunpack.c.l.b16 %v3232
    %v3529 = vunpack.c.h.b16 %v3232
    %v3530 = vunpack.c.l.b16 %v3233
    %v3531 = vunpack.c.h.b16 %v3233
    %v3532 = vunpack.c.l.b16 %v3234
    %v3533 = vunpack.c.h.b16 %v3234
    %v3534 = vunpack.c.l.b16 %v3235
    %v3535 = vunpack.c.h.b16 %v3235
    %v3536 = vunpack.c.l.b16 %v3236
    %v3537 = vunpack.c.h.b16 %v3236
    %v3538 = vunpack.c.l.b16 %v3237
    %v3539 = vunpack.c.h.b16 %v3237
    %v3540 = vunpack.c.l.b16 %v3238
    %v3541 = vunpack.c.h.b16 %v3238
    %v3542 = vunpack.c.l.b16 %v3239
    %v3543 = vunpack.c.h.b16 %v3239
    %v3544 = vunpack.c.l.b16 %v3240
    %v3545 = vunpack.c.h.b16 %v3240
    %v3546 = vunpack.c.l.b16 %v3241
    %v3547 = vunpack.c.h.b16 %v3241
    %v3548 = vunpack.c.l.b16 %v3242
    %v3549 = vunpack.c.h.b16 %v3242
    %v3550 = vunpack.c.l.b16 %v3243
    %v3551 = vunpack.c.h.b16 %v3243
    %v3552 = vunpack.c.l.b16 %v3244
    %v3553 = vunpack.c.h.b16 %v3244
    %v3554 = vunpack.c.l.b16 %v3245
    %v3555 = vunpack.c.h.b16 %v3245
    %v3556 = vunpack.c.l.b16 %v3246
    %v3557 = vunpack.c.h.b16 %v3246
    %v3558 = vunpack.c.l.b16 %v3247
    %v3559 = vunpack.c.h.b16 %v3247
    %v3560 = vunpack.c.l.b16 %v3248
    %v3561 = vunpack.c.h.b16 %v3248
    %v3562 = vunpack.c.l.b16 %v3249
    %v3563 = vunpack.c.h.b16 %v3249
    %v3564 = vunpack.c.l.b16 %v3250
    %v3565 = vunpack.c.h.b16 %v3250
    %v3566 = vunpack.c.l.b16 %v3251
    %v3567 = vunpack.c.h.b16 %v3251
    %v3568 = vunpack.c.l.b16 %v3252
    %v3569 = vunpack.c.h.b16 %v3252
    %v3570 = vunpack.c.l.b16 %v3253
    %v3571 = vunpack.c.h.b16 %v3253
    %v3572 = vunpack.c.l.b16 %v3254
    %v3573 = vunpack.c.h.b16 %v3254
    %v3574 = vunpack.c.l.b16 %v3255
    %v3575 = vunpack.c.h.b16 %v3255
    %v3576 = vunpack.c.l.b16 %v3256
    %v3577 = vunpack.c.h.b16 %v3256
    %v3578 = vunpack.c.l.b16 %v3257
    %v3579 = vunpack.c.h.b16 %v3257
    %v3580 = vunpack.c.l.b16 %v3258
    %v3581 = vunpack.c.h.b16 %v3258
    %v3582 = vunpack.c.l.b16 %v3259
    %v3583 = vunpack.c.h.b16 %v3259
    %v3584 = vunpack.c.l.b16 %v3260
    %v3585 = vunpack.c.h.b16 %v3260
    %v3586 = vunpack.c.l.b16 %v3261
    %v3587 = vunpack.c.h.b16 %v3261
    %v3588 = vunpack.c.l.b16 %v3262
    %v3589 = vunpack.c.h.b16 %v3262
    %v3590 = vunpack.c.l.b16 %v3263
    %v3591 = vunpack.c.h.b16 %v3263
    %v3592 = vunpack.c.l.b16 %v3264
    %v3593 = vunpack.c.h.b16 %v3264
    %v3594 = vunpack.c.l.b16 %v3265
    %v3595 = vunpack.c.h.b16 %v3265
    %v3596 = vunpack.c.l.b16 %v3266
    %v3597 = vunpack.c.h.b16 %v3266
    %v3598 = vunpack.c.l.b16 %v3267
    %v3599 = vunpack.c.h.b16 %v3267
    %v3600 = vunpack.c.l.b16 %v3268
    %v3601 = vunpack.c.h.b16 %v3268
    %v3602 = vunpack.c.l.b16 %v3269
    %v3603 = vunpack.c.h.b16 %v3269
    %v3604 = vunpack.c.l.b16 %v3270
    %v3605 = vunpack.c.h.b16 %v3270
    %v3606 = vunpack.c.l.b16 %v3271
    %v3607 = vunpack.c.h.b16 %v3271
    %v3608 = vunpack.c.l.b16 %v3272
    %v3609 = vunpack.c.h.b16 %v3272
    %v3610 = vunpack.c.l.b16 %v3273
    %v3611 = vunpack.c.h.b16 %v3273
    %v3612 = vunpack.c.l.b16 %v3274
    %v3613 = vunpack.c.h.b16 %v3274
    %v3614 = vunpack.c.l.b16 %v3275
    %v3615 = vunpack.c.h.b16 %v3275
    %v3616 = vunpack.c.l.b16 %v3276
    %v3617 = vunpack.c.h.b16 %v3276
    %v3618 = vunpack.c.l.b16 %v3277
    %v3619 = vunpack.c.h.b16 %v3277
    %v3620 = vunpack.c.l.b16 %v3278
    %v3621 = vunpack.c.h.b16 %v3278
    %v3622 = vunpack.c.l.b16 %v3279
    %v3623 = vunpack.c.h.b16 %v3279
    %v3624 = vunpack.c.l.b16 %v3280
    %v3625 = vunpack.c.h.b16 %v3280
    %v3626 = vunpack.c.l.b16 %v3281
    %v3627 = vunpack.c.h.b16 %v3281
    %v3628 = vunpack.c.l.b16 %v3282
    %v3629 = vunpack.c.h.b16 %v3282
    %v3630 = vunpack.c.l.b16 %v3283
    %v3631 = vunpack.c.h.b16 %v3283
    %v3632 = vunpack.c.l.b16 %v3284
    %v3633 = vunpack.c.h.b16 %v3284
    %v3634 = vunpack.c.l.b16 %v3285
    %v3635 = vunpack.c.h.b16 %v3285
    %v3636 = vunpack.c.l.b16 %v3286
    %v3637 = vunpack.c.h.b16 %v3286
    %v3638 = vunpack.c.l.b16 %v3287
    %v3639 = vunpack.c.h.b16 %v3287
    %v3640 = vunpack.c.l.b16 %v3288
    %v3641 = vunpack.c.h.b16 %v3288
    %v3642 = vunpack.c.l.b16 %v3289
    %v3643 = vunpack.c.h.b16 %v3289
    %v3644 = vunpack.c.l.b16 %v3290
    %v3645 = vunpack.c.h.b16 %v3290
    %v3646 = vunpack.c.l.b16 %v3291
    %v3647 = vunpack.c.h.b16 %v3291
    %v3648 = vunpack.c.l.b16 %v3292
    %v3649 = vunpack.c.h.b16 %v3292
    %v3650 = vunpack.c.l.b16 %v3293
    %v3651 = vunpack.c.h.b16 %v3293
    %v3652 = vunpack.c.l.b16 %v3294
    %v3653 = vunpack.c.h.b16 %v3294
    %v3654 = vunpack.c.l.b16 %v3295
    %v3655 = vunpack.c.h.b16 %v3295
    %v3656 = vunpack.c.l.b16 %v3296
    %v3657 = vunpack.c.h.b16 %v3296
    %v3658 = vunpack.c.l.b16 %v3297
    %v3659 = vunpack.c.h.b16 %v3297
    %v3660 = vunpack.c.l.b16 %v3298
    %v3661 = vunpack.c.h.b16 %v3298
    %v3662 = vunpack.c.l.b16 %v3299
    %v3663 = vunpack.c.h.b16 %v3299
    %v3664 = vunpack.c.l.b16 %v3300
    %v3665 = vunpack.c.h.b16 %v3300
    %v3666 = vunpack.c.l.b16 %v3301
    %v3667 = vunpack.c.h.b16 %v3301
    %v3668 = vunpack.c.l.b16 %v3302
    %v3669 = vunpack.c.h.b16 %v3302
    %v3670 = vunpack.c.l.b16 %v3303
    %v3671 = vunpack.c.h.b16 %v3303
    %v3672 = vunpack.c.l.b16 %v3304
    %v3673 = vunpack.c.h.b16 %v3304
    %v3674 = vunpack.c.l.b16 %v3305
    %v3675 = vunpack.c.h.b16 %v3305
    %v3676 = vunpack.c.l.b16 %v3306
    %v3677 = vunpack.c.h.b16 %v3306
    %v3678 = vunpack.c.l.b16 %v3307
    %v3679 = vunpack.c.h.b16 %v3307
    %v3680 = vunpack.c.l.b16 %v3308
    %v3681 = vunpack.c.h.b16 %v3308
    %v3682 = vunpack.c.l.b16 %v3309
    %v3683 = vunpack.c.h.b16 %v3309
    %v3684 = vunpack.c.l.b16 %v3310
    %v3685 = vunpack.c.h.b16 %v3310
    %v3686 = vunpack.c.l.b16 %v3311
    %v3687 = vunpack.c.h.b16 %v3311
    %v3688 = vunpack.c.l.b16 %v3312
    %v3689 = vunpack.c.h.b16 %v3312
    %v3690 = vunpack.c.l.b16 %v3313
    %v3691 = vunpack.c.h.b16 %v3313
    %v3692 = vunpack.c.l.b16 %v3314
    %v3693 = vunpack.c.h.b16 %v3314
    %v3694 = vunpack.c.l.b16 %v3315
    %v3695 = vunpack.c.h.b16 %v3315
    %v3696 = vunpack.c.l.b16 %v3316
    %v3697 = vunpack.c.h.b16 %v3316
    %v3698 = vunpack.c.l.b16 %v3317
    %v3699 = vunpack.c.h.b16 %v3317
    %v3700 = vunpack.c.l.b16 %v3318
    %v3701 = vunpack.c.h.b16 %v3318
    %v3702 = vunpack.c.l.b16 %v3319
    %v3703 = vunpack.c.h.b16 %v3319
    %v3704 = vunpack.c.l.b16 %v3320
    %v3705 = vunpack.c.h.b16 %v3320
    %v3706 = vunpack.c.l.b16 %v3321
    %v3707 = vunpack.c.h.b16 %v3321
    %v3708 = vunpack.c.l.b16 %v3322
    %v3709 = vunpack.c.h.b16 %v3322
    %v3710 = vunpack.c.l.b16 %v3323
    %v3711 = vunpack.c.h.b16 %v3323
    %v3712 = vunpack.c.l.b16 %v3324
    %v3713 = vunpack.c.h.b16 %v3324
    %v3714 = vunpack.c.l.b16 %v3325
    %v3715 = vunpack.c.h.b16 %v3325
    %v3716 = vunpack.c.l.b16 %v3326
    %v3717 = vunpack.c.h.b16 %v3326
    %v3718 = vunpack.c.l.b16 %v3327
    %v3719 = vunpack.c.h.b16 %v3327
    %v3720 = vunpack.c.l.b16 %v3328
    %v3721 = vunpack.c.h.b16 %v3328
    %v3722 = vunpack.c.l.b16 %v3329
    %v3723 = vunpack.c.h.b16 %v3329
    %v3724 = vunpack.c.l.b16 %v3330
    %v3725 = vunpack.c.h.b16 %v3330
    %v3726 = vunpack.c.l.b16 %v3331
    %v3727 = vunpack.c.h.b16 %v3331
    %v3728 = vpack.c.b16 %v3474, %v3472
    %v3729 = vpack.c.b16 %v3475, %v3473
    %v3730 = vpack.c.b16 %v3478, %v3476
    %v3731 = vpack.c.b16 %v3479, %v3477
    %v3732 = vpack.c.b16 %v3482, %v3480
    %v3733 = vpack.c.b16 %v3483, %v3481
    %v3734 = vpack.c.b16 %v3486, %v3484
    %v3735 = vpack.c.b16 %v3487, %v3485
    %v3736 = vpack.c.b16 %v3490, %v3488
    %v3737 = vpack.c.b16 %v3491, %v3489
    %v3738 = vpack.c.b16 %v3494, %v3492
    %v3739 = vpack.c.b16 %v3495, %v3493
    %v3740 = vpack.c.b16 %v3498, %v3496
    %v3741 = vpack.c.b16 %v3499, %v3497
    %v3742 = vpack.c.b16 %v3502, %v3500
    %v3743 = vpack.c.b16 %v3503, %v3501
    %v3744 = vpack.c.b16 %v3506, %v3504
    %v3745 = vpack.c.b16 %v3507, %v3505
    %v3746 = vpack.c.b16 %v3510, %v3508
    %v3747 = vpack.c.b16 %v3511, %v3509
    %v3748 = vpack.c.b16 %v3514, %v3512
    %v3749 = vpack.c.b16 %v3515, %v3513
    %v3750 = vpack.c.b16 %v3518, %v3516
    %v3751 = vpack.c.b16 %v3519, %v3517
    %v3752 = vpack.c.b16 %v3522, %v3520
    %v3753 = vpack.c.b16 %v3523, %v3521
    %v3754 = vpack.c.b16 %v3526, %v3524
    %v3755 = vpack.c.b16 %v3527, %v3525
    %v3756 = vpack.c.b16 %v3530, %v3528
    %v3757 = vpack.c.b16 %v3531, %v3529
    %v3758 = vpack.c.b16 %v3534, %v3532
    %v3759 = vpack.c.b16 %v3535, %v3533
    %v3760 = vpack.c.b16 %v3538, %v3536
    %v3761 = vpack.c.b16 %v3539, %v3537
    %v3762 = vpack.c.b16 %v3542, %v3540
    %v3763 = vpack.c.b16 %v3543, %v3541
    %v3764 = vpack.c.b16 %v3546, %v3544
    %v3765 = vpack.c.b16 %v3547, %v3545
    %v3766 = vpack.c.b16 %v3550, %v3548
    %v3767 = vpack.c.b16 %v3551, %v3549
    %v3768 = vpack.c.b16 %v3554, %v3552
    %v3769 = vpack.c.b16 %v3555, %v3553
    %v3770 = vpack.c.b16 %v3558, %v3556
    %v3771 = vpack.c.b16 %v3559, %v3557
    %v3772 = vpack.c.b16 %v3562, %v3560
    %v3773 = vpack.c.b16 %v3563, %v3561
    %v3774 = vpack.c.b16 %v3566, %v3564
    %v3775 = vpack.c.b16 %v3567, %v3565
    %v3776 = vpack.c.b16 %v3570, %v3568
    %v3777 = vpack.c.b16 %v3571, %v3569
    %v3778 = vpack.c.b16 %v3574, %v3572
    %v3779 = vpack.c.b16 %v3575, %v3573
    %v3780 = vpack.c.b16 %v3578, %v3576
    %v3781 = vpack.c.b16 %v3579, %v3577
    %v3782 = vpack.c.b16 %v3582, %v3580
    %v3783 = vpack.c.b16 %v3583, %v3581
    %v3784 = vpack.c.b16 %v3586, %v3584
    %v3785 = vpack.c.b16 %v3587, %v3585
    %v3786 = vpack.c.b16 %v3590, %v3588
    %v3787 = vpack.c.b16 %v3591, %v3589
    %v3788 = vpack.c.b16 %v3594, %v3592
    %v3789 = vpack.c.b16 %v3595, %v3593
    %v3790 = vpack.c.b16 %v3598, %v3596
    %v3791 = vpack.c.b16 %v3599, %v3597
    %v3792 = vpack.c.b16 %v3602, %v3600
    %v3793 = vpack.c.b16 %v3603, %v3601
    %v3794 = vpack.c.b16 %v3606, %v3604
    %v3795 = vpack.c.b16 %v3607, %v3605
    %v3796 = vpack.c.b16 %v3610, %v3608
    %v3797 = vpack.c.b16 %v3611, %v3609
    %v3798 = vpack.c.b16 %v3614, %v3612
    %v3799 = vpack.c.b16 %v3615, %v3613
    %v3800 = vpack.c.b16 %v3618, %v3616
    %v3801 = vpack.c.b16 %v3619, %v3617
    %v3802 = vpack.c.b16 %v3622, %v3620
    %v3803 = vpack.c.b16 %v3623, %v3621
    %v3804 = vpack.c.b16 %v3626, %v3624
    %v3805 = vpack.c.b16 %v3627, %v3625
    %v3806 = vpack.c.b16 %v3630, %v3628
    %v3807 = vpack.c.b16 %v3631, %v3629
    %v3808 = vpack.c.b16 %v3634, %v3632
    %v3809 = vpack.c.b16 %v3635, %v3633
    %v3810 = vpack.c.b16 %v3638, %v3636
    %v3811 = vpack.c.b16 %v3639, %v3637
    %v3812 = vpack.c.b16 %v3642, %v3640
    %v3813 = vpack.c.b16 %v3643, %v3641
    %v3814 = vpack.c.b16 %v3646, %v3644
    %v3815 = vpack.c.b16 %v3647, %v3645
    %v3816 = vpack.c.b16 %v3650, %v3648
    %v3817 = vpack.c.b16 %v3651, %v3649
    %v3818 = vpack.c.b16 %v3654, %v3652
    %v3819 = vpack.c.b16 %v3655, %v3653
    %v3820 = vpack.c.b16 %v3658, %v3656
    %v3821 = vpack.c.b16 %v3659, %v3657
    %v3822 = vpack.c.b16 %v3662, %v3660
    %v3823 = vpack.c.b16 %v3663, %v3661
    %v3824 = vpack.c.b16 %v3666, %v3664
    %v3825 = vpack.c.b16 %v3667, %v3665
    %v3826 = vpack.c.b16 %v3670, %v3668
    %v3827 = vpack.c.b16 %v3671, %v3669
    %v3828 = vpack.c.b16 %v3674, %v3672
    %v3829 = vpack.c.b16 %v3675, %v3673
    %v3830 = vpack.c.b16 %v3678, %v3676
    %v3831 = vpack.c.b16 %v3679, %v3677
    %v3832 = vpack.c.b16 %v3682, %v3680
    %v3833 = vpack.c.b16 %v3683, %v3681
    %v3834 = vpack.c.b16 %v3686, %v3684
    %v3835 = vpack.c.b16 %v3687, %v3685
    %v3836 = vpack.c.b16 %v3690, %v3688
    %v3837 = vpack.c.b16 %v3691, %v3689
    %v3838 = vpack.c.b16 %v3694, %v3692
    %v3839 = vpack.c.b16 %v3695, %v3693
    %v3840 = vpack.c.b16 %v3698, %v3696
    %v3841 = vpack.c.b16 %v3699, %v3697
    %v3842 = vpack.c.b16 %v3702, %v3700
    %v3843 = vpack.c.b16 %v3703, %v3701
    %v3844 = vpack.c.b16 %v3706, %v3704
    %v3845 = vpack.c.b16 %v3707, %v3705
    %v3846 = vpack.c.b16 %v3710, %v3708
    %v3847 = vpack.c.b16 %v3711, %v3709
    %v3848 = vpack.c.b16 %v3714, %v3712
    %v3849 = vpack.c.b16 %v3715, %v3713
    %v3850 = vpack.c.b16 %v3718, %v3716
    %v3851 = vpack.c.b16 %v3719, %v3717
    %v3852 = vpack.c.b16 %v3722, %v3720
    %v3853 = vpack.c.b16 %v3723, %v3721
    %v3854 = vpack.c.b16 %v3726, %v3724
    %v3855 = vpack.c.b16 %v3727, %v3725
    %3984 = vmatprep.subr.bf16.mxu0 %v3729
    %3985 = vmatpush1.bf16.msra.mxu0 %v3728
    %3986 = vmatprep.subr.bf16.mxu0 %v3731
    %3987 = vmatpush1.bf16.msra.mxu0 %v3730
    %3988 = vmatprep.subr.bf16.mxu0 %v3733
    %3989 = vmatpush1.bf16.msra.mxu0 %v3732
    %3990 = vmatprep.subr.bf16.mxu0 %v3735
    %3991 = vmatpush1.bf16.msra.mxu0 %v3734
    %3992 = vmatprep.subr.bf16.mxu0 %v3737
    %3993 = vmatpush1.bf16.msra.mxu0 %v3736
    %3994 = vmatprep.subr.bf16.mxu0 %v3739
    %3995 = vmatpush1.bf16.msra.mxu0 %v3738
    %3996 = vmatprep.subr.bf16.mxu0 %v3741
    %3997 = vmatpush1.bf16.msra.mxu0 %v3740
    %3998 = vmatprep.subr.bf16.mxu0 %v3743
    %3999 = vmatpush1.bf16.msra.mxu0 %v3742
    %4000 = vmatprep.subr.bf16.mxu0 %v3745
    %4001 = vmatpush1.bf16.msra.mxu0 %v3744
    %4002 = vmatprep.subr.bf16.mxu0 %v3747
    %4003 = vmatpush1.bf16.msra.mxu0 %v3746
    %4004 = vmatprep.subr.bf16.mxu0 %v3749
    %4005 = vmatpush1.bf16.msra.mxu0 %v3748
    %4006 = vmatprep.subr.bf16.mxu0 %v3751
    %4007 = vmatpush1.bf16.msra.mxu0 %v3750
    %4008 = vmatprep.subr.bf16.mxu0 %v3753
    %4009 = vmatpush1.bf16.msra.mxu0 %v3752
    %4010 = vmatprep.subr.bf16.mxu0 %v3755
    %4011 = vmatpush1.bf16.msra.mxu0 %v3754
    %4012 = vmatprep.subr.bf16.mxu0 %v3757
    %4013 = vmatpush1.bf16.msra.mxu0 %v3756
    %4014 = vmatprep.subr.bf16.mxu0 %v3759
    %4015 = vmatpush1.bf16.msra.mxu0 %v3758
    %4016 = vmatprep.mubr.bf16.mxu0 %v3197
    %4017 = vmatmul.mubr.bf16.gmra.mrb[0].mxu0 %v3196
    %v4018 = vpop.f32.mrb[0].mxu0
    %v4019 = vadd.f32 %v3337, %v4018
    %v4020 = vpop.f32.mrb[0].mxu0
    %v4021 = vadd.f32 %v3341, %v4020
    %v4022 = vpop.f32.mrb[0].mxu0
    %v4023 = vpop.f32.mrb[0].mxu0
    %4024 = vdwg.mxu0
    %4025 = vmatprep.subr.bf16.mxu0 %v3761
    %4026 = vmatpush1.bf16.msra.mxu0 %v3760
    %4027 = vmatprep.subr.bf16.mxu0 %v3763
    %4028 = vmatpush1.bf16.msra.mxu0 %v3762
    %4029 = vmatprep.subr.bf16.mxu0 %v3765
    %4030 = vmatpush1.bf16.msra.mxu0 %v3764
    %4031 = vmatprep.subr.bf16.mxu0 %v3767
    %4032 = vmatpush1.bf16.msra.mxu0 %v3766
    %4033 = vmatprep.subr.bf16.mxu0 %v3769
    %4034 = vmatpush1.bf16.msra.mxu0 %v3768
    %4035 = vmatprep.subr.bf16.mxu0 %v3771
    %4036 = vmatpush1.bf16.msra.mxu0 %v3770
    %4037 = vmatprep.subr.bf16.mxu0 %v3773
    %4038 = vmatpush1.bf16.msra.mxu0 %v3772
    %4039 = vmatprep.subr.bf16.mxu0 %v3775
    %4040 = vmatpush1.bf16.msra.mxu0 %v3774
    %4041 = vmatprep.subr.bf16.mxu0 %v3777
    %4042 = vmatpush1.bf16.msra.mxu0 %v3776
    %4043 = vmatprep.subr.bf16.mxu0 %v3779
    %4044 = vmatpush1.bf16.msra.mxu0 %v3778
    %4045 = vmatprep.subr.bf16.mxu0 %v3781
    %4046 = vmatpush1.bf16.msra.mxu0 %v3780
    %4047 = vmatprep.subr.bf16.mxu0 %v3783
    %4048 = vmatpush1.bf16.msra.mxu0 %v3782
    %4049 = vmatprep.subr.bf16.mxu0 %v3785
    %4050 = vmatpush1.bf16.msra.mxu0 %v3784
    %4051 = vmatprep.subr.bf16.mxu0 %v3787
    %4052 = vmatpush1.bf16.msra.mxu0 %v3786
    %4053 = vmatprep.subr.bf16.mxu0 %v3789
    %4054 = vmatpush1.bf16.msra.mxu0 %v3788
    %4055 = vmatprep.subr.bf16.mxu0 %v3791
    %4056 = vmatpush1.bf16.msra.mxu0 %v3790
    %4057 = vmatprep.mubr.bf16.mxu0 %v3199
    %4058 = vmatmul.mubr.bf16.gmra.mrb[0].mxu0 %v3198
    %v4059 = vpop.f32.mrb[0].mxu0
    %v4060 = vadd.f32 %v4019, %v4059
    %v4061 = vpop.f32.mrb[0].mxu0
    %v4062 = vadd.f32 %v4021, %v4061
    %v4063 = vpop.f32.mrb[0].mxu0
    %v4064 = vpop.f32.mrb[0].mxu0
    %4065 = vdwg.mxu0
    %4066 = vmatprep.subr.bf16.mxu0 %v3793
    %4067 = vmatpush1.bf16.msra.mxu0 %v3792
    %4068 = vmatprep.subr.bf16.mxu0 %v3795
    %4069 = vmatpush1.bf16.msra.mxu0 %v3794
    %4070 = vmatprep.subr.bf16.mxu0 %v3797
    %4071 = vmatpush1.bf16.msra.mxu0 %v3796
    %4072 = vmatprep.subr.bf16.mxu0 %v3799
    %4073 = vmatpush1.bf16.msra.mxu0 %v3798
    %4074 = vmatprep.subr.bf16.mxu0 %v3801
    %4075 = vmatpush1.bf16.msra.mxu0 %v3800
    %4076 = vmatprep.subr.bf16.mxu0 %v3803
    %4077 = vmatpush1.bf16.msra.mxu0 %v3802
    %4078 = vmatprep.subr.bf16.mxu0 %v3805
    %4079 = vmatpush1.bf16.msra.mxu0 %v3804
    %4080 = vmatprep.subr.bf16.mxu0 %v3807
    %4081 = vmatpush1.bf16.msra.mxu0 %v3806
    %4082 = vmatprep.subr.bf16.mxu0 %v3809
    %4083 = vmatpush1.bf16.msra.mxu0 %v3808
    %4084 = vmatprep.subr.bf16.mxu0 %v3811
    %4085 = vmatpush1.bf16.msra.mxu0 %v3810
    %4086 = vmatprep.subr.bf16.mxu0 %v3813
    %4087 = vmatpush1.bf16.msra.mxu0 %v3812
    %4088 = vmatprep.subr.bf16.mxu0 %v3815
    %4089 = vmatpush1.bf16.msra.mxu0 %v3814
    %4090 = vmatprep.subr.bf16.mxu0 %v3817
    %4091 = vmatpush1.bf16.msra.mxu0 %v3816
    %4092 = vmatprep.subr.bf16.mxu0 %v3819
    %4093 = vmatpush1.bf16.msra.mxu0 %v3818
    %4094 = vmatprep.subr.bf16.mxu0 %v3821
    %4095 = vmatpush1.bf16.msra.mxu0 %v3820
    %4096 = vmatprep.subr.bf16.mxu0 %v3823
    %4097 = vmatpush1.bf16.msra.mxu0 %v3822
    %4098 = vmatprep.mubr.bf16.mxu0 %v3201
    %4099 = vmatmul.mubr.bf16.gmra.mrb[0].mxu0 %v3200
    %v4100 = vpop.f32.mrb[0].mxu0
    %v4101 = vadd.f32 %v4060, %v4100
    %v4102 = vpop.f32.mrb[0].mxu0
    %v4103 = vadd.f32 %v4062, %v4102
    %v4104 = vpop.f32.mrb[0].mxu0
    %v4105 = vpop.f32.mrb[0].mxu0
    %4106 = vdwg.mxu0
    %4107 = vmatprep.subr.bf16.mxu0 %v3825
    %4108 = vmatpush1.bf16.msra.mxu0 %v3824
    %4109 = vmatprep.subr.bf16.mxu0 %v3827
    %4110 = vmatpush1.bf16.msra.mxu0 %v3826
    %4111 = vmatprep.subr.bf16.mxu0 %v3829
    %4112 = vmatpush1.bf16.msra.mxu0 %v3828
    %4113 = vmatprep.subr.bf16.mxu0 %v3831
    %4114 = vmatpush1.bf16.msra.mxu0 %v3830
    %4115 = vmatprep.subr.bf16.mxu0 %v3833
    %4116 = vmatpush1.bf16.msra.mxu0 %v3832
    %4117 = vmatprep.subr.bf16.mxu0 %v3835
    %4118 = vmatpush1.bf16.msra.mxu0 %v3834
    %4119 = vmatprep.subr.bf16.mxu0 %v3837
    %4120 = vmatpush1.bf16.msra.mxu0 %v3836
    %4121 = vmatprep.subr.bf16.mxu0 %v3839
    %4122 = vmatpush1.bf16.msra.mxu0 %v3838
    %4123 = vmatprep.subr.bf16.mxu0 %v3841
    %4124 = vmatpush1.bf16.msra.mxu0 %v3840
    %4125 = vmatprep.subr.bf16.mxu0 %v3843
    %4126 = vmatpush1.bf16.msra.mxu0 %v3842
    %4127 = vmatprep.subr.bf16.mxu0 %v3845
    %4128 = vmatpush1.bf16.msra.mxu0 %v3844
    %4129 = vmatprep.subr.bf16.mxu0 %v3847
    %4130 = vmatpush1.bf16.msra.mxu0 %v3846
    %4131 = vmatprep.subr.bf16.mxu0 %v3849
    %4132 = vmatpush1.bf16.msra.mxu0 %v3848
    %4133 = vmatprep.subr.bf16.mxu0 %v3851
    %4134 = vmatpush1.bf16.msra.mxu0 %v3850
    %4135 = vmatprep.subr.bf16.mxu0 %v3853
    %4136 = vmatpush1.bf16.msra.mxu0 %v3852
    %4137 = vmatprep.subr.bf16.mxu0 %v3855
    %4138 = vmatpush1.bf16.msra.mxu0 %v3854
    %4139 = vmatprep.mubr.bf16.mxu0 %v3203
    %4140 = vmatmul.mubr.bf16.gmra.mrb[0].mxu0 %v3202
    %v4141 = vpop.f32.mrb[0].mxu0
    %v4142 = vadd.f32 %v4101, %v4141
    %v4143 = vpop.f32.mrb[0].mxu0
    %v4144 = vadd.f32 %v4103, %v4143
    %v4145 = vpop.f32.mrb[0].mxu0
    %v4146 = vpop.f32.mrb[0].mxu0
    %4147 = vdwg.mxu0
    %v4148 = vtanh.pop %v4142
    %v4149 = vtanh.pop %v4144
    %4150 = vst [vmem:[%s15] sm:$0xff] %v4148
    %4151 = vst [vmem:[%s15 + $0x8] sm:$0xff] %v4149
    // Predicated region
    $region102: #{generator_forward.1} parent=1 // pred_check
      _
    $region103: #{generator_forward.1} parent=1 // pred_check_branch
      %4153 = sbr.rel (0) target = $region105
    $region104: #{generator_forward.1} parent=1 // pred_region
      _
    $region105: #{generator_forward.1} parent=1 // pred_fallthru
      _
    // Predicated region
    $region106: #{generator_forward.1} parent=1 // pred_check
      _
    $region107: #{generator_forward.1} parent=1 // pred_check_branch
      %4155 = sbr.rel (0) target = $region109
    $region108: #{generator_forward.1} parent=1 // pred_region
      _
    $region109: #{generator_forward.1} parent=1 // pred_fallthru
      _
    %4156 = vsyncpa [#allocation3], 1
    %4157 = vsyncpa [#allocation5], 1
    %4158 = vsyncpa [#allocation8], 1
    %4159 = vsyncpa [#allocation11], 1
    %4160 = vsyncpa [#allocation14], 1
    %4161 = vsyncpa [#allocation17], 1

</llo_original>
